<compile_context>
chip_gen: v6e
topology: v6e:2x2x1
jax: 0.10.0
libtpu: 0.0.40
codegen_flags: <defaults>
</compile_context>

<pallas_src>
import functools

import jax
import jax.numpy as jnp
from jax.experimental import pallas as pl
from jax.experimental.pallas import tpu as pltpu


def _round_up(x, m):
    return (x + m - 1) // m * m


# ---------------------------------------------------------------------------
# Pallas kernels
# ---------------------------------------------------------------------------
def _matmul_kernel(a_ref, b_ref, o_ref, acc_ref):
    k = pl.program_id(2)

    @pl.when(k == 0)
    def _():
        acc_ref[...] = jnp.zeros_like(acc_ref)

    acc_ref[...] += jnp.dot(a_ref[...], b_ref[...],
                            preferred_element_type=jnp.float32)

    @pl.when(k == pl.num_programs(2) - 1)
    def _():
        o_ref[...] = acc_ref[...].astype(o_ref.dtype)


def _matmul_kernel_single_k(a_ref, b_ref, o_ref):
    # K fits one tile: no accumulator scratch, direct MXU -> output store.
    o_ref[...] = jnp.dot(a_ref[...], b_ref[...],
                         preferred_element_type=jnp.float32).astype(o_ref.dtype)


def _conv3x3_kernel(x_ref, w_ref, o_ref, *, wp, chunk):
    # Implicit GEMM for a 3x3 / stride-1 / pad-1 conv.
    #   x_ref: (1, R_in, Cin) bf16 -- padded image, rows flattened as h*wp + w
    #   w_ref: (9, Cin, tn)   bf16
    #   o_ref: (1, R_out, tn)      -- R_out = H*wp (pad columns discarded later)
    # out[r] = sum_{di,dj} x[r + di*wp + dj] @ w[di*3 + dj]
    r_out = o_ref.shape[1]
    for c0 in range(0, r_out, chunk):
        rows = min(chunk, r_out - c0)
        acc = None
        for di in range(3):
            for dj in range(3):
                off = c0 + di * wp + dj
                xs = x_ref[0, off:off + rows, :].astype(jnp.bfloat16)
                p = jnp.dot(xs, w_ref[di * 3 + dj],
                            preferred_element_type=jnp.float32)
                acc = p if acc is None else acc + p
        o_ref[0, c0:c0 + rows, :] = acc.astype(o_ref.dtype)


def _maxpool9_kernel(x_ref, o_ref, *, wp, chunk):
    # Full-resolution 3x3 window max with the same 9-tap shifted-slice trick.
    r_out = o_ref.shape[1]
    for c0 in range(0, r_out, chunk):
        rows = min(chunk, r_out - c0)
        m = None
        for di in range(3):
            for dj in range(3):
                off = c0 + di * wp + dj
                v = x_ref[0, off:off + rows, :]
                m = v if m is None else jnp.maximum(m, v)
        o_ref[0, c0:c0 + rows, :] = m.astype(o_ref.dtype)


def _bn_relu_kernel(x_ref, g_ref, b_ref, o_ref):
    x = x_ref[...].astype(jnp.float32)
    mean = jnp.mean(x, axis=0, keepdims=True)
    var = jnp.mean(jnp.square(x - mean), axis=0, keepdims=True)
    y = (x - mean) * jax.lax.rsqrt(var + 1e-5) * g_ref[...] + b_ref[...]
    o_ref[...] = jnp.maximum(y, 0.0).astype(o_ref.dtype)


def _bn_add_relu_kernel(x_ref, g_ref, b_ref, r_ref, rb_ref, o_ref):
    x = x_ref[...].astype(jnp.float32)
    mean = jnp.mean(x, axis=0, keepdims=True)
    var = jnp.mean(jnp.square(x - mean), axis=0, keepdims=True)
    y = (x - mean) * jax.lax.rsqrt(var + 1e-5) * g_ref[...] + b_ref[...]
    y = y + r_ref[...].astype(jnp.float32) + rb_ref[...]
    o_ref[...] = jnp.maximum(y, 0.0).astype(o_ref.dtype)


def _avgpool_kernel(x_ref, o_ref):
    o_ref[...] = jnp.mean(x_ref[...].astype(jnp.float32), axis=1)


# ---------------------------------------------------------------------------
# Kernel wrappers
# ---------------------------------------------------------------------------
def matmul(a, w, out_dtype=jnp.bfloat16):
    """(M, K) @ (K, N) on the MXU: bf16 inputs, f32 accumulation, tiled M/N/K."""
    M, K = a.shape
    _, N = w.shape
    a = a.astype(jnp.bfloat16)
    w = w.astype(jnp.bfloat16)

    tm = min(256, _round_up(M, 8))
    Mp = _round_up(M, tm)
    if K <= 512:                       # single K step, no zero-padded K tiles
        tk = _round_up(K, 16)
        Kp = tk
    else:
        tk = 256
        Kp = _round_up(K, tk)
    if N <= 512:                       # single lane-dense N tile, no padding
        tn = N
        Np = N
    else:
        tn = 512                       # large tn -> few re-reads of the A panel
        Np = _round_up(N, tn)

    a_p = a if (Mp == M and Kp == K) else jnp.pad(a, ((0, Mp - M), (0, Kp - K)))
    w_p = w if (Kp == K and Np == N) else jnp.pad(w, ((0, Kp - K), (0, Np - N)))

    n_k = Kp // tk
    if n_k == 1:
        out = pl.pallas_call(
            _matmul_kernel_single_k,
            out_shape=jax.ShapeDtypeStruct((Mp, Np), out_dtype),
            grid_spec=pltpu.PrefetchScalarGridSpec(
                num_scalar_prefetch=0,
                grid=(Mp // tm, Np // tn),
                in_specs=[
                    pl.BlockSpec((tm, tk), lambda i, j: (i, 0)),
                    pl.BlockSpec((tk, tn), lambda i, j: (0, j)),
                ],
                out_specs=pl.BlockSpec((tm, tn), lambda i, j: (i, j)),
            ),
            compiler_params=pltpu.CompilerParams(
                dimension_semantics=("parallel", "parallel")),
        )(a_p, w_p)
    else:
        out = pl.pallas_call(
            _matmul_kernel,
            out_shape=jax.ShapeDtypeStruct((Mp, Np), out_dtype),
            grid_spec=pltpu.PrefetchScalarGridSpec(
                num_scalar_prefetch=0,
                grid=(Mp // tm, Np // tn, n_k),
                in_specs=[
                    pl.BlockSpec((tm, tk), lambda i, j, k: (i, k)),
                    pl.BlockSpec((tk, tn), lambda i, j, k: (k, j)),
                ],
                out_specs=pl.BlockSpec((tm, tn), lambda i, j, k: (i, j)),
                scratch_shapes=[pltpu.VMEM((tm, tn), jnp.float32)],
            ),
            compiler_params=pltpu.CompilerParams(
                dimension_semantics=("parallel", "parallel", "arbitrary")),
        )(a_p, w_p)
    if Mp != M or Np != N:
        out = out[:M, :N]
    return out


def conv1x1(x, w, stride=1, out_dtype=jnp.bfloat16):
    """1x1 conv = plain matmul (strided convs subsample first, no padding)."""
    if stride > 1:
        x = x[:, ::stride, ::stride, :]
    N, H, W, Cin = x.shape
    Cout = w.shape[-1]
    y = matmul(x.reshape(N * H * W, Cin), w.reshape(Cin, Cout),
               out_dtype=out_dtype)
    return y.reshape(N, H, W, Cout)


def conv3x3_s1_p1(x, w, out_dtype=jnp.bfloat16):
    """3x3 / stride-1 / pad-1 conv via implicit GEMM (no im2col in HBM)."""
    N, H, W, Cin = x.shape
    Cout = w.shape[-1]
    Wp = W + 2
    # Stream the padded image in bf16 (halves the per-image DMA bytes).
    xp = jnp.pad(x.astype(jnp.bfloat16), ((0, 0), (1, 1), (1, 1), (0, 0)))
    xf = xp.reshape(N, (H + 2) * Wp, Cin)
    xf = jnp.pad(xf, ((0, 0), (0, 8), (0, 0)))   # slack rows for tap offsets
    R_in = (H + 2) * Wp + 8
    R_out = H * Wp
    tn = min(256, Cout)                          # lane-dense output tiles
    chunk = 256 if Cin <= 256 else 128
    wk = w.reshape(9, Cin, Cout).astype(jnp.bfloat16)

    out = pl.pallas_call(
        functools.partial(_conv3x3_kernel, wp=Wp, chunk=chunk),
        out_shape=jax.ShapeDtypeStruct((N, R_out, Cout), out_dtype),
        grid_spec=pltpu.PrefetchScalarGridSpec(
            num_scalar_prefetch=0,
            grid=(N, Cout // tn),
            in_specs=[
                pl.BlockSpec((1, R_in, Cin), lambda n, j: (n, 0, 0)),
                pl.BlockSpec((9, Cin, tn), lambda n, j: (0, 0, j)),
            ],
            out_specs=pl.BlockSpec((1, R_out, tn), lambda n, j: (n, 0, j)),
        ),
        compiler_params=pltpu.CompilerParams(
            dimension_semantics=("parallel", "parallel")),
    )(xf, wk)
    # Un-flatten and drop the padded columns (w >= W are scratch lanes).
    return out.reshape(N, H, Wp, Cout)[:, :, :W, :]


def maxpool_3x3_s2_p1(x, out_dtype=jnp.bfloat16):
    """3x3/2 max-pool: full-res 3x3 max in-kernel, stride-2 subsample outside."""
    N, H, W, C = x.shape
    x = x.astype(jnp.bfloat16)                   # keep DMA in bf16
    NEG = float(jnp.finfo(jnp.bfloat16).min)
    Wp = W + 2
    xp = jnp.pad(x, ((0, 0), (1, 1), (1, 1), (0, 0)), constant_values=NEG)
    xf = xp.reshape(N, (H + 2) * Wp, C)
    xf = jnp.pad(xf, ((0, 0), (0, 8), (0, 0)), constant_values=NEG)
    R_in = (H + 2) * Wp + 8
    R_out = H * Wp

    out = pl.pallas_call(
        functools.partial(_maxpool9_kernel, wp=Wp, chunk=512),
        out_shape=jax.ShapeDtypeStruct((N, R_out, C), out_dtype),
        grid_spec=pltpu.PrefetchScalarGridSpec(
            num_scalar_prefetch=0,
            grid=(N,),
            in_specs=[pl.BlockSpec((1, R_in, C), lambda n: (n, 0, 0))],
            out_specs=pl.BlockSpec((1, R_out, C), lambda n: (n, 0, 0)),
        ),
        compiler_params=pltpu.CompilerParams(
            dimension_semantics=("parallel",)),
    )(xf)
    # Stride-2 subsample of the full-resolution 3x3 max == 3x3/s2/p1 pooling.
    return out.reshape(N, H, Wp, C)[:, 0:H:2, 0:W:2, :]


def bn_relu(x, gamma, beta, out_dtype=jnp.bfloat16):
    N, H, W, C = x.shape
    M = N * H * W
    ct = min(C, 128)
    y = pl.pallas_call(
        _bn_relu_kernel,
        out_shape=jax.ShapeDtypeStruct((M, C), out_dtype),
        grid_spec=pltpu.PrefetchScalarGridSpec(
            num_scalar_prefetch=0,
            grid=(C // ct,),
            in_specs=[
                pl.BlockSpec((M, ct), lambda c: (0, c)),
                pl.BlockSpec((1, ct), lambda c: (0, c)),
                pl.BlockSpec((1, ct), lambda c: (0, c)),
            ],
            out_specs=pl.BlockSpec((M, ct), lambda c: (0, c)),
        ),
        compiler_params=pltpu.CompilerParams(
            dimension_semantics=("parallel",)),
    )(x.reshape(M, C), gamma.reshape(1, C), beta.reshape(1, C))
    return y.reshape(N, H, W, C)


def bn_add_relu(x, gamma, beta, residual, res_bias, out_dtype=jnp.bfloat16):
    N, H, W, C = x.shape
    M = N * H * W
    ct = min(C, 128)
    y = pl.pallas_call(
        _bn_add_relu_kernel,
        out_shape=jax.ShapeDtypeStruct((M, C), out_dtype),
        grid_spec=pltpu.PrefetchScalarGridSpec(
            num_scalar_prefetch=0,
            grid=(C // ct,),
            in_specs=[
                pl.BlockSpec((M, ct), lambda c: (0, c)),
                pl.BlockSpec((1, ct), lambda c: (0, c)),
                pl.BlockSpec((1, ct), lambda c: (0, c)),
                pl.BlockSpec((M, ct), lambda c: (0, c)),
                pl.BlockSpec((1, ct), lambda c: (0, c)),
            ],
            out_specs=pl.BlockSpec((M, ct), lambda c: (0, c)),
        ),
        compiler_params=pltpu.CompilerParams(
            dimension_semantics=("parallel",)),
    )(x.reshape(M, C), gamma.reshape(1, C), beta.reshape(1, C),
      residual.reshape(M, C), res_bias.reshape(1, C))
    return y.reshape(N, H, W, C)


def global_avgpool(x):
    N, H, W, C = x.shape
    ct = min(C, 256)
    return pl.pallas_call(
        _avgpool_kernel,
        out_shape=jax.ShapeDtypeStruct((N, C), jnp.float32),
        grid_spec=pltpu.PrefetchScalarGridSpec(
            num_scalar_prefetch=0,
            grid=(C // ct,),
            in_specs=[pl.BlockSpec((N, H * W, ct), lambda c: (0, 0, c))],
            out_specs=pl.BlockSpec((N, ct), lambda c: (0, c)),
        ),
        compiler_params=pltpu.CompilerParams(
            dimension_semantics=("parallel",)),
    )(x.reshape(N, H * W, C))


def conv7x7_s2_p3(x, w, out_dtype=jnp.bfloat16):
    """Stem conv (one-off, Cin=3): im2col glue + Pallas matmul."""
    N, H, W, Cin = x.shape
    kh, kw, _, Cout = w.shape
    stride, pad = 2, 3
    Ho = (H + 2 * pad - kh) // stride + 1
    Wo = (W + 2 * pad - kw) // stride + 1
    xp = jnp.pad(x, ((0, 0), (pad, pad), (pad, pad), (0, 0)))
    # TODO(synk): the one-off 7x7/2 stem still materializes its 49-tap im2col
    # (K=147, Cin=3); the recurring 3x3 convs use the implicit-GEMM kernel.
    cols = [xp[:, i:i + stride * (Ho - 1) + 1:stride,
               j:j + stride * (Wo - 1) + 1:stride, :]
            for i in range(kh) for j in range(kw)]
    cols = jnp.concatenate(cols, axis=-1).reshape(N * Ho * Wo, kh * kw * Cin)
    y = matmul(cols, w.reshape(kh * kw * Cin, Cout), out_dtype=out_dtype)
    return y.reshape(N, Ho, Wo, Cout)


# ---------------------------------------------------------------------------
# Model pieces (jitted per block so identical-shape blocks reuse compiles)
# ---------------------------------------------------------------------------
@jax.jit
def stem_forward(p, x):
    y = conv7x7_s2_p3(x, p["w"])
    y = bn_relu(y, p["g"], p["beta"])
    return maxpool_3x3_s2_p1(y)


@functools.partial(jax.jit, static_argnames=("stride",))
def bottleneck_block(p, x, stride):
    xs = x[:, ::stride, ::stride, :] if stride > 1 else x
    y = conv1x1(xs, p["c1_w"])
    y = bn_relu(y, p["g1"], p["b1"])
    y = conv3x3_s1_p1(y, p["c2_w"])
    y = bn_relu(y, p["g2"], p["b2"])
    y = conv1x1(y, p["c3_w"])
    sc = conv1x1(xs, p["d_w"])                 # shortcut conv (every block, per spec)
    return bn_add_relu(y, p["g3"], p["b3"], sc, p["d_b"])


@jax.jit
def head_forward(x, w, b):
    pooled = global_avgpool(x)
    # FC on the MXU; the tiny (N, num_classes) bias add stays in XLA glue.
    return matmul(pooled, w, out_dtype=jnp.float32) + b


ARCH = ((3, 256), (8, 512), (36, 1024), (3, 2048))  # ResNet152 bottleneck arch


def resnet152_forward(params, x_nchw):
    x = jnp.transpose(x_nchw, (0, 2, 3, 1))  # NCHW -> NHWC
    y = stem_forward(params["stem"], x)
    for si, blocks in enumerate(params["stages"]):
        for bi, bp in enumerate(blocks):
            stride = 2 if (si > 0 and bi == 0) else 1
            y = bottleneck_block(bp, y, stride=stride)
    return head_forward(y, params["fc"]["w"], params["fc"]["b"])


# ---------------------------------------------------------------------------
# Deterministic parameter init (synthetic; shapes follow the PyTorch module)
# ---------------------------------------------------------------------------
def init_params(key, num_classes=1000):
    it = iter(jax.random.split(key, 1024))

    def conv_w(kh, kw, cin, cout):
        bound = (1.0 / (kh * kw * cin)) ** 0.5
        return jax.random.uniform(next(it), (kh, kw, cin, cout), jnp.float32,
                                  -bound, bound)

    def conv_b(kh, kw, cin, cout):
        bound = (1.0 / (kh * kw * cin)) ** 0.5
        return jax.random.uniform(next(it), (cout,), jnp.float32, -bound, bound)

    def bn_init(c):
        return jnp.ones((c,), jnp.float32), jnp.zeros((c,), jnp.float32)

    params = {}
    g, beta = bn_init(64)
    # Conv biases in front of a BatchNorm are exactly cancelled by the batch
    # mean subtraction, so they are omitted (zero numeric change).
    params["stem"] = {"w": conv_w(7, 7, 3, 64), "g": g, "beta": beta}

    stages = []
    in_c = 64
    for (n_blocks, out_c) in ARCH:
        blocks = []
        for _ in range(n_blocks):
            mid = out_c // 4
            g1, b1 = bn_init(mid)
            g2, b2 = bn_init(mid)
            g3, b3 = bn_init(out_c)
            blocks.append(dict(
                c1_w=conv_w(1, 1, in_c, mid),
                c2_w=conv_w(3, 3, mid, mid),
                c3_w=conv_w(1, 1, mid, out_c),
                d_w=conv_w(1, 1, in_c, out_c),
                d_b=conv_b(1, 1, in_c, out_c),  # shortcut conv has no BN after it
                g1=g1, b1=b1, g2=g2, b2=b2, g3=g3, b3=b3))
            in_c = out_c
        stages.append(blocks)
    params["stages"] = stages

    bound = (1.0 / 2048) ** 0.5
    params["fc"] = {
        "w": jax.random.uniform(next(it), (2048, num_classes), jnp.float32,
                                -bound, bound),
        "b": jax.random.uniform(next(it), (num_classes,), jnp.float32,
                                -bound, bound),
    }
    return params


# ---------------------------------------------------------------------------
if __name__ == "__main__":
    key = jax.random.PRNGKey(0)
    k_params, k_x = jax.random.split(key)
    params = init_params(k_params, num_classes=1000)

    # Small NCHW input like the PyTorch module; 32 is the smallest spatial size
    # that survives the 5 stride-2 downsamplings (32 -> 16 -> 8 -> 4 -> 2 -> 1).
    x = jax.random.normal(k_x, (2, 3, 32, 32), jnp.float32)

    out = resnet152_forward(params, x)
    out = jax.block_until_ready(out)
    assert out.shape == (2, 1000), out.shape
    assert bool(jnp.all(jnp.isfinite(out)))
    print("KERNEL_OK")
</pallas_src>

<mosaic_0001>
module attributes {stable_mosaic.version = 11 : i64} {
  func.func @_matmul_kernel_single_k(%arg0: i32, %arg1: i32, %arg2: memref<256x160xbf16, #tpu.memory_space<vmem>>, %arg3: memref<160x64xbf16, #tpu.memory_space<vmem>>, %arg4: memref<256x64xbf16, #tpu.memory_space<vmem>>) attributes {dimension_semantics = [#tpu.dimension_semantics<parallel>, #tpu.dimension_semantics<parallel>], iteration_bounds = array<i64: 2, 1>, scalar_prefetch = 0 : i64, scratch_operands = 0 : i64, tpu.core_type = #tpu.core_type<tc>, window_params = [{transform_indices = @transform_0, window_bounds = array<i64: 256, 160>}, {transform_indices = @transform_1, window_bounds = array<i64: 160, 64>}, {transform_indices = @transform_2, window_bounds = array<i64: 256, 64>}]} {
    %c0 = arith.constant 0 : index
    %c0_0 = arith.constant 0 : index
    %0 = vector.load %arg2[%c0, %c0_0] : memref<256x160xbf16, #tpu.memory_space<vmem>>, vector<256x160xbf16>
    %c0_1 = arith.constant 0 : index
    %c0_2 = arith.constant 0 : index
    %1 = vector.load %arg3[%c0_1, %c0_2] : memref<160x64xbf16, #tpu.memory_space<vmem>>, vector<160x64xbf16>
    %cst = arith.constant dense<0.000000e+00> : vector<256x64xf32>
    %2 = tpu.matmul %0, %1, %cst {dimension_numbers = #tpu.dot_dimension_numbers<[1], [0], [0], [1], [0, 0, 1, 1], [], []>} : vector<256x160xbf16>, vector<160x64xbf16>, vector<256x64xf32> -> vector<256x64xf32>
    %3 = arith.truncf %2 : vector<256x64xf32> to vector<256x64xbf16>
    %c0_3 = arith.constant 0 : index
    %c0_4 = arith.constant 0 : index
    %4 = vector.load %arg4[%c0_3, %c0_4] : memref<256x64xbf16, #tpu.memory_space<vmem>>, vector<256x64xbf16>
    tpu.vector_store %arg4[%c0_3, %c0_4], %3 {strides = array<i32>} : memref<256x64xbf16, #tpu.memory_space<vmem>>, vector<256x64xbf16>,
    return
  }
  func.func @transform_0(%arg0: i32, %arg1: i32) -> (i32, i32) {
    %c0_i32 = arith.constant 0 : i32
    %c0_i32_0 = arith.constant 0 : i32
    return %arg0, %c0_i32 : i32, i32
  }
  func.func @transform_1(%arg0: i32, %arg1: i32) -> (i32, i32) {
    %c0_i32 = arith.constant 0 : i32
    %c0_i32_0 = arith.constant 0 : i32
    return %c0_i32, %arg1 : i32, i32
  }
  func.func @transform_2(%arg0: i32, %arg1: i32) -> (i32, i32) {
    %c0_i32 = arith.constant 0 : i32
    return %arg0, %arg1 : i32, i32
  }
}

module attributes {stable_mosaic.version = 11 : i64} {
  func.func @_bn_relu_kernel(%arg0: i32, %arg1: memref<512x64xbf16, #tpu.memory_space<vmem>>, %arg2: memref<1x64xf32, #tpu.memory_space<vmem>>, %arg3: memref<1x64xf32, #tpu.memory_space<vmem>>, %arg4: memref<512x64xbf16, #tpu.memory_space<vmem>>) attributes {dimension_semantics = [#tpu.dimension_semantics<parallel>], iteration_bounds = array<i64: 1>, scalar_prefetch = 0 : i64, scratch_operands = 0 : i64, tpu.core_type = #tpu.core_type<tc>, window_params = [{transform_indices = @transform_0, window_bounds = array<i64: 512, 64>}, {transform_indices = @transform_1, window_bounds = array<i64: 1, 64>}, {transform_indices = @transform_2, window_bounds = array<i64: 1, 64>}, {transform_indices = @transform_3, window_bounds = array<i64: 512, 64>}]} {
    %c0 = arith.constant 0 : index
    %c0_0 = arith.constant 0 : index
    %0 = vector.load %arg1[%c0, %c0_0] : memref<512x64xbf16, #tpu.memory_space<vmem>>, vector<512x64xbf16>
    %1 = arith.extf %0 : vector<512x64xbf16> to vector<512x64xf32>
    %cst = arith.constant dense<0.000000e+00> : vector<64xf32>
    %2 = vector.multi_reduction <add>, %1, %cst [0] : vector<512x64xf32> to vector<64xf32>
    %3 = vector.shape_cast %2 : vector<64xf32> to vector<1x64xf32>
    %cst_1 = arith.constant 5.120000e+02 : f32
    %4 = vector.broadcast %cst_1 : f32 to vector<1x64xf32>
    %5 = arith.divf %3, %4 : vector<1x64xf32>
    %6 = vector.broadcast %5 : vector<1x64xf32> to vector<512x64xf32>
    %7 = arith.subf %1, %6 : vector<512x64xf32>
    %8 = arith.mulf %7, %7 : vector<512x64xf32>
    %cst_2 = arith.constant dense<0.000000e+00> : vector<64xf32>
    %9 = vector.multi_reduction <add>, %8, %cst_2 [0] : vector<512x64xf32> to vector<64xf32>
    %10 = vector.shape_cast %9 : vector<64xf32> to vector<1x64xf32>
    %cst_3 = arith.constant 5.120000e+02 : f32
    %11 = vector.broadcast %cst_3 : f32 to vector<1x64xf32>
    %12 = arith.divf %10, %11 : vector<1x64xf32>
    %13 = vector.broadcast %5 : vector<1x64xf32> to vector<512x64xf32>
    %14 = arith.subf %1, %13 : vector<512x64xf32>
    %cst_4 = arith.constant 9.99999974E-6 : f32
    %15 = vector.broadcast %cst_4 : f32 to vector<1x64xf32>
    %16 = arith.addf %12, %15 : vector<1x64xf32>
    %17 = math.rsqrt %16 : vector<1x64xf32>
    %18 = vector.broadcast %17 : vector<1x64xf32> to vector<512x64xf32>
    %19 = arith.mulf %14, %18 : vector<512x64xf32>
    %c0_5 = arith.constant 0 : index
    %c0_6 = arith.constant 0 : index
    %20 = vector.load %arg2[%c0_5, %c0_6] : memref<1x64xf32, #tpu.memory_space<vmem>>, vector<1x64xf32>
    %21 = vector.broadcast %20 : vector<1x64xf32> to vector<512x64xf32>
    %22 = arith.mulf %19, %21 : vector<512x64xf32>
    %c0_7 = arith.constant 0 : index
    %c0_8 = arith.constant 0 : index
    %23 = vector.load %arg3[%c0_7, %c0_8] : memref<1x64xf32, #tpu.memory_space<vmem>>, vector<1x64xf32>
    %24 = vector.broadcast %23 : vector<1x64xf32> to vector<512x64xf32>
    %25 = arith.addf %22, %24 : vector<512x64xf32>
    %cst_9 = arith.constant 0.000000e+00 : f32
    %26 = vector.broadcast %cst_9 : f32 to vector<512x64xf32>
    %27 = arith.maximumf %25, %26 : vector<512x64xf32>
    %28 = arith.truncf %27 : vector<512x64xf32> to vector<512x64xbf16>
    %c0_10 = arith.constant 0 : index
    %c0_11 = arith.constant 0 : index
    %29 = vector.load %arg4[%c0_10, %c0_11] : memref<512x64xbf16, #tpu.memory_space<vmem>>, vector<512x64xbf16>
    tpu.vector_store %arg4[%c0_10, %c0_11], %28 {strides = array<i32>} : memref<512x64xbf16, #tpu.memory_space<vmem>>, vector<512x64xbf16>,
    return
  }
  func.func @transform_0(%arg0: i32) -> (i32, i32) {
    %c0_i32 = arith.constant 0 : i32
    %c0_i32_0 = arith.constant 0 : i32
    return %c0_i32, %arg0 : i32, i32
  }
  func.func @transform_1(%arg0: i32) -> (i32, i32) {
    %c0_i32 = arith.constant 0 : i32
    %c0_i32_0 = arith.constant 0 : i32
    return %c0_i32, %arg0 : i32, i32
  }
  func.func @transform_2(%arg0: i32) -> (i32, i32) {
    %c0_i32 = arith.constant 0 : i32
    %c0_i32_0 = arith.constant 0 : i32
    return %c0_i32, %arg0 : i32, i32
  }
  func.func @transform_3(%arg0: i32) -> (i32, i32) {
    %c0_i32 = arith.constant 0 : i32
    %c0_i32_0 = arith.constant 0 : i32
    return %c0_i32, %arg0 : i32, i32
  }
}

module attributes {stable_mosaic.version = 11 : i64} {
  func.func @_maxpool9_kernel(%arg0: i32, %arg1: memref<1x332x64xbf16, #tpu.memory_space<vmem>>, %arg2: memref<1x288x64xbf16, #tpu.memory_space<vmem>>) attributes {dimension_semantics = [#tpu.dimension_semantics<parallel>], iteration_bounds = array<i64: 2>, scalar_prefetch = 0 : i64, scratch_operands = 0 : i64, tpu.core_type = #tpu.core_type<tc>, window_params = [{transform_indices = @transform_0, window_bounds = array<i64: 1, 332, 64>}, {transform_indices = @transform_1, window_bounds = array<i64: 1, 288, 64>}]} {
    %c0 = arith.constant 0 : index
    %c0_0 = arith.constant 0 : index
    %c0_1 = arith.constant 0 : index
    %0 = vector.load %arg1[%c0, %c0_0, %c0_1] : memref<1x332x64xbf16, #tpu.memory_space<vmem>>, vector<1x288x64xbf16>
    %1 = vector.shape_cast %0 : vector<1x288x64xbf16> to vector<288x64xbf16>
    %c0_2 = arith.constant 0 : index
    %c1 = arith.constant 1 : index
    %c0_3 = arith.constant 0 : index
    %2 = vector.load %arg1[%c0_2, %c1, %c0_3] : memref<1x332x64xbf16, #tpu.memory_space<vmem>>, vector<1x288x64xbf16>
    %3 = vector.shape_cast %2 : vector<1x288x64xbf16> to vector<288x64xbf16>
    %4 = arith.maximumf %1, %3 : vector<288x64xbf16>
    %c0_4 = arith.constant 0 : index
    %c2 = arith.constant 2 : index
    %c0_5 = arith.constant 0 : index
    %5 = vector.load %arg1[%c0_4, %c2, %c0_5] : memref<1x332x64xbf16, #tpu.memory_space<vmem>>, vector<1x288x64xbf16>
    %6 = vector.shape_cast %5 : vector<1x288x64xbf16> to vector<288x64xbf16>
    %7 = arith.maximumf %4, %6 : vector<288x64xbf16>
    %c0_6 = arith.constant 0 : index
    %c18 = arith.constant 18 : index
    %c0_7 = arith.constant 0 : index
    %8 = vector.load %arg1[%c0_6, %c18, %c0_7] : memref<1x332x64xbf16, #tpu.memory_space<vmem>>, vector<1x288x64xbf16>
    %9 = vector.shape_cast %8 : vector<1x288x64xbf16> to vector<288x64xbf16>
    %10 = arith.maximumf %7, %9 : vector<288x64xbf16>
    %c0_8 = arith.constant 0 : index
    %c19 = arith.constant 19 : index
    %c0_9 = arith.constant 0 : index
    %11 = vector.load %arg1[%c0_8, %c19, %c0_9] : memref<1x332x64xbf16, #tpu.memory_space<vmem>>, vector<1x288x64xbf16>
    %12 = vector.shape_cast %11 : vector<1x288x64xbf16> to vector<288x64xbf16>
    %13 = arith.maximumf %10, %12 : vector<288x64xbf16>
    %c0_10 = arith.constant 0 : index
    %c20 = arith.constant 20 : index
    %c0_11 = arith.constant 0 : index
    %14 = vector.load %arg1[%c0_10, %c20, %c0_11] : memref<1x332x64xbf16, #tpu.memory_space<vmem>>, vector<1x288x64xbf16>
    %15 = vector.shape_cast %14 : vector<1x288x64xbf16> to vector<288x64xbf16>
    %16 = arith.maximumf %13, %15 : vector<288x64xbf16>
    %c0_12 = arith.constant 0 : index
    %c36 = arith.constant 36 : index
    %c0_13 = arith.constant 0 : index
    %17 = vector.load %arg1[%c0_12, %c36, %c0_13] : memref<1x332x64xbf16, #tpu.memory_space<vmem>>, vector<1x288x64xbf16>
    %18 = vector.shape_cast %17 : vector<1x288x64xbf16> to vector<288x64xbf16>
    %19 = arith.maximumf %16, %18 : vector<288x64xbf16>
    %c0_14 = arith.constant 0 : index
    %c37 = arith.constant 37 : index
    %c0_15 = arith.constant 0 : index
    %20 = vector.load %arg1[%c0_14, %c37, %c0_15] : memref<1x332x64xbf16, #tpu.memory_space<vmem>>, vector<1x288x64xbf16>
    %21 = vector.shape_cast %20 : vector<1x288x64xbf16> to vector<288x64xbf16>
    %22 = arith.maximumf %19, %21 : vector<288x64xbf16>
    %c0_16 = arith.constant 0 : index
    %c38 = arith.constant 38 : index
    %c0_17 = arith.constant 0 : index
    %23 = vector.load %arg1[%c0_16, %c38, %c0_17] : memref<1x332x64xbf16, #tpu.memory_space<vmem>>, vector<1x288x64xbf16>
    %24 = vector.shape_cast %23 : vector<1x288x64xbf16> to vector<288x64xbf16>
    %25 = arith.maximumf %22, %24 : vector<288x64xbf16>
    %c0_18 = arith.constant 0 : index
    %c0_19 = arith.constant 0 : index
    %c0_20 = arith.constant 0 : index
    %26 = vector.load %arg2[%c0_18, %c0_19, %c0_20] : memref<1x288x64xbf16, #tpu.memory_space<vmem>>, vector<1x288x64xbf16>
    %27 = vector.shape_cast %26 : vector<1x288x64xbf16> to vector<288x64xbf16>
    %28 = vector.shape_cast %25 : vector<288x64xbf16> to vector<1x288x64xbf16>
    tpu.vector_store %arg2[%c0_18, %c0_19, %c0_20], %28 {strides = array<i32>} : memref<1x288x64xbf16, #tpu.memory_space<vmem>>, vector<1x288x64xbf16>,
    return
  }
  func.func @transform_0(%arg0: i32) -> (i32, i32, i32) {
    %c0_i32 = arith.constant 0 : i32
    %c0_i32_0 = arith.constant 0 : i32
    %c0_i32_1 = arith.constant 0 : i32
    return %arg0, %c0_i32, %c0_i32_0 : i32, i32, i32
  }
  func.func @transform_1(%arg0: i32) -> (i32, i32, i32) {
    %c0_i32 = arith.constant 0 : i32
    %c0_i32_0 = arith.constant 0 : i32
    %c0_i32_1 = arith.constant 0 : i32
    return %arg0, %c0_i32, %c0_i32_0 : i32, i32, i32
  }
}

</mosaic_0001>

<llo_original>
// kernel: stem_forward.3
$region0: #{stem_forward.3}
  #allocation0 [shape = 'u32[]', space=smem, size = 0x4, offset = 0x4, fixed_abs, tag = 'smem constant byte address 0x4 - core index']
  #allocation1 [shape = 'u32[144,128]{1,0:T(1,128)}', space=vmem, size = 0x12000, scoped, tag = 'internal scratch']
  %s0 = inlined_call_operand.vmem [shape: bf16[512,160], index: 0, kind: input, shape index: {}]
  %s1 = inlined_call_operand.vmem [shape: bf16[160,64], index: 1, kind: input, shape index: {}]
  %s2 = inlined_call_operand.vmem [shape: bf16[512,64], index: 2, kind: output, shape index: {}]
  %s3 = sld [smem:[#allocation0]]
  $region41: #{stem_forward.3} parent=0
    _
  %s5 = ssub.s32 1, %s3
  %s6 = scalar_select 0, %s5, %s3
  loop: start=0, step=1, limit=4
  $region2: #{stem_forward.3} parent=0 // loop_pre_header
    _
  $region3: #{stem_forward.3} parent=0 // loop_header
    %s8 = sphi 0, %s12
    %p9 = scmp.ge.s32.totalorder %s8, 4
    %s15 = sphi 0, %s27
    %s16 = sphi 0, %s23
    %s17 = sphi 0, %s15
    %s18 = sphi 0, %s16
    %s19 = sphi 0, %s17
    %s20 = sphi 0, %s18
    %s30 = sphi 0, %s32
    %s33 = sphi 0, %s30
    %s34 = sphi 0, %s33
    %s50 = sphi 0, %s34
    %s56 = sphi 0, %s58
    %s59 = sphi 0, %s56
    %s60 = sphi 0, %s59
    %s76 = sphi 0, %s60
    %s84 = sphi 0, %s86
    %s87 = sphi 0, %s84
    %s88 = sphi 0, %s87
    %s104 = sphi 0, %s88
  $region4: #{stem_forward.3} parent=0 // loop_header_branch
    %11 = sbr.rel (%p9) target = $region8
  $region5: #{stem_forward.3} parent=0 // loop_body
    %s13 = ssub.s32 %s8, 1
    %s14 = ssub.s32 %s8, 2
    %s21 = sadd.s32 1, %s16
    %p22 = scmp.ge.s32.totalorder %s21, 1
    %s23 = scalar_select %p22, 0, %s21
    %s24 = sadd.s32 1, %s15
    %s25 = scalar_select %p22, %s24, %s15
    %p26 = scmp.ge.s32.totalorder %s25, 2
    %s27 = scalar_select %p26, 0, %s25
    %s28 = ssub.s32 %s15, %s27
    %p29 = scmp.eq.s32.totalorder %s28, 0
    %s31 = sadd.s32 %s30, 1
    %s32 = scalar_select %p29, %s30, %s31
    %p35 = pneg %p29
    %p36 = scmp.eq.s32.totalorder %s8, 1
    %p37 = por %p35, %p36
    %p38 = scmp.ne.s32.totalorder %s30, %s33
    %p39 = scmp.eq.s32.totalorder %s8, 0
    %p40 = por %p38, %p39
    %p41 = scmp.ne.s32.totalorder %s30, %s33
    %p42 = scmp.eq.s32.totalorder %s13, 1
    %p43 = por %p41, %p42
    %p44 = scmp.ne.s32.totalorder %s33, %s34
    %p45 = scmp.eq.s32.totalorder %s13, 0
    %p46 = por %p44, %p45
    %p47 = scmp.ne.s32.totalorder %s33, %s34
    %p48 = scmp.eq.s32.totalorder %s14, 1
    %p49 = por %p47, %p48
    %p51 = scmp.ne.s32.totalorder %s34, %s50
    %p52 = scmp.eq.s32.totalorder %s14, 0
    %p53 = por %p51, %p52
    %s54 = ssub.s32 %s16, %s23
    %p55 = scmp.eq.s32.totalorder %s54, 0
    %s57 = sadd.s32 %s56, 1
    %s58 = scalar_select %p55, %s56, %s57
    %p61 = pneg %p55
    %p62 = scmp.eq.s32.totalorder %s8, 1
    %p63 = por %p61, %p62
    %p64 = scmp.ne.s32.totalorder %s56, %s59
    %p65 = scmp.eq.s32.totalorder %s8, 0
    %p66 = por %p64, %p65
    %p67 = scmp.ne.s32.totalorder %s56, %s59
    %p68 = scmp.eq.s32.totalorder %s13, 1
    %p69 = por %p67, %p68
    %p70 = scmp.ne.s32.totalorder %s59, %s60
    %p71 = scmp.eq.s32.totalorder %s13, 0
    %p72 = por %p70, %p71
    %p73 = scmp.ne.s32.totalorder %s59, %s60
    %p74 = scmp.eq.s32.totalorder %s14, 1
    %p75 = por %p73, %p74
    %p77 = scmp.ne.s32.totalorder %s60, %s76
    %p78 = scmp.eq.s32.totalorder %s14, 0
    %p79 = por %p77, %p78
    %s80 = ssub.s32 %s15, %s27
    %s81 = ssub.s32 %s16, %s23
    %s82 = sor.u32 %s80, %s81
    %p83 = scmp.eq.s32.totalorder %s82, 0
    %s85 = sadd.s32 %s84, 1
    %s86 = scalar_select %p83, %s84, %s85
    %p89 = pneg %p83
    %p90 = scmp.eq.s32.totalorder %s8, 1
    %p91 = por %p89, %p90
    %p92 = scmp.ne.s32.totalorder %s84, %s87
    %p93 = scmp.eq.s32.totalorder %s8, 0
    %p94 = por %p92, %p93
    %p95 = scmp.ne.s32.totalorder %s84, %s87
    %p96 = scmp.eq.s32.totalorder %s13, 1
    %p97 = por %p95, %p96
    %p98 = scmp.ne.s32.totalorder %s87, %s88
    %p99 = scmp.eq.s32.totalorder %s13, 0
    %p100 = por %p98, %p99
    %p101 = scmp.ne.s32.totalorder %s87, %s88
    %p102 = scmp.eq.s32.totalorder %s14, 1
    %p103 = por %p101, %p102
    %p105 = scmp.ne.s32.totalorder %s88, %s104
    %p106 = scmp.eq.s32.totalorder %s14, 0
    %p107 = por %p105, %p106
    %p108 = scmp.le.s32.totalorder 1, %s8
    %p109 = scmp.lt.s32.totalorder %s8, 3
    %p110 = pnand %p108, %p109
    %p111 = pneg %p110
    // Predicated region
    $region9: #{stem_forward.3} parent=5 // pred_check
      _
    $region10: #{stem_forward.3} parent=5 // pred_check_branch
      %113 = sbr.rel (%p110) target = $region12
    $region11: #{stem_forward.3} parent=5 // pred_region
      %s114 = ssub.s32 %s8, 1
      // Predicated region
      $region13: #{stem_forward.3} parent=11 // pred_check
        %p115 = pneg %p72
      $region14: #{stem_forward.3} parent=11 // pred_check_branch
        %117 = sbr.rel (%p115) target = $region16
      $region15: #{stem_forward.3} parent=11 // pred_region
        %p118 = scmp.lt.s32.totalorder %s18, 0
        %s119 = scalar_select %p118, %s18, 0
        %s120 = smul.addr %s119, 4
        %s121 = scalar_lea.vmem %s1, %s120
      $region16: #{stem_forward.3} parent=11 // pred_fallthru
        _
    $region12: #{stem_forward.3} parent=5 // pred_fallthru
      _
    %p122 = scmp.lt.s32.totalorder %s8, 2
    // Predicated region
    $region17: #{stem_forward.3} parent=5 // pred_check
      %p123 = pneg %p122
    $region18: #{stem_forward.3} parent=5 // pred_check_branch
      %125 = sbr.rel (%p123) target = $region20
    $region19: #{stem_forward.3} parent=5 // pred_region
      // Predicated region
      $region21: #{stem_forward.3} parent=19 // pred_check
        %p126 = pneg %p40
      $region22: #{stem_forward.3} parent=19 // pred_check_branch
        %128 = sbr.rel (%p126) target = $region24
      $region23: #{stem_forward.3} parent=19 // pred_region
        %s129 = smul.u32 32, %s15
        %p130 = scmp.lt.s32.totalorder %s129, 63
        %s131 = scalar_select %p130, %s129, 63
        %s132 = smul.addr %s131, 2
        %s133 = smul.addr %s132, 4
        %s134 = scalar_lea.vmem %s0, %s133
        %s135 = smul.u32 32, %s15
      $region24: #{stem_forward.3} parent=19 // pred_fallthru
        _
    $region20: #{stem_forward.3} parent=5 // pred_fallthru
      _
    %p136 = scmp.le.s32.totalorder 1, %s8
    %p137 = scmp.lt.s32.totalorder %s8, 3
    %p138 = pnand %p136, %p137
    %p139 = pneg %p138
    // Predicated region
    $region25: #{stem_forward.3} parent=5 // pred_check
      _
    $region26: #{stem_forward.3} parent=5 // pred_check_branch
      %141 = sbr.rel (%p138) target = $region28
    $region27: #{stem_forward.3} parent=5 // pred_region
      %s142 = ssub.s32 %s8, 1
      %s143 = smul.u32 32, %s17
      %p144 = scmp.lt.s32.totalorder %s143, 63
      %s145 = scalar_select %p144, %s143, 63
      %s146 = smul.addr %s145, 2
      %s147 = smul.addr %s146, 4
      %s148 = scalar_lea.vmem %s0, %s147
      %p149 = pneg %p46
      %p150 = pneg %p43
      %p151 = scmp.lt.s32.totalorder %s18, 0
      %s152 = scalar_select %p151, %s18, 0
      %s153 = smul.addr %s152, 4
      %s154 = scalar_lea.vmem %s1, %s153
      %p155 = pneg %p72
      %p156 = pneg %p69
      %p157 = pneg %p100
      %p158 = pneg %p97
      %s159 = smul.u32 32, %s17
      %p160 = scmp.lt.s32.totalorder %s159, 63
      %s161 = scalar_select %p160, %s159, 63
      %p162 = scmp.lt.s32.totalorder %s18, 0
      %s163 = scalar_select %p162, %s18, 0
      %s164 = sadd.s32 %s163, %s161
      %s165 = smul.addr %s164, 4
      %s166 = scalar_lea.vmem %s2, %s165
      %s167 = smul.u32 32, %s17
      %p168 = scmp.lt.s32.totalorder %s167, 63
      %s169 = scalar_select %p168, %s167, 63
      %s170 = smul.addr %s169, 2
      %s171 = smul.addr %s170, 4
      %s172 = scalar_lea.vmem %s0, %s171
      %s173 = smul.u32 32, %s17
      %p174 = scmp.lt.s32.totalorder %s18, 0
      %s175 = scalar_select %p174, %s18, 0
      %s176 = smul.addr %s175, 4
      %s177 = scalar_lea.vmem %s1, %s176
      %s178 = smul.u32 32, %s17
      %p179 = scmp.lt.s32.totalorder %s178, 63
      %s180 = scalar_select %p179, %s178, 63
      %p181 = scmp.lt.s32.totalorder %s18, 0
      %s182 = scalar_select %p181, %s18, 0
      %s183 = sadd.s32 %s182, %s180
      %s184 = smul.addr %s183, 4
      %s185 = scalar_lea.vmem %s2, %s184
      %s186 = smul.u32 32, %s17
      %v188 = vld [vmem:[%s172] sm:$0xff]
      %v189 = vld [vmem:[%s172 + $0x8] sm:$0xff]
      %v190 = vld [vmem:[%s172 + $0x10] sm:$0xff]
      %v191 = vld [vmem:[%s172 + $0x18] sm:$0xff]
      %v192 = vld [vmem:[%s172 + $0x20] sm:$0xff]
      %v193 = vld [vmem:[%s172 + $0x28] sm:$0xff]
      %v194 = vld [vmem:[%s172 + $0x30] sm:$0xff]
      %v195 = vld [vmem:[%s172 + $0x38] sm:$0xff]
      %v196 = vld [vmem:[%s172 + $0x40] sm:$0xff]
      %v197 = vld [vmem:[%s172 + $0x48] sm:$0xff]
      %v198 = vld [vmem:[%s172 + $0x50] sm:$0xff]
      %v199 = vld [vmem:[%s172 + $0x58] sm:$0xff]
      %v200 = vld [vmem:[%s172 + $0x60] sm:$0xff]
      %v201 = vld [vmem:[%s172 + $0x68] sm:$0xff]
      %v202 = vld [vmem:[%s172 + $0x70] sm:$0xff]
      %v203 = vld [vmem:[%s172 + $0x78] sm:$0xff]
      %v204 = vld [vmem:[%s172 + $0x80] sm:$0xff]
      %v205 = vld [vmem:[%s172 + $0x88] sm:$0xff]
      %v206 = vld [vmem:[%s172 + $0x90] sm:$0xff]
      %v207 = vld [vmem:[%s172 + $0x98] sm:$0xff]
      %v208 = vld [vmem:[%s172 + $0xa0] sm:$0xff]
      %v209 = vld [vmem:[%s172 + $0xa8] sm:$0xff]
      %v210 = vld [vmem:[%s172 + $0xb0] sm:$0xff]
      %v211 = vld [vmem:[%s172 + $0xb8] sm:$0xff]
      %v212 = vld [vmem:[%s172 + $0xc0] sm:$0xff]
      %v213 = vld [vmem:[%s172 + $0xc8] sm:$0xff]
      %v214 = vld [vmem:[%s172 + $0xd0] sm:$0xff]
      %v215 = vld [vmem:[%s172 + $0xd8] sm:$0xff]
      %v216 = vld [vmem:[%s172 + $0xe0] sm:$0xff]
      %v217 = vld [vmem:[%s172 + $0xe8] sm:$0xff]
      %v218 = vld [vmem:[%s172 + $0xf0] sm:$0xff]
      %v219 = vld [vmem:[%s172 + $0xf8] sm:$0xff]
      %v220 = vld [vmem:[%s177] sm:$0xf]
      %v221 = vld [vmem:[%s177 + $0x4] sm:$0xf]
      %v222 = vld [vmem:[%s177 + $0x8] sm:$0xf]
      %v223 = vld [vmem:[%s177 + $0xc] sm:$0xf]
      %v224 = vld [vmem:[%s177 + $0x10] sm:$0xf]
      %v225 = vld [vmem:[%s177 + $0x14] sm:$0xf]
      %v226 = vld [vmem:[%s177 + $0x18] sm:$0xf]
      %v227 = vld [vmem:[%s177 + $0x1c] sm:$0xf]
      %v228 = vld [vmem:[%s177 + $0x20] sm:$0xf]
      %v229 = vld [vmem:[%s177 + $0x24] sm:$0xf]
      %v230 = vld [vmem:[%s177 + $0x28] sm:$0xf]
      %v231 = vld [vmem:[%s177 + $0x2c] sm:$0xf]
      %v232 = vld [vmem:[%s177 + $0x30] sm:$0xf]
      %v233 = vld [vmem:[%s177 + $0x34] sm:$0xf]
      %v234 = vld [vmem:[%s177 + $0x38] sm:$0xf]
      %v235 = vld [vmem:[%s177 + $0x3c] sm:$0xf]
      %v236 = vld [vmem:[%s177 + $0x40] sm:$0xf]
      %v237 = vld [vmem:[%s177 + $0x44] sm:$0xf]
      %v238 = vld [vmem:[%s177 + $0x48] sm:$0xf]
      %v239 = vld [vmem:[%s177 + $0x4c] sm:$0xf]
      %v272 = vunpack.c.l.b16 %v188
      %v273 = vunpack.c.h.b16 %v188
      %v274 = vunpack.c.l.b16 %v189
      %v275 = vunpack.c.h.b16 %v189
      %v276 = vunpack.c.l.b16 %v190
      %v277 = vunpack.c.h.b16 %v190
      %v278 = vunpack.c.l.b16 %v191
      %v279 = vunpack.c.h.b16 %v191
      %v280 = vunpack.c.l.b16 %v192
      %v281 = vunpack.c.h.b16 %v192
      %v282 = vunpack.c.l.b16 %v193
      %v283 = vunpack.c.h.b16 %v193
      %v284 = vunpack.c.l.b16 %v194
      %v285 = vunpack.c.h.b16 %v194
      %v286 = vunpack.c.l.b16 %v195
      %v287 = vunpack.c.h.b16 %v195
      %v288 = vunpack.c.l.b16 %v196
      %v289 = vunpack.c.h.b16 %v196
      %v290 = vunpack.c.l.b16 %v197
      %v291 = vunpack.c.h.b16 %v197
      %v292 = vunpack.c.l.b16 %v198
      %v293 = vunpack.c.h.b16 %v198
      %v294 = vunpack.c.l.b16 %v199
      %v295 = vunpack.c.h.b16 %v199
      %v296 = vunpack.c.l.b16 %v200
      %v297 = vunpack.c.h.b16 %v200
      %v298 = vunpack.c.l.b16 %v201
      %v299 = vunpack.c.h.b16 %v201
      %v300 = vunpack.c.l.b16 %v202
      %v301 = vunpack.c.h.b16 %v202
      %v302 = vunpack.c.l.b16 %v203
      %v303 = vunpack.c.h.b16 %v203
      %v304 = vunpack.c.l.b16 %v204
      %v305 = vunpack.c.h.b16 %v204
      %v306 = vunpack.c.l.b16 %v205
      %v307 = vunpack.c.h.b16 %v205
      %v308 = vunpack.c.l.b16 %v206
      %v309 = vunpack.c.h.b16 %v206
      %v310 = vunpack.c.l.b16 %v207
      %v311 = vunpack.c.h.b16 %v207
      %v312 = vunpack.c.l.b16 %v208
      %v313 = vunpack.c.h.b16 %v208
      %v314 = vunpack.c.l.b16 %v209
      %v315 = vunpack.c.h.b16 %v209
      %v316 = vunpack.c.l.b16 %v210
      %v317 = vunpack.c.h.b16 %v210
      %v318 = vunpack.c.l.b16 %v211
      %v319 = vunpack.c.h.b16 %v211
      %v320 = vunpack.c.l.b16 %v212
      %v321 = vunpack.c.h.b16 %v212
      %v322 = vunpack.c.l.b16 %v213
      %v323 = vunpack.c.h.b16 %v213
      %v324 = vunpack.c.l.b16 %v214
      %v325 = vunpack.c.h.b16 %v214
      %v326 = vunpack.c.l.b16 %v215
      %v327 = vunpack.c.h.b16 %v215
      %v328 = vunpack.c.l.b16 %v216
      %v329 = vunpack.c.h.b16 %v216
      %v330 = vunpack.c.l.b16 %v217
      %v331 = vunpack.c.h.b16 %v217
      %v332 = vunpack.c.l.b16 %v218
      %v333 = vunpack.c.h.b16 %v218
      %v334 = vunpack.c.l.b16 %v219
      %v335 = vunpack.c.h.b16 %v219
      %v336 = vpack.c.b16 %v274, %v272
      %v337 = vpack.c.b16 %v275, %v273
      %v338 = vpack.c.b16 %v278, %v276
      %v339 = vpack.c.b16 %v279, %v277
      %v340 = vpack.c.b16 %v282, %v280
      %v341 = vpack.c.b16 %v283, %v281
      %v342 = vpack.c.b16 %v286, %v284
      %v343 = vpack.c.b16 %v287, %v285
      %v344 = vpack.c.b16 %v290, %v288
      %v345 = vpack.c.b16 %v291, %v289
      %v346 = vpack.c.b16 %v294, %v292
      %v347 = vpack.c.b16 %v295, %v293
      %v348 = vpack.c.b16 %v298, %v296
      %v349 = vpack.c.b16 %v299, %v297
      %v350 = vpack.c.b16 %v302, %v300
      %v351 = vpack.c.b16 %v303, %v301
      %v352 = vpack.c.b16 %v306, %v304
      %v353 = vpack.c.b16 %v307, %v305
      %v354 = vpack.c.b16 %v310, %v308
      %v355 = vpack.c.b16 %v311, %v309
      %v356 = vpack.c.b16 %v314, %v312
      %v357 = vpack.c.b16 %v315, %v313
      %v358 = vpack.c.b16 %v318, %v316
      %v359 = vpack.c.b16 %v319, %v317
      %v360 = vpack.c.b16 %v322, %v320
      %v361 = vpack.c.b16 %v323, %v321
      %v362 = vpack.c.b16 %v326, %v324
      %v363 = vpack.c.b16 %v327, %v325
      %v364 = vpack.c.b16 %v330, %v328
      %v365 = vpack.c.b16 %v331, %v329
      %v366 = vpack.c.b16 %v334, %v332
      %v367 = vpack.c.b16 %v335, %v333
      %v404 = vunpack.c.l.b16 %v220
      %v405 = vunpack.c.l.b16 %v221
      %v406 = vunpack.c.l.b16 %v222
      %v407 = vunpack.c.l.b16 %v223
      %v408 = vunpack.c.l.b16 %v224
      %v409 = vunpack.c.l.b16 %v225
      %v410 = vunpack.c.l.b16 %v226
      %v411 = vunpack.c.l.b16 %v227
      %v412 = vunpack.c.l.b16 %v228
      %v413 = vunpack.c.l.b16 %v229
      %v414 = vunpack.c.l.b16 %v230
      %v415 = vunpack.c.l.b16 %v231
      %v416 = vunpack.c.l.b16 %v232
      %v417 = vunpack.c.l.b16 %v233
      %v418 = vunpack.c.l.b16 %v234
      %v419 = vunpack.c.l.b16 %v235
      %v420 = vunpack.c.l.b16 %v236
      %v421 = vunpack.c.l.b16 %v237
      %v422 = vunpack.c.l.b16 %v238
      %v423 = vunpack.c.l.b16 %v239
      %v424 = vpack.c.b16 %v405, %v404
      %v425 = vpack.c.b16 %v407, %v406
      %v426 = vpack.c.b16 %v409, %v408
      %v427 = vpack.c.b16 %v411, %v410
      %v428 = vpack.c.b16 %v413, %v412
      %v429 = vpack.c.b16 %v415, %v414
      %v430 = vpack.c.b16 %v417, %v416
      %v431 = vpack.c.b16 %v419, %v418
      %v432 = vpack.c.b16 %v421, %v420
      %v433 = vpack.c.b16 %v423, %v422
      %vm444 = vcmask 261120
      %v446 = vsel %vm444, %v337, 0
      %v449 = vsel %vm444, %v339, 0
      %v452 = vsel %vm444, %v341, 0
      %v455 = vsel %vm444, %v343, 0
      %v458 = vsel %vm444, %v345, 0
      %v461 = vsel %vm444, %v347, 0
      %v464 = vsel %vm444, %v349, 0
      %v467 = vsel %vm444, %v351, 0
      %v470 = vsel %vm444, %v353, 0
      %v473 = vsel %vm444, %v355, 0
      %v476 = vsel %vm444, %v357, 0
      %v479 = vsel %vm444, %v359, 0
      %v482 = vsel %vm444, %v361, 0
      %v485 = vsel %vm444, %v363, 0
      %v488 = vsel %vm444, %v365, 0
      %v491 = vsel %vm444, %v367, 0
      %493 = vmatprep.subr.bf16.mxu0 0
      %494 = vmatpush1.bf16.msra.mxu0 %v431
      %495 = vmatprep.subr.bf16.mxu0 0
      %496 = vmatpush1.bf16.msra.mxu0 %v430
      %497 = vmatprep.subr.bf16.mxu0 0
      %498 = vmatpush1.bf16.msra.mxu0 %v429
      %499 = vmatprep.subr.bf16.mxu0 0
      %500 = vmatpush1.bf16.msra.mxu0 %v428
      %501 = vmatprep.subr.bf16.mxu0 0
      %502 = vmatpush1.bf16.msra.mxu0 %v427
      %503 = vmatprep.subr.bf16.mxu0 0
      %504 = vmatpush1.bf16.msra.mxu0 %v426
      %505 = vmatprep.subr.bf16.mxu0 0
      %506 = vmatpush1.bf16.msra.mxu0 %v425
      %507 = vmatprep.subr.bf16.mxu0 0
      %508 = vmatpush1.bf16.msra.mxu0 %v424
      %509 = vmatprep.subr.bf16.mxu0 0
      %510 = vmatpush2.bf16.msra.mxu0 0
      %511 = vmatprep.subr.bf16.mxu0 0
      %512 = vmatpush2.bf16.msra.mxu0 0
      %513 = vmatprep.subr.bf16.mxu0 0
      %514 = vmatpush2.bf16.msra.mxu0 0
      %515 = vmatprep.subr.bf16.mxu0 0
      %516 = vmatpush2.bf16.msra.mxu0 0
      %517 = vmatprep.subr.bf16.mxu0 0
      %518 = vmatpush2.bf16.msra.mxu0 0
      %519 = vmatprep.subr.bf16.mxu0 0
      %520 = vmatpush2.bf16.msra.mxu0 0
      %521 = vmatprep.subr.bf16.mxu0 0
      %522 = vmatpush2.bf16.msra.mxu0 %v433
      %523 = vmatprep.subr.bf16.mxu0 0
      %524 = vmatpush2.bf16.msra.mxu0 %v432
      %525 = vmatprep.mubr.bf16.mxu0 %v446
      %526 = vmatmul.mubr.bf16.gmra.mxu0 %v336
      %v527 = vpop.f32.mrf.mxu0
      %v528 = vadd.f32 0.0, %v527
      %v529 = vpop.f32.mrf.mxu0
      %v530 = vpop.f32.mrf.mxu0
      %v531 = vadd.f32 0.0, %v530
      %v532 = vpop.f32.mrf.mxu0
      %533 = vmatprep.mubr.bf16.mxu0 %v449
      %534 = vmatmul.mubr.bf16.gmra.mxu0 %v338
      %v535 = vpop.f32.mrf.mxu0
      %v536 = vadd.f32 0.0, %v535
      %v537 = vpop.f32.mrf.mxu0
      %v538 = vpop.f32.mrf.mxu0
      %v539 = vadd.f32 0.0, %v538
      %v540 = vpop.f32.mrf.mxu0
      %541 = vmatprep.mubr.bf16.mxu0 %v452
      %542 = vmatmul.mubr.bf16.gmra.mxu0 %v340
      %v543 = vpop.f32.mrf.mxu0
      %v544 = vadd.f32 0.0, %v543
      %v545 = vpop.f32.mrf.mxu0
      %v546 = vpop.f32.mrf.mxu0
      %v547 = vadd.f32 0.0, %v546
      %v548 = vpop.f32.mrf.mxu0
      %549 = vmatprep.mubr.bf16.mxu0 %v455
      %550 = vmatmul.mubr.bf16.gmra.mxu0 %v342
      %v551 = vpop.f32.mrf.mxu0
      %v552 = vadd.f32 0.0, %v551
      %v553 = vpop.f32.mrf.mxu0
      %v554 = vpop.f32.mrf.mxu0
      %v555 = vadd.f32 0.0, %v554
      %v556 = vpop.f32.mrf.mxu0
      %557 = vmatprep.mubr.bf16.mxu0 %v458
      %558 = vmatmul.mubr.bf16.gmra.mxu0 %v344
      %v559 = vpop.f32.mrf.mxu0
      %v560 = vadd.f32 0.0, %v559
      %v561 = vpop.f32.mrf.mxu0
      %v562 = vpop.f32.mrf.mxu0
      %v563 = vadd.f32 0.0, %v562
      %v564 = vpop.f32.mrf.mxu0
      %565 = vmatprep.mubr.bf16.mxu0 %v461
      %566 = vmatmul.mubr.bf16.gmra.mxu0 %v346
      %v567 = vpop.f32.mrf.mxu0
      %v568 = vadd.f32 0.0, %v567
      %v569 = vpop.f32.mrf.mxu0
      %v570 = vpop.f32.mrf.mxu0
      %v571 = vadd.f32 0.0, %v570
      %v572 = vpop.f32.mrf.mxu0
      %573 = vmatprep.mubr.bf16.mxu0 %v464
      %574 = vmatmul.mubr.bf16.gmra.mxu0 %v348
      %v575 = vpop.f32.mrf.mxu0
      %v576 = vadd.f32 0.0, %v575
      %v577 = vpop.f32.mrf.mxu0
      %v578 = vpop.f32.mrf.mxu0
      %v579 = vadd.f32 0.0, %v578
      %v580 = vpop.f32.mrf.mxu0
      %581 = vmatprep.mubr.bf16.mxu0 %v467
      %582 = vmatmul.mubr.bf16.gmra.mxu0 %v350
      %v583 = vpop.f32.mrf.mxu0
      %v584 = vadd.f32 0.0, %v583
      %v585 = vpop.f32.mrf.mxu0
      %v586 = vpop.f32.mrf.mxu0
      %v587 = vadd.f32 0.0, %v586
      %v588 = vpop.f32.mrf.mxu0
      %589 = vmatprep.mubr.bf16.mxu0 %v470
      %590 = vmatmul.mubr.bf16.gmra.mxu0 %v352
      %v591 = vpop.f32.mrf.mxu0
      %v592 = vadd.f32 0.0, %v591
      %v593 = vpop.f32.mrf.mxu0
      %v594 = vpop.f32.mrf.mxu0
      %v595 = vadd.f32 0.0, %v594
      %v596 = vpop.f32.mrf.mxu0
      %597 = vmatprep.mubr.bf16.mxu0 %v473
      %598 = vmatmul.mubr.bf16.gmra.mxu0 %v354
      %v599 = vpop.f32.mrf.mxu0
      %v600 = vadd.f32 0.0, %v599
      %v601 = vpop.f32.mrf.mxu0
      %v602 = vpop.f32.mrf.mxu0
      %v603 = vadd.f32 0.0, %v602
      %v604 = vpop.f32.mrf.mxu0
      %605 = vmatprep.mubr.bf16.mxu0 %v476
      %606 = vmatmul.mubr.bf16.gmra.mxu0 %v356
      %v607 = vpop.f32.mrf.mxu0
      %v608 = vadd.f32 0.0, %v607
      %v609 = vpop.f32.mrf.mxu0
      %v610 = vpop.f32.mrf.mxu0
      %v611 = vadd.f32 0.0, %v610
      %v612 = vpop.f32.mrf.mxu0
      %613 = vmatprep.mubr.bf16.mxu0 %v479
      %614 = vmatmul.mubr.bf16.gmra.mxu0 %v358
      %v615 = vpop.f32.mrf.mxu0
      %v616 = vadd.f32 0.0, %v615
      %v617 = vpop.f32.mrf.mxu0
      %v618 = vpop.f32.mrf.mxu0
      %v619 = vadd.f32 0.0, %v618
      %v620 = vpop.f32.mrf.mxu0
      %621 = vmatprep.mubr.bf16.mxu0 %v482
      %622 = vmatmul.mubr.bf16.gmra.mxu0 %v360
      %v623 = vpop.f32.mrf.mxu0
      %v624 = vadd.f32 0.0, %v623
      %v625 = vpop.f32.mrf.mxu0
      %v626 = vpop.f32.mrf.mxu0
      %v627 = vadd.f32 0.0, %v626
      %v628 = vpop.f32.mrf.mxu0
      %629 = vmatprep.mubr.bf16.mxu0 %v485
      %630 = vmatmul.mubr.bf16.gmra.mxu0 %v362
      %v631 = vpop.f32.mrf.mxu0
      %v632 = vadd.f32 0.0, %v631
      %v633 = vpop.f32.mrf.mxu0
      %v634 = vpop.f32.mrf.mxu0
      %v635 = vadd.f32 0.0, %v634
      %v636 = vpop.f32.mrf.mxu0
      %637 = vmatprep.mubr.bf16.mxu0 %v488
      %638 = vmatmul.mubr.bf16.gmra.mxu0 %v364
      %v639 = vpop.f32.mrf.mxu0
      %v640 = vadd.f32 0.0, %v639
      %v641 = vpop.f32.mrf.mxu0
      %v642 = vpop.f32.mrf.mxu0
      %v643 = vadd.f32 0.0, %v642
      %v644 = vpop.f32.mrf.mxu0
      %645 = vmatprep.mubr.bf16.mxu0 %v491
      %646 = vmatmul.mubr.bf16.gmra.mxu0 %v366
      %v647 = vpop.f32.mrf.mxu0
      %v648 = vadd.f32 0.0, %v647
      %v649 = vpop.f32.mrf.mxu0
      %v650 = vpop.f32.mrf.mxu0
      %v651 = vadd.f32 0.0, %v650
      %v652 = vpop.f32.mrf.mxu0
      %653 = vdwg.mxu0
      %v654 = vpack.c.bf16 %v531, %v528
      %v655 = vpack.c.bf16 %v539, %v536
      %v656 = vpack.c.bf16 %v547, %v544
      %v657 = vpack.c.bf16 %v555, %v552
      %v658 = vpack.c.bf16 %v563, %v560
      %v659 = vpack.c.bf16 %v571, %v568
      %v660 = vpack.c.bf16 %v579, %v576
      %v661 = vpack.c.bf16 %v587, %v584
      %v662 = vpack.c.bf16 %v595, %v592
      %v663 = vpack.c.bf16 %v603, %v600
      %v664 = vpack.c.bf16 %v611, %v608
      %v665 = vpack.c.bf16 %v619, %v616
      %v666 = vpack.c.bf16 %v627, %v624
      %v667 = vpack.c.bf16 %v635, %v632
      %v668 = vpack.c.bf16 %v643, %v640
      %v669 = vpack.c.bf16 %v651, %v648
      %v686 = vunpack.c.l.b16 %v654
      %v687 = vunpack.c.h.b16 %v654
      %v688 = vunpack.c.l.b16 %v655
      %v689 = vunpack.c.h.b16 %v655
      %v690 = vunpack.c.l.b16 %v656
      %v691 = vunpack.c.h.b16 %v656
      %v692 = vunpack.c.l.b16 %v657
      %v693 = vunpack.c.h.b16 %v657
      %v694 = vunpack.c.l.b16 %v658
      %v695 = vunpack.c.h.b16 %v658
      %v696 = vunpack.c.l.b16 %v659
      %v697 = vunpack.c.h.b16 %v659
      %v698 = vunpack.c.l.b16 %v660
      %v699 = vunpack.c.h.b16 %v660
      %v700 = vunpack.c.l.b16 %v661
      %v701 = vunpack.c.h.b16 %v661
      %v702 = vunpack.c.l.b16 %v662
      %v703 = vunpack.c.h.b16 %v662
      %v704 = vunpack.c.l.b16 %v663
      %v705 = vunpack.c.h.b16 %v663
      %v706 = vunpack.c.l.b16 %v664
      %v707 = vunpack.c.h.b16 %v664
      %v708 = vunpack.c.l.b16 %v665
      %v709 = vunpack.c.h.b16 %v665
      %v710 = vunpack.c.l.b16 %v666
      %v711 = vunpack.c.h.b16 %v666
      %v712 = vunpack.c.l.b16 %v667
      %v713 = vunpack.c.h.b16 %v667
      %v714 = vunpack.c.l.b16 %v668
      %v715 = vunpack.c.h.b16 %v668
      %v716 = vunpack.c.l.b16 %v669
      %v717 = vunpack.c.h.b16 %v669
      %v718 = vpack.c.b16 %v686, %v686
      %v719 = vpack.c.b16 %v687, %v687
      %v720 = vpack.c.b16 %v688, %v688
      %v721 = vpack.c.b16 %v689, %v689
      %v722 = vpack.c.b16 %v690, %v690
      %v723 = vpack.c.b16 %v691, %v691
      %v724 = vpack.c.b16 %v692, %v692
      %v725 = vpack.c.b16 %v693, %v693
      %v726 = vpack.c.b16 %v694, %v694
      %v727 = vpack.c.b16 %v695, %v695
      %v728 = vpack.c.b16 %v696, %v696
      %v729 = vpack.c.b16 %v697, %v697
      %v730 = vpack.c.b16 %v698, %v698
      %v731 = vpack.c.b16 %v699, %v699
      %v732 = vpack.c.b16 %v700, %v700
      %v733 = vpack.c.b16 %v701, %v701
      %v734 = vpack.c.b16 %v702, %v702
      %v735 = vpack.c.b16 %v703, %v703
      %v736 = vpack.c.b16 %v704, %v704
      %v737 = vpack.c.b16 %v705, %v705
      %v738 = vpack.c.b16 %v706, %v706
      %v739 = vpack.c.b16 %v707, %v707
      %v740 = vpack.c.b16 %v708, %v708
      %v741 = vpack.c.b16 %v709, %v709
      %v742 = vpack.c.b16 %v710, %v710
      %v743 = vpack.c.b16 %v711, %v711
      %v744 = vpack.c.b16 %v712, %v712
      %v745 = vpack.c.b16 %v713, %v713
      %v746 = vpack.c.b16 %v714, %v714
      %v747 = vpack.c.b16 %v715, %v715
      %v748 = vpack.c.b16 %v716, %v716
      %v749 = vpack.c.b16 %v717, %v717
      %vm782 = vcmask 519168
      %783 = vst.msk [vmem:[%s185] sm:$0xf] %vm782, %v718
      %784 = vst.msk [vmem:[%s185 + $0x4] sm:$0xf] %vm782, %v719
      %785 = vst.msk [vmem:[%s185 + $0x8] sm:$0xf] %vm782, %v720
      %786 = vst.msk [vmem:[%s185 + $0xc] sm:$0xf] %vm782, %v721
      %787 = vst.msk [vmem:[%s185 + $0x10] sm:$0xf] %vm782, %v722
      %788 = vst.msk [vmem:[%s185 + $0x14] sm:$0xf] %vm782, %v723
      %789 = vst.msk [vmem:[%s185 + $0x18] sm:$0xf] %vm782, %v724
      %790 = vst.msk [vmem:[%s185 + $0x1c] sm:$0xf] %vm782, %v725
      %791 = vst.msk [vmem:[%s185 + $0x20] sm:$0xf] %vm782, %v726
      %792 = vst.msk [vmem:[%s185 + $0x24] sm:$0xf] %vm782, %v727
      %793 = vst.msk [vmem:[%s185 + $0x28] sm:$0xf] %vm782, %v728
      %794 = vst.msk [vmem:[%s185 + $0x2c] sm:$0xf] %vm782, %v729
      %795 = vst.msk [vmem:[%s185 + $0x30] sm:$0xf] %vm782, %v730
      %796 = vst.msk [vmem:[%s185 + $0x34] sm:$0xf] %vm782, %v731
      %797 = vst.msk [vmem:[%s185 + $0x38] sm:$0xf] %vm782, %v732
      %798 = vst.msk [vmem:[%s185 + $0x3c] sm:$0xf] %vm782, %v733
      %799 = vst.msk [vmem:[%s185 + $0x40] sm:$0xf] %vm782, %v734
      %800 = vst.msk [vmem:[%s185 + $0x44] sm:$0xf] %vm782, %v735
      %801 = vst.msk [vmem:[%s185 + $0x48] sm:$0xf] %vm782, %v736
      %802 = vst.msk [vmem:[%s185 + $0x4c] sm:$0xf] %vm782, %v737
      %803 = vst.msk [vmem:[%s185 + $0x50] sm:$0xf] %vm782, %v738
      %804 = vst.msk [vmem:[%s185 + $0x54] sm:$0xf] %vm782, %v739
      %805 = vst.msk [vmem:[%s185 + $0x58] sm:$0xf] %vm782, %v740
      %806 = vst.msk [vmem:[%s185 + $0x5c] sm:$0xf] %vm782, %v741
      %807 = vst.msk [vmem:[%s185 + $0x60] sm:$0xf] %vm782, %v742
      %808 = vst.msk [vmem:[%s185 + $0x64] sm:$0xf] %vm782, %v743
      %809 = vst.msk [vmem:[%s185 + $0x68] sm:$0xf] %vm782, %v744
      %810 = vst.msk [vmem:[%s185 + $0x6c] sm:$0xf] %vm782, %v745
      %811 = vst.msk [vmem:[%s185 + $0x70] sm:$0xf] %vm782, %v746
      %812 = vst.msk [vmem:[%s185 + $0x74] sm:$0xf] %vm782, %v747
      %813 = vst.msk [vmem:[%s185 + $0x78] sm:$0xf] %vm782, %v748
      %814 = vst.msk [vmem:[%s185 + $0x7c] sm:$0xf] %vm782, %v749
      %s815 = smul.u32 32, %s17
      %p816 = scmp.lt.s32.totalorder %s815, 63
      %s817 = scalar_select %p816, %s815, 63
      %p818 = scmp.lt.s32.totalorder %s18, 0
      %s819 = scalar_select %p818, %s18, 0
      %s820 = sadd.s32 %s819, %s817
      %s821 = smul.addr %s820, 4
      %s822 = scalar_lea.vmem %s2, %s821
      // Predicated region
      $region29: #{stem_forward.3} parent=27 // pred_check
        %p823 = pneg %p97
      $region30: #{stem_forward.3} parent=27 // pred_check_branch
        %825 = sbr.rel (%p823) target = $region32
      $region31: #{stem_forward.3} parent=27 // pred_region
        %s826 = smul.u32 32, %s17
      $region32: #{stem_forward.3} parent=27 // pred_fallthru
        _
    $region28: #{stem_forward.3} parent=5 // pred_fallthru
      _
    %p827 = scmp.le.s32.totalorder 2, %s8
    // Predicated region
    $region33: #{stem_forward.3} parent=5 // pred_check
      %p828 = pneg %p827
    $region34: #{stem_forward.3} parent=5 // pred_check_branch
      %830 = sbr.rel (%p828) target = $region36
    $region35: #{stem_forward.3} parent=5 // pred_region
      %s831 = ssub.s32 %s8, 2
      // Predicated region
      $region37: #{stem_forward.3} parent=35 // pred_check
        %p832 = pneg %p103
      $region38: #{stem_forward.3} parent=35 // pred_check_branch
        %834 = sbr.rel (%p832) target = $region40
      $region39: #{stem_forward.3} parent=35 // pred_region
        %s835 = smul.u32 32, %s19
        %p836 = scmp.lt.s32.totalorder %s835, 63
        %s837 = scalar_select %p836, %s835, 63
        %p838 = scmp.lt.s32.totalorder %s20, 0
        %s839 = scalar_select %p838, %s20, 0
        %s840 = sadd.s32 %s839, %s837
        %s841 = smul.addr %s840, 4
        %s842 = scalar_lea.vmem %s2, %s841
      $region40: #{stem_forward.3} parent=35 // pred_fallthru
        _
    $region36: #{stem_forward.3} parent=5 // pred_fallthru
      _
  $region6: #{stem_forward.3} parent=0 // loop_footer
    %s12 = sadd.s32 1, %s8
  $region7: #{stem_forward.3} parent=0 // loop_footer_branch
    %7 = sbr.rel target = $region3
  $region8: #{stem_forward.3} parent=0 // loop_exit
    _

// kernel: stem_forward.4
$region0: #{stem_forward.4}
  #allocation0 [shape = 'u32[]', space=smem, size = 0x4, offset = 0x4, fixed_abs, tag = 'smem constant byte address 0x4 - core index']
  #allocation1 [shape = 'u32[144,128]{1,0:T(1,128)}', space=vmem, size = 0x12000, scoped, tag = 'internal scratch']
  %s0 = inlined_call_operand.vmem [shape: bf16[512,64], index: 0, kind: input, shape index: {}]
  %s1 = inlined_call_operand.vmem [shape: f32[1,64], index: 1, kind: input, shape index: {}]
  %s2 = inlined_call_operand.vmem [shape: f32[1,64], index: 2, kind: input, shape index: {}]
  %s3 = inlined_call_operand.vmem [shape: bf16[512,64], index: 3, kind: output, shape index: {}]
  %s4 = sld [smem:[#allocation0]]
  $region22: #{stem_forward.4} parent=0
    _
  %s6 = ssub.s32 1, %s4
  %s7 = scalar_select 0, %s6, %s4
  // Predicated region
  $region2: #{stem_forward.4} parent=0 // pred_check
    _
  $region3: #{stem_forward.4} parent=0 // pred_check_branch
    %9 = sbr.rel (0) target = $region5
  $region4: #{stem_forward.4} parent=0 // pred_region
    _
  $region5: #{stem_forward.4} parent=0 // pred_fallthru
    _
  // Predicated region
  $region6: #{stem_forward.4} parent=0 // pred_check
    _
  $region7: #{stem_forward.4} parent=0 // pred_check_branch
    %11 = sbr.rel (0) target = $region9
  $region8: #{stem_forward.4} parent=0 // pred_region
    _
  $region9: #{stem_forward.4} parent=0 // pred_fallthru
    _
  // Predicated region
  $region10: #{stem_forward.4} parent=0 // pred_check
    _
  $region11: #{stem_forward.4} parent=0 // pred_check_branch
    %13 = sbr.rel (0) target = $region13
  $region12: #{stem_forward.4} parent=0 // pred_region
    _
  $region13: #{stem_forward.4} parent=0 // pred_fallthru
    _
  %v14 = vld [vmem:[%s0] sm:$0xf]
  %v15 = vld [vmem:[%s0 + $0x4] sm:$0xf]
  %v16 = vld [vmem:[%s0 + $0x8] sm:$0xf]
  %v17 = vld [vmem:[%s0 + $0xc] sm:$0xf]
  %v18 = vld [vmem:[%s0 + $0x10] sm:$0xf]
  %v19 = vld [vmem:[%s0 + $0x14] sm:$0xf]
  %v20 = vld [vmem:[%s0 + $0x18] sm:$0xf]
  %v21 = vld [vmem:[%s0 + $0x1c] sm:$0xf]
  %v22 = vld [vmem:[%s0 + $0x20] sm:$0xf]
  %v23 = vld [vmem:[%s0 + $0x24] sm:$0xf]
  %v24 = vld [vmem:[%s0 + $0x28] sm:$0xf]
  %v25 = vld [vmem:[%s0 + $0x2c] sm:$0xf]
  %v26 = vld [vmem:[%s0 + $0x30] sm:$0xf]
  %v27 = vld [vmem:[%s0 + $0x34] sm:$0xf]
  %v28 = vld [vmem:[%s0 + $0x38] sm:$0xf]
  %v29 = vld [vmem:[%s0 + $0x3c] sm:$0xf]
  %v30 = vld [vmem:[%s0 + $0x40] sm:$0xf]
  %v31 = vld [vmem:[%s0 + $0x44] sm:$0xf]
  %v32 = vld [vmem:[%s0 + $0x48] sm:$0xf]
  %v33 = vld [vmem:[%s0 + $0x4c] sm:$0xf]
  %v34 = vld [vmem:[%s0 + $0x50] sm:$0xf]
  %v35 = vld [vmem:[%s0 + $0x54] sm:$0xf]
  %v36 = vld [vmem:[%s0 + $0x58] sm:$0xf]
  %v37 = vld [vmem:[%s0 + $0x5c] sm:$0xf]
  %v38 = vld [vmem:[%s0 + $0x60] sm:$0xf]
  %v39 = vld [vmem:[%s0 + $0x64] sm:$0xf]
  %v40 = vld [vmem:[%s0 + $0x68] sm:$0xf]
  %v41 = vld [vmem:[%s0 + $0x6c] sm:$0xf]
  %v42 = vld [vmem:[%s0 + $0x70] sm:$0xf]
  %v43 = vld [vmem:[%s0 + $0x74] sm:$0xf]
  %v44 = vld [vmem:[%s0 + $0x78] sm:$0xf]
  %v45 = vld [vmem:[%s0 + $0x7c] sm:$0xf]
  %v46 = vld [vmem:[%s0 + $0x80] sm:$0xf]
  %v47 = vld [vmem:[%s0 + $0x84] sm:$0xf]
  %v48 = vld [vmem:[%s0 + $0x88] sm:$0xf]
  %v49 = vld [vmem:[%s0 + $0x8c] sm:$0xf]
  %v50 = vld [vmem:[%s0 + $0x90] sm:$0xf]
  %v51 = vld [vmem:[%s0 + $0x94] sm:$0xf]
  %v52 = vld [vmem:[%s0 + $0x98] sm:$0xf]
  %v53 = vld [vmem:[%s0 + $0x9c] sm:$0xf]
  %v54 = vld [vmem:[%s0 + $0xa0] sm:$0xf]
  %v55 = vld [vmem:[%s0 + $0xa4] sm:$0xf]
  %v56 = vld [vmem:[%s0 + $0xa8] sm:$0xf]
  %v57 = vld [vmem:[%s0 + $0xac] sm:$0xf]
  %v58 = vld [vmem:[%s0 + $0xb0] sm:$0xf]
  %v59 = vld [vmem:[%s0 + $0xb4] sm:$0xf]
  %v60 = vld [vmem:[%s0 + $0xb8] sm:$0xf]
  %v61 = vld [vmem:[%s0 + $0xbc] sm:$0xf]
  %v62 = vld [vmem:[%s0 + $0xc0] sm:$0xf]
  %v63 = vld [vmem:[%s0 + $0xc4] sm:$0xf]
  %v64 = vld [vmem:[%s0 + $0xc8] sm:$0xf]
  %v65 = vld [vmem:[%s0 + $0xcc] sm:$0xf]
  %v66 = vld [vmem:[%s0 + $0xd0] sm:$0xf]
  %v67 = vld [vmem:[%s0 + $0xd4] sm:$0xf]
  %v68 = vld [vmem:[%s0 + $0xd8] sm:$0xf]
  %v69 = vld [vmem:[%s0 + $0xdc] sm:$0xf]
  %v70 = vld [vmem:[%s0 + $0xe0] sm:$0xf]
  %v71 = vld [vmem:[%s0 + $0xe4] sm:$0xf]
  %v72 = vld [vmem:[%s0 + $0xe8] sm:$0xf]
  %v73 = vld [vmem:[%s0 + $0xec] sm:$0xf]
  %v74 = vld [vmem:[%s0 + $0xf0] sm:$0xf]
  %v75 = vld [vmem:[%s0 + $0xf4] sm:$0xf]
  %v76 = vld [vmem:[%s0 + $0xf8] sm:$0xf]
  %v77 = vld [vmem:[%s0 + $0xfc] sm:$0xf]
  %v78 = vunpack.c.l.bf16 %v14
  %v79 = vunpack.c.l.bf16 %v15
  %v80 = vunpack.c.l.bf16 %v16
  %v81 = vunpack.c.l.bf16 %v17
  %v82 = vunpack.c.l.bf16 %v18
  %v83 = vunpack.c.l.bf16 %v19
  %v84 = vunpack.c.l.bf16 %v20
  %v85 = vunpack.c.l.bf16 %v21
  %v86 = vunpack.c.l.bf16 %v22
  %v87 = vunpack.c.l.bf16 %v23
  %v88 = vunpack.c.l.bf16 %v24
  %v89 = vunpack.c.l.bf16 %v25
  %v90 = vunpack.c.l.bf16 %v26
  %v91 = vunpack.c.l.bf16 %v27
  %v92 = vunpack.c.l.bf16 %v28
  %v93 = vunpack.c.l.bf16 %v29
  %v94 = vunpack.c.l.bf16 %v30
  %v95 = vunpack.c.l.bf16 %v31
  %v96 = vunpack.c.l.bf16 %v32
  %v97 = vunpack.c.l.bf16 %v33
  %v98 = vunpack.c.l.bf16 %v34
  %v99 = vunpack.c.l.bf16 %v35
  %v100 = vunpack.c.l.bf16 %v36
  %v101 = vunpack.c.l.bf16 %v37
  %v102 = vunpack.c.l.bf16 %v38
  %v103 = vunpack.c.l.bf16 %v39
  %v104 = vunpack.c.l.bf16 %v40
  %v105 = vunpack.c.l.bf16 %v41
  %v106 = vunpack.c.l.bf16 %v42
  %v107 = vunpack.c.l.bf16 %v43
  %v108 = vunpack.c.l.bf16 %v44
  %v109 = vunpack.c.l.bf16 %v45
  %v110 = vunpack.c.l.bf16 %v46
  %v111 = vunpack.c.l.bf16 %v47
  %v112 = vunpack.c.l.bf16 %v48
  %v113 = vunpack.c.l.bf16 %v49
  %v114 = vunpack.c.l.bf16 %v50
  %v115 = vunpack.c.l.bf16 %v51
  %v116 = vunpack.c.l.bf16 %v52
  %v117 = vunpack.c.l.bf16 %v53
  %v118 = vunpack.c.l.bf16 %v54
  %v119 = vunpack.c.l.bf16 %v55
  %v120 = vunpack.c.l.bf16 %v56
  %v121 = vunpack.c.l.bf16 %v57
  %v122 = vunpack.c.l.bf16 %v58
  %v123 = vunpack.c.l.bf16 %v59
  %v124 = vunpack.c.l.bf16 %v60
  %v125 = vunpack.c.l.bf16 %v61
  %v126 = vunpack.c.l.bf16 %v62
  %v127 = vunpack.c.l.bf16 %v63
  %v128 = vunpack.c.l.bf16 %v64
  %v129 = vunpack.c.l.bf16 %v65
  %v130 = vunpack.c.l.bf16 %v66
  %v131 = vunpack.c.l.bf16 %v67
  %v132 = vunpack.c.l.bf16 %v68
  %v133 = vunpack.c.l.bf16 %v69
  %v134 = vunpack.c.l.bf16 %v70
  %v135 = vunpack.c.l.bf16 %v71
  %v136 = vunpack.c.l.bf16 %v72
  %v137 = vunpack.c.l.bf16 %v73
  %v138 = vunpack.c.l.bf16 %v74
  %v139 = vunpack.c.l.bf16 %v75
  %v140 = vunpack.c.l.bf16 %v76
  %v141 = vunpack.c.l.bf16 %v77
  %vm142 = vcmask 523264
  %v143 = vsel %vm142, %v78, 0.0
  %v144 = vsel %vm142, %v79, 0.0
  %v145 = vadd.f32 %v143, %v144
  %v146 = vsel %vm142, %v80, 0.0
  %v147 = vadd.f32 %v145, %v146
  %v148 = vsel %vm142, %v81, 0.0
  %v149 = vadd.f32 %v147, %v148
  %v150 = vsel %vm142, %v82, 0.0
  %v151 = vadd.f32 %v149, %v150
  %v152 = vsel %vm142, %v83, 0.0
  %v153 = vadd.f32 %v151, %v152
  %v154 = vsel %vm142, %v84, 0.0
  %v155 = vadd.f32 %v153, %v154
  %v156 = vsel %vm142, %v85, 0.0
  %v157 = vadd.f32 %v155, %v156
  %v158 = vsel %vm142, %v86, 0.0
  %v159 = vadd.f32 %v157, %v158
  %v160 = vsel %vm142, %v87, 0.0
  %v161 = vadd.f32 %v159, %v160
  %v162 = vsel %vm142, %v88, 0.0
  %v163 = vadd.f32 %v161, %v162
  %v164 = vsel %vm142, %v89, 0.0
  %v165 = vadd.f32 %v163, %v164
  %v166 = vsel %vm142, %v90, 0.0
  %v167 = vadd.f32 %v165, %v166
  %v168 = vsel %vm142, %v91, 0.0
  %v169 = vadd.f32 %v167, %v168
  %v170 = vsel %vm142, %v92, 0.0
  %v171 = vadd.f32 %v169, %v170
  %v172 = vsel %vm142, %v93, 0.0
  %v173 = vadd.f32 %v171, %v172
  %v174 = vsel %vm142, %v94, 0.0
  %v175 = vadd.f32 %v173, %v174
  %v176 = vsel %vm142, %v95, 0.0
  %v177 = vadd.f32 %v175, %v176
  %v178 = vsel %vm142, %v96, 0.0
  %v179 = vadd.f32 %v177, %v178
  %v180 = vsel %vm142, %v97, 0.0
  %v181 = vadd.f32 %v179, %v180
  %v182 = vsel %vm142, %v98, 0.0
  %v183 = vadd.f32 %v181, %v182
  %v184 = vsel %vm142, %v99, 0.0
  %v185 = vadd.f32 %v183, %v184
  %v186 = vsel %vm142, %v100, 0.0
  %v187 = vadd.f32 %v185, %v186
  %v188 = vsel %vm142, %v101, 0.0
  %v189 = vadd.f32 %v187, %v188
  %v190 = vsel %vm142, %v102, 0.0
  %v191 = vadd.f32 %v189, %v190
  %v192 = vsel %vm142, %v103, 0.0
  %v193 = vadd.f32 %v191, %v192
  %v194 = vsel %vm142, %v104, 0.0
  %v195 = vadd.f32 %v193, %v194
  %v196 = vsel %vm142, %v105, 0.0
  %v197 = vadd.f32 %v195, %v196
  %v198 = vsel %vm142, %v106, 0.0
  %v199 = vadd.f32 %v197, %v198
  %v200 = vsel %vm142, %v107, 0.0
  %v201 = vadd.f32 %v199, %v200
  %v202 = vsel %vm142, %v108, 0.0
  %v203 = vadd.f32 %v201, %v202
  %v204 = vsel %vm142, %v109, 0.0
  %v205 = vadd.f32 %v203, %v204
  %v206 = vsel %vm142, %v110, 0.0
  %v207 = vadd.f32 %v205, %v206
  %v208 = vsel %vm142, %v111, 0.0
  %v209 = vadd.f32 %v207, %v208
  %v210 = vsel %vm142, %v112, 0.0
  %v211 = vadd.f32 %v209, %v210
  %v212 = vsel %vm142, %v113, 0.0
  %v213 = vadd.f32 %v211, %v212
  %v214 = vsel %vm142, %v114, 0.0
  %v215 = vadd.f32 %v213, %v214
  %v216 = vsel %vm142, %v115, 0.0
  %v217 = vadd.f32 %v215, %v216
  %v218 = vsel %vm142, %v116, 0.0
  %v219 = vadd.f32 %v217, %v218
  %v220 = vsel %vm142, %v117, 0.0
  %v221 = vadd.f32 %v219, %v220
  %v222 = vsel %vm142, %v118, 0.0
  %v223 = vadd.f32 %v221, %v222
  %v224 = vsel %vm142, %v119, 0.0
  %v225 = vadd.f32 %v223, %v224
  %v226 = vsel %vm142, %v120, 0.0
  %v227 = vadd.f32 %v225, %v226
  %v228 = vsel %vm142, %v121, 0.0
  %v229 = vadd.f32 %v227, %v228
  %v230 = vsel %vm142, %v122, 0.0
  %v231 = vadd.f32 %v229, %v230
  %v232 = vsel %vm142, %v123, 0.0
  %v233 = vadd.f32 %v231, %v232
  %v234 = vsel %vm142, %v124, 0.0
  %v235 = vadd.f32 %v233, %v234
  %v236 = vsel %vm142, %v125, 0.0
  %v237 = vadd.f32 %v235, %v236
  %v238 = vsel %vm142, %v126, 0.0
  %v239 = vadd.f32 %v237, %v238
  %v240 = vsel %vm142, %v127, 0.0
  %v241 = vadd.f32 %v239, %v240
  %v242 = vsel %vm142, %v128, 0.0
  %v243 = vadd.f32 %v241, %v242
  %v244 = vsel %vm142, %v129, 0.0
  %v245 = vadd.f32 %v243, %v244
  %v246 = vsel %vm142, %v130, 0.0
  %v247 = vadd.f32 %v245, %v246
  %v248 = vsel %vm142, %v131, 0.0
  %v249 = vadd.f32 %v247, %v248
  %v250 = vsel %vm142, %v132, 0.0
  %v251 = vadd.f32 %v249, %v250
  %v252 = vsel %vm142, %v133, 0.0
  %v253 = vadd.f32 %v251, %v252
  %v254 = vsel %vm142, %v134, 0.0
  %v255 = vadd.f32 %v253, %v254
  %v256 = vsel %vm142, %v135, 0.0
  %v257 = vadd.f32 %v255, %v256
  %v258 = vsel %vm142, %v136, 0.0
  %v259 = vadd.f32 %v257, %v258
  %v260 = vsel %vm142, %v137, 0.0
  %v261 = vadd.f32 %v259, %v260
  %v262 = vsel %vm142, %v138, 0.0
  %v263 = vadd.f32 %v261, %v262
  %v264 = vsel %vm142, %v139, 0.0
  %v265 = vadd.f32 %v263, %v264
  %v266 = vsel %vm142, %v140, 0.0
  %v267 = vadd.f32 %v265, %v266
  %v268 = vsel %vm142, %v141, 0.0
  %v269 = vadd.f32 %v267, %v268
  %v270 = vrot.slane %v269, 4
  %v271 = vadd.f32 %v269, %v270
  %v272 = vrot.slane %v271, 2
  %v273 = vadd.f32 %v271, %v272
  %v274 = vrot.slane %v273, 1
  %v275 = vadd.f32 %v273, %v274
  %v276 = vrcp.pop 512.0
  %v277 = vmul.f32 %v275, %v276
  %v278 = vsub.f32 %v78, %v277
  %v279 = vsub.f32 %v79, %v277
  %v280 = vsub.f32 %v80, %v277
  %v281 = vsub.f32 %v81, %v277
  %v282 = vsub.f32 %v82, %v277
  %v283 = vsub.f32 %v83, %v277
  %v284 = vsub.f32 %v84, %v277
  %v285 = vsub.f32 %v85, %v277
  %v286 = vsub.f32 %v86, %v277
  %v287 = vsub.f32 %v87, %v277
  %v288 = vsub.f32 %v88, %v277
  %v289 = vsub.f32 %v89, %v277
  %v290 = vsub.f32 %v90, %v277
  %v291 = vsub.f32 %v91, %v277
  %v292 = vsub.f32 %v92, %v277
  %v293 = vsub.f32 %v93, %v277
  %v294 = vsub.f32 %v94, %v277
  %v295 = vsub.f32 %v95, %v277
  %v296 = vsub.f32 %v96, %v277
  %v297 = vsub.f32 %v97, %v277
  %v298 = vsub.f32 %v98, %v277
  %v299 = vsub.f32 %v99, %v277
  %v300 = vsub.f32 %v100, %v277
  %v301 = vsub.f32 %v101, %v277
  %v302 = vsub.f32 %v102, %v277
  %v303 = vsub.f32 %v103, %v277
  %v304 = vsub.f32 %v104, %v277
  %v305 = vsub.f32 %v105, %v277
  %v306 = vsub.f32 %v106, %v277
  %v307 = vsub.f32 %v107, %v277
  %v308 = vsub.f32 %v108, %v277
  %v309 = vsub.f32 %v109, %v277
  %v310 = vsub.f32 %v110, %v277
  %v311 = vsub.f32 %v111, %v277
  %v312 = vsub.f32 %v112, %v277
  %v313 = vsub.f32 %v113, %v277
  %v314 = vsub.f32 %v114, %v277
  %v315 = vsub.f32 %v115, %v277
  %v316 = vsub.f32 %v116, %v277
  %v317 = vsub.f32 %v117, %v277
  %v318 = vsub.f32 %v118, %v277
  %v319 = vsub.f32 %v119, %v277
  %v320 = vsub.f32 %v120, %v277
  %v321 = vsub.f32 %v121, %v277
  %v322 = vsub.f32 %v122, %v277
  %v323 = vsub.f32 %v123, %v277
  %v324 = vsub.f32 %v124, %v277
  %v325 = vsub.f32 %v125, %v277
  %v326 = vsub.f32 %v126, %v277
  %v327 = vsub.f32 %v127, %v277
  %v328 = vsub.f32 %v128, %v277
  %v329 = vsub.f32 %v129, %v277
  %v330 = vsub.f32 %v130, %v277
  %v331 = vsub.f32 %v131, %v277
  %v332 = vsub.f32 %v132, %v277
  %v333 = vsub.f32 %v133, %v277
  %v334 = vsub.f32 %v134, %v277
  %v335 = vsub.f32 %v135, %v277
  %v336 = vsub.f32 %v136, %v277
  %v337 = vsub.f32 %v137, %v277
  %v338 = vsub.f32 %v138, %v277
  %v339 = vsub.f32 %v139, %v277
  %v340 = vsub.f32 %v140, %v277
  %v341 = vsub.f32 %v141, %v277
  %v342 = vmul.f32 %v278, %v278
  %v343 = vmul.f32 %v279, %v279
  %v344 = vmul.f32 %v280, %v280
  %v345 = vmul.f32 %v281, %v281
  %v346 = vmul.f32 %v282, %v282
  %v347 = vmul.f32 %v283, %v283
  %v348 = vmul.f32 %v284, %v284
  %v349 = vmul.f32 %v285, %v285
  %v350 = vmul.f32 %v286, %v286
  %v351 = vmul.f32 %v287, %v287
  %v352 = vmul.f32 %v288, %v288
  %v353 = vmul.f32 %v289, %v289
  %v354 = vmul.f32 %v290, %v290
  %v355 = vmul.f32 %v291, %v291
  %v356 = vmul.f32 %v292, %v292
  %v357 = vmul.f32 %v293, %v293
  %v358 = vmul.f32 %v294, %v294
  %v359 = vmul.f32 %v295, %v295
  %v360 = vmul.f32 %v296, %v296
  %v361 = vmul.f32 %v297, %v297
  %v362 = vmul.f32 %v298, %v298
  %v363 = vmul.f32 %v299, %v299
  %v364 = vmul.f32 %v300, %v300
  %v365 = vmul.f32 %v301, %v301
  %v366 = vmul.f32 %v302, %v302
  %v367 = vmul.f32 %v303, %v303
  %v368 = vmul.f32 %v304, %v304
  %v369 = vmul.f32 %v305, %v305
  %v370 = vmul.f32 %v306, %v306
  %v371 = vmul.f32 %v307, %v307
  %v372 = vmul.f32 %v308, %v308
  %v373 = vmul.f32 %v309, %v309
  %v374 = vmul.f32 %v310, %v310
  %v375 = vmul.f32 %v311, %v311
  %v376 = vmul.f32 %v312, %v312
  %v377 = vmul.f32 %v313, %v313
  %v378 = vmul.f32 %v314, %v314
  %v379 = vmul.f32 %v315, %v315
  %v380 = vmul.f32 %v316, %v316
  %v381 = vmul.f32 %v317, %v317
  %v382 = vmul.f32 %v318, %v318
  %v383 = vmul.f32 %v319, %v319
  %v384 = vmul.f32 %v320, %v320
  %v385 = vmul.f32 %v321, %v321
  %v386 = vmul.f32 %v322, %v322
  %v387 = vmul.f32 %v323, %v323
  %v388 = vmul.f32 %v324, %v324
  %v389 = vmul.f32 %v325, %v325
  %v390 = vmul.f32 %v326, %v326
  %v391 = vmul.f32 %v327, %v327
  %v392 = vmul.f32 %v328, %v328
  %v393 = vmul.f32 %v329, %v329
  %v394 = vmul.f32 %v330, %v330
  %v395 = vmul.f32 %v331, %v331
  %v396 = vmul.f32 %v332, %v332
  %v397 = vmul.f32 %v333, %v333
  %v398 = vmul.f32 %v334, %v334
  %v399 = vmul.f32 %v335, %v335
  %v400 = vmul.f32 %v336, %v336
  %v401 = vmul.f32 %v337, %v337
  %v402 = vmul.f32 %v338, %v338
  %v403 = vmul.f32 %v339, %v339
  %v404 = vmul.f32 %v340, %v340
  %v405 = vmul.f32 %v341, %v341
  %v406 = vsel %vm142, %v342, 0.0
  %v407 = vsel %vm142, %v343, 0.0
  %v408 = vadd.f32 %v406, %v407
  %v409 = vsel %vm142, %v344, 0.0
  %v410 = vadd.f32 %v408, %v409
  %v411 = vsel %vm142, %v345, 0.0
  %v412 = vadd.f32 %v410, %v411
  %v413 = vsel %vm142, %v346, 0.0
  %v414 = vadd.f32 %v412, %v413
  %v415 = vsel %vm142, %v347, 0.0
  %v416 = vadd.f32 %v414, %v415
  %v417 = vsel %vm142, %v348, 0.0
  %v418 = vadd.f32 %v416, %v417
  %v419 = vsel %vm142, %v349, 0.0
  %v420 = vadd.f32 %v418, %v419
  %v421 = vsel %vm142, %v350, 0.0
  %v422 = vadd.f32 %v420, %v421
  %v423 = vsel %vm142, %v351, 0.0
  %v424 = vadd.f32 %v422, %v423
  %v425 = vsel %vm142, %v352, 0.0
  %v426 = vadd.f32 %v424, %v425
  %v427 = vsel %vm142, %v353, 0.0
  %v428 = vadd.f32 %v426, %v427
  %v429 = vsel %vm142, %v354, 0.0
  %v430 = vadd.f32 %v428, %v429
  %v431 = vsel %vm142, %v355, 0.0
  %v432 = vadd.f32 %v430, %v431
  %v433 = vsel %vm142, %v356, 0.0
  %v434 = vadd.f32 %v432, %v433
  %v435 = vsel %vm142, %v357, 0.0
  %v436 = vadd.f32 %v434, %v435
  %v437 = vsel %vm142, %v358, 0.0
  %v438 = vadd.f32 %v436, %v437
  %v439 = vsel %vm142, %v359, 0.0
  %v440 = vadd.f32 %v438, %v439
  %v441 = vsel %vm142, %v360, 0.0
  %v442 = vadd.f32 %v440, %v441
  %v443 = vsel %vm142, %v361, 0.0
  %v444 = vadd.f32 %v442, %v443
  %v445 = vsel %vm142, %v362, 0.0
  %v446 = vadd.f32 %v444, %v445
  %v447 = vsel %vm142, %v363, 0.0
  %v448 = vadd.f32 %v446, %v447
  %v449 = vsel %vm142, %v364, 0.0
  %v450 = vadd.f32 %v448, %v449
  %v451 = vsel %vm142, %v365, 0.0
  %v452 = vadd.f32 %v450, %v451
  %v453 = vsel %vm142, %v366, 0.0
  %v454 = vadd.f32 %v452, %v453
  %v455 = vsel %vm142, %v367, 0.0
  %v456 = vadd.f32 %v454, %v455
  %v457 = vsel %vm142, %v368, 0.0
  %v458 = vadd.f32 %v456, %v457
  %v459 = vsel %vm142, %v369, 0.0
  %v460 = vadd.f32 %v458, %v459
  %v461 = vsel %vm142, %v370, 0.0
  %v462 = vadd.f32 %v460, %v461
  %v463 = vsel %vm142, %v371, 0.0
  %v464 = vadd.f32 %v462, %v463
  %v465 = vsel %vm142, %v372, 0.0
  %v466 = vadd.f32 %v464, %v465
  %v467 = vsel %vm142, %v373, 0.0
  %v468 = vadd.f32 %v466, %v467
  %v469 = vsel %vm142, %v374, 0.0
  %v470 = vadd.f32 %v468, %v469
  %v471 = vsel %vm142, %v375, 0.0
  %v472 = vadd.f32 %v470, %v471
  %v473 = vsel %vm142, %v376, 0.0
  %v474 = vadd.f32 %v472, %v473
  %v475 = vsel %vm142, %v377, 0.0
  %v476 = vadd.f32 %v474, %v475
  %v477 = vsel %vm142, %v378, 0.0
  %v478 = vadd.f32 %v476, %v477
  %v479 = vsel %vm142, %v379, 0.0
  %v480 = vadd.f32 %v478, %v479
  %v481 = vsel %vm142, %v380, 0.0
  %v482 = vadd.f32 %v480, %v481
  %v483 = vsel %vm142, %v381, 0.0
  %v484 = vadd.f32 %v482, %v483
  %v485 = vsel %vm142, %v382, 0.0
  %v486 = vadd.f32 %v484, %v485
  %v487 = vsel %vm142, %v383, 0.0
  %v488 = vadd.f32 %v486, %v487
  %v489 = vsel %vm142, %v384, 0.0
  %v490 = vadd.f32 %v488, %v489
  %v491 = vsel %vm142, %v385, 0.0
  %v492 = vadd.f32 %v490, %v491
  %v493 = vsel %vm142, %v386, 0.0
  %v494 = vadd.f32 %v492, %v493
  %v495 = vsel %vm142, %v387, 0.0
  %v496 = vadd.f32 %v494, %v495
  %v497 = vsel %vm142, %v388, 0.0
  %v498 = vadd.f32 %v496, %v497
  %v499 = vsel %vm142, %v389, 0.0
  %v500 = vadd.f32 %v498, %v499
  %v501 = vsel %vm142, %v390, 0.0
  %v502 = vadd.f32 %v500, %v501
  %v503 = vsel %vm142, %v391, 0.0
  %v504 = vadd.f32 %v502, %v503
  %v505 = vsel %vm142, %v392, 0.0
  %v506 = vadd.f32 %v504, %v505
  %v507 = vsel %vm142, %v393, 0.0
  %v508 = vadd.f32 %v506, %v507
  %v509 = vsel %vm142, %v394, 0.0
  %v510 = vadd.f32 %v508, %v509
  %v511 = vsel %vm142, %v395, 0.0
  %v512 = vadd.f32 %v510, %v511
  %v513 = vsel %vm142, %v396, 0.0
  %v514 = vadd.f32 %v512, %v513
  %v515 = vsel %vm142, %v397, 0.0
  %v516 = vadd.f32 %v514, %v515
  %v517 = vsel %vm142, %v398, 0.0
  %v518 = vadd.f32 %v516, %v517
  %v519 = vsel %vm142, %v399, 0.0
  %v520 = vadd.f32 %v518, %v519
  %v521 = vsel %vm142, %v400, 0.0
  %v522 = vadd.f32 %v520, %v521
  %v523 = vsel %vm142, %v401, 0.0
  %v524 = vadd.f32 %v522, %v523
  %v525 = vsel %vm142, %v402, 0.0
  %v526 = vadd.f32 %v524, %v525
  %v527 = vsel %vm142, %v403, 0.0
  %v528 = vadd.f32 %v526, %v527
  %v529 = vsel %vm142, %v404, 0.0
  %v530 = vadd.f32 %v528, %v529
  %v531 = vsel %vm142, %v405, 0.0
  %v532 = vadd.f32 %v530, %v531
  %v533 = vrot.slane %v532, 4
  %v534 = vadd.f32 %v532, %v533
  %v535 = vrot.slane %v534, 2
  %v536 = vadd.f32 %v534, %v535
  %v537 = vrot.slane %v536, 1
  %v538 = vadd.f32 %v536, %v537
  %v539 = vmul.f32 %v538, %v276
  %v540 = vadd.f32 %v539, 1e-05
  %v541 = vrsqrt.pop %v540
  %v542 = vmul.f32 %v278, %v541
  %v543 = vmul.f32 %v279, %v541
  %v544 = vmul.f32 %v280, %v541
  %v545 = vmul.f32 %v281, %v541
  %v546 = vmul.f32 %v282, %v541
  %v547 = vmul.f32 %v283, %v541
  %v548 = vmul.f32 %v284, %v541
  %v549 = vmul.f32 %v285, %v541
  %v550 = vmul.f32 %v286, %v541
  %v551 = vmul.f32 %v287, %v541
  %v552 = vmul.f32 %v288, %v541
  %v553 = vmul.f32 %v289, %v541
  %v554 = vmul.f32 %v290, %v541
  %v555 = vmul.f32 %v291, %v541
  %v556 = vmul.f32 %v292, %v541
  %v557 = vmul.f32 %v293, %v541
  %v558 = vmul.f32 %v294, %v541
  %v559 = vmul.f32 %v295, %v541
  %v560 = vmul.f32 %v296, %v541
  %v561 = vmul.f32 %v297, %v541
  %v562 = vmul.f32 %v298, %v541
  %v563 = vmul.f32 %v299, %v541
  %v564 = vmul.f32 %v300, %v541
  %v565 = vmul.f32 %v301, %v541
  %v566 = vmul.f32 %v302, %v541
  %v567 = vmul.f32 %v303, %v541
  %v568 = vmul.f32 %v304, %v541
  %v569 = vmul.f32 %v305, %v541
  %v570 = vmul.f32 %v306, %v541
  %v571 = vmul.f32 %v307, %v541
  %v572 = vmul.f32 %v308, %v541
  %v573 = vmul.f32 %v309, %v541
  %v574 = vmul.f32 %v310, %v541
  %v575 = vmul.f32 %v311, %v541
  %v576 = vmul.f32 %v312, %v541
  %v577 = vmul.f32 %v313, %v541
  %v578 = vmul.f32 %v314, %v541
  %v579 = vmul.f32 %v315, %v541
  %v580 = vmul.f32 %v316, %v541
  %v581 = vmul.f32 %v317, %v541
  %v582 = vmul.f32 %v318, %v541
  %v583 = vmul.f32 %v319, %v541
  %v584 = vmul.f32 %v320, %v541
  %v585 = vmul.f32 %v321, %v541
  %v586 = vmul.f32 %v322, %v541
  %v587 = vmul.f32 %v323, %v541
  %v588 = vmul.f32 %v324, %v541
  %v589 = vmul.f32 %v325, %v541
  %v590 = vmul.f32 %v326, %v541
  %v591 = vmul.f32 %v327, %v541
  %v592 = vmul.f32 %v328, %v541
  %v593 = vmul.f32 %v329, %v541
  %v594 = vmul.f32 %v330, %v541
  %v595 = vmul.f32 %v331, %v541
  %v596 = vmul.f32 %v332, %v541
  %v597 = vmul.f32 %v333, %v541
  %v598 = vmul.f32 %v334, %v541
  %v599 = vmul.f32 %v335, %v541
  %v600 = vmul.f32 %v336, %v541
  %v601 = vmul.f32 %v337, %v541
  %v602 = vmul.f32 %v338, %v541
  %v603 = vmul.f32 %v339, %v541
  %v604 = vmul.f32 %v340, %v541
  %v605 = vmul.f32 %v341, %v541
  %v606 = vld [vmem:[%s1] sm:$0x1]
  %v608 = vlaneseq
  %v609 = vshrl.u32 %v608, 7
  %v610 = vsub.s32 0, %v609
  %v611 = vrot.slane %v606, %v610
  %v613 = vmul.f32 %v542, %v611
  %v614 = vmul.f32 %v543, %v611
  %v615 = vmul.f32 %v544, %v611
  %v616 = vmul.f32 %v545, %v611
  %v617 = vmul.f32 %v546, %v611
  %v618 = vmul.f32 %v547, %v611
  %v619 = vmul.f32 %v548, %v611
  %v620 = vmul.f32 %v549, %v611
  %v621 = vmul.f32 %v550, %v611
  %v622 = vmul.f32 %v551, %v611
  %v623 = vmul.f32 %v552, %v611
  %v624 = vmul.f32 %v553, %v611
  %v625 = vmul.f32 %v554, %v611
  %v626 = vmul.f32 %v555, %v611
  %v627 = vmul.f32 %v556, %v611
  %v628 = vmul.f32 %v557, %v611
  %v629 = vmul.f32 %v558, %v611
  %v630 = vmul.f32 %v559, %v611
  %v631 = vmul.f32 %v560, %v611
  %v632 = vmul.f32 %v561, %v611
  %v633 = vmul.f32 %v562, %v611
  %v634 = vmul.f32 %v563, %v611
  %v635 = vmul.f32 %v564, %v611
  %v636 = vmul.f32 %v565, %v611
  %v637 = vmul.f32 %v566, %v611
  %v638 = vmul.f32 %v567, %v611
  %v639 = vmul.f32 %v568, %v611
  %v640 = vmul.f32 %v569, %v611
  %v641 = vmul.f32 %v570, %v611
  %v642 = vmul.f32 %v571, %v611
  %v643 = vmul.f32 %v572, %v611
  %v644 = vmul.f32 %v573, %v611
  %v645 = vmul.f32 %v574, %v611
  %v646 = vmul.f32 %v575, %v611
  %v647 = vmul.f32 %v576, %v611
  %v648 = vmul.f32 %v577, %v611
  %v649 = vmul.f32 %v578, %v611
  %v650 = vmul.f32 %v579, %v611
  %v651 = vmul.f32 %v580, %v611
  %v652 = vmul.f32 %v581, %v611
  %v653 = vmul.f32 %v582, %v611
  %v654 = vmul.f32 %v583, %v611
  %v655 = vmul.f32 %v584, %v611
  %v656 = vmul.f32 %v585, %v611
  %v657 = vmul.f32 %v586, %v611
  %v658 = vmul.f32 %v587, %v611
  %v659 = vmul.f32 %v588, %v611
  %v660 = vmul.f32 %v589, %v611
  %v661 = vmul.f32 %v590, %v611
  %v662 = vmul.f32 %v591, %v611
  %v663 = vmul.f32 %v592, %v611
  %v664 = vmul.f32 %v593, %v611
  %v665 = vmul.f32 %v594, %v611
  %v666 = vmul.f32 %v595, %v611
  %v667 = vmul.f32 %v596, %v611
  %v668 = vmul.f32 %v597, %v611
  %v669 = vmul.f32 %v598, %v611
  %v670 = vmul.f32 %v599, %v611
  %v671 = vmul.f32 %v600, %v611
  %v672 = vmul.f32 %v601, %v611
  %v673 = vmul.f32 %v602, %v611
  %v674 = vmul.f32 %v603, %v611
  %v675 = vmul.f32 %v604, %v611
  %v676 = vmul.f32 %v605, %v611
  %v677 = vld [vmem:[%s2] sm:$0x1]
  %v679 = vlaneseq
  %v680 = vshrl.u32 %v679, 7
  %v681 = vsub.s32 0, %v680
  %v682 = vrot.slane %v677, %v681
  %v684 = vadd.f32 %v613, %v682
  %v685 = vadd.f32 %v614, %v682
  %v686 = vadd.f32 %v615, %v682
  %v687 = vadd.f32 %v616, %v682
  %v688 = vadd.f32 %v617, %v682
  %v689 = vadd.f32 %v618, %v682
  %v690 = vadd.f32 %v619, %v682
  %v691 = vadd.f32 %v620, %v682
  %v692 = vadd.f32 %v621, %v682
  %v693 = vadd.f32 %v622, %v682
  %v694 = vadd.f32 %v623, %v682
  %v695 = vadd.f32 %v624, %v682
  %v696 = vadd.f32 %v625, %v682
  %v697 = vadd.f32 %v626, %v682
  %v698 = vadd.f32 %v627, %v682
  %v699 = vadd.f32 %v628, %v682
  %v700 = vadd.f32 %v629, %v682
  %v701 = vadd.f32 %v630, %v682
  %v702 = vadd.f32 %v631, %v682
  %v703 = vadd.f32 %v632, %v682
  %v704 = vadd.f32 %v633, %v682
  %v705 = vadd.f32 %v634, %v682
  %v706 = vadd.f32 %v635, %v682
  %v707 = vadd.f32 %v636, %v682
  %v708 = vadd.f32 %v637, %v682
  %v709 = vadd.f32 %v638, %v682
  %v710 = vadd.f32 %v639, %v682
  %v711 = vadd.f32 %v640, %v682
  %v712 = vadd.f32 %v641, %v682
  %v713 = vadd.f32 %v642, %v682
  %v714 = vadd.f32 %v643, %v682
  %v715 = vadd.f32 %v644, %v682
  %v716 = vadd.f32 %v645, %v682
  %v717 = vadd.f32 %v646, %v682
  %v718 = vadd.f32 %v647, %v682
  %v719 = vadd.f32 %v648, %v682
  %v720 = vadd.f32 %v649, %v682
  %v721 = vadd.f32 %v650, %v682
  %v722 = vadd.f32 %v651, %v682
  %v723 = vadd.f32 %v652, %v682
  %v724 = vadd.f32 %v653, %v682
  %v725 = vadd.f32 %v654, %v682
  %v726 = vadd.f32 %v655, %v682
  %v727 = vadd.f32 %v656, %v682
  %v728 = vadd.f32 %v657, %v682
  %v729 = vadd.f32 %v658, %v682
  %v730 = vadd.f32 %v659, %v682
  %v731 = vadd.f32 %v660, %v682
  %v732 = vadd.f32 %v661, %v682
  %v733 = vadd.f32 %v662, %v682
  %v734 = vadd.f32 %v663, %v682
  %v735 = vadd.f32 %v664, %v682
  %v736 = vadd.f32 %v665, %v682
  %v737 = vadd.f32 %v666, %v682
  %v738 = vadd.f32 %v667, %v682
  %v739 = vadd.f32 %v668, %v682
  %v740 = vadd.f32 %v669, %v682
  %v741 = vadd.f32 %v670, %v682
  %v742 = vadd.f32 %v671, %v682
  %v743 = vadd.f32 %v672, %v682
  %v744 = vadd.f32 %v673, %v682
  %v745 = vadd.f32 %v674, %v682
  %v746 = vadd.f32 %v675, %v682
  %v747 = vadd.f32 %v676, %v682
  %v748 = vmax.f32 %v684, 0.0
  %v749 = vmax.f32 %v685, 0.0
  %v750 = vmax.f32 %v686, 0.0
  %v751 = vmax.f32 %v687, 0.0
  %v752 = vmax.f32 %v688, 0.0
  %v753 = vmax.f32 %v689, 0.0
  %v754 = vmax.f32 %v690, 0.0
  %v755 = vmax.f32 %v691, 0.0
  %v756 = vmax.f32 %v692, 0.0
  %v757 = vmax.f32 %v693, 0.0
  %v758 = vmax.f32 %v694, 0.0
  %v759 = vmax.f32 %v695, 0.0
  %v760 = vmax.f32 %v696, 0.0
  %v761 = vmax.f32 %v697, 0.0
  %v762 = vmax.f32 %v698, 0.0
  %v763 = vmax.f32 %v699, 0.0
  %v764 = vmax.f32 %v700, 0.0
  %v765 = vmax.f32 %v701, 0.0
  %v766 = vmax.f32 %v702, 0.0
  %v767 = vmax.f32 %v703, 0.0
  %v768 = vmax.f32 %v704, 0.0
  %v769 = vmax.f32 %v705, 0.0
  %v770 = vmax.f32 %v706, 0.0
  %v771 = vmax.f32 %v707, 0.0
  %v772 = vmax.f32 %v708, 0.0
  %v773 = vmax.f32 %v709, 0.0
  %v774 = vmax.f32 %v710, 0.0
  %v775 = vmax.f32 %v711, 0.0
  %v776 = vmax.f32 %v712, 0.0
  %v777 = vmax.f32 %v713, 0.0
  %v778 = vmax.f32 %v714, 0.0
  %v779 = vmax.f32 %v715, 0.0
  %v780 = vmax.f32 %v716, 0.0
  %v781 = vmax.f32 %v717, 0.0
  %v782 = vmax.f32 %v718, 0.0
  %v783 = vmax.f32 %v719, 0.0
  %v784 = vmax.f32 %v720, 0.0
  %v785 = vmax.f32 %v721, 0.0
  %v786 = vmax.f32 %v722, 0.0
  %v787 = vmax.f32 %v723, 0.0
  %v788 = vmax.f32 %v724, 0.0
  %v789 = vmax.f32 %v725, 0.0
  %v790 = vmax.f32 %v726, 0.0
  %v791 = vmax.f32 %v727, 0.0
  %v792 = vmax.f32 %v728, 0.0
  %v793 = vmax.f32 %v729, 0.0
  %v794 = vmax.f32 %v730, 0.0
  %v795 = vmax.f32 %v731, 0.0
  %v796 = vmax.f32 %v732, 0.0
  %v797 = vmax.f32 %v733, 0.0
  %v798 = vmax.f32 %v734, 0.0
  %v799 = vmax.f32 %v735, 0.0
  %v800 = vmax.f32 %v736, 0.0
  %v801 = vmax.f32 %v737, 0.0
  %v802 = vmax.f32 %v738, 0.0
  %v803 = vmax.f32 %v739, 0.0
  %v804 = vmax.f32 %v740, 0.0
  %v805 = vmax.f32 %v741, 0.0
  %v806 = vmax.f32 %v742, 0.0
  %v807 = vmax.f32 %v743, 0.0
  %v808 = vmax.f32 %v744, 0.0
  %v809 = vmax.f32 %v745, 0.0
  %v810 = vmax.f32 %v746, 0.0
  %v811 = vmax.f32 %v747, 0.0
  %v812 = vpack.c.bf16 %v749, %v748
  %v813 = vpack.c.bf16 %v751, %v750
  %v814 = vpack.c.bf16 %v753, %v752
  %v815 = vpack.c.bf16 %v755, %v754
  %v816 = vpack.c.bf16 %v757, %v756
  %v817 = vpack.c.bf16 %v759, %v758
  %v818 = vpack.c.bf16 %v761, %v760
  %v819 = vpack.c.bf16 %v763, %v762
  %v820 = vpack.c.bf16 %v765, %v764
  %v821 = vpack.c.bf16 %v767, %v766
  %v822 = vpack.c.bf16 %v769, %v768
  %v823 = vpack.c.bf16 %v771, %v770
  %v824 = vpack.c.bf16 %v773, %v772
  %v825 = vpack.c.bf16 %v775, %v774
  %v826 = vpack.c.bf16 %v777, %v776
  %v827 = vpack.c.bf16 %v779, %v778
  %v828 = vpack.c.bf16 %v781, %v780
  %v829 = vpack.c.bf16 %v783, %v782
  %v830 = vpack.c.bf16 %v785, %v784
  %v831 = vpack.c.bf16 %v787, %v786
  %v832 = vpack.c.bf16 %v789, %v788
  %v833 = vpack.c.bf16 %v791, %v790
  %v834 = vpack.c.bf16 %v793, %v792
  %v835 = vpack.c.bf16 %v795, %v794
  %v836 = vpack.c.bf16 %v797, %v796
  %v837 = vpack.c.bf16 %v799, %v798
  %v838 = vpack.c.bf16 %v801, %v800
  %v839 = vpack.c.bf16 %v803, %v802
  %v840 = vpack.c.bf16 %v805, %v804
  %v841 = vpack.c.bf16 %v807, %v806
  %v842 = vpack.c.bf16 %v809, %v808
  %v843 = vpack.c.bf16 %v811, %v810
  %v876 = vunpack.c.l.b16 %v812
  %v877 = vunpack.c.h.b16 %v812
  %v878 = vunpack.c.l.b16 %v813
  %v879 = vunpack.c.h.b16 %v813
  %v880 = vunpack.c.l.b16 %v814
  %v881 = vunpack.c.h.b16 %v814
  %v882 = vunpack.c.l.b16 %v815
  %v883 = vunpack.c.h.b16 %v815
  %v884 = vunpack.c.l.b16 %v816
  %v885 = vunpack.c.h.b16 %v816
  %v886 = vunpack.c.l.b16 %v817
  %v887 = vunpack.c.h.b16 %v817
  %v888 = vunpack.c.l.b16 %v818
  %v889 = vunpack.c.h.b16 %v818
  %v890 = vunpack.c.l.b16 %v819
  %v891 = vunpack.c.h.b16 %v819
  %v892 = vunpack.c.l.b16 %v820
  %v893 = vunpack.c.h.b16 %v820
  %v894 = vunpack.c.l.b16 %v821
  %v895 = vunpack.c.h.b16 %v821
  %v896 = vunpack.c.l.b16 %v822
  %v897 = vunpack.c.h.b16 %v822
  %v898 = vunpack.c.l.b16 %v823
  %v899 = vunpack.c.h.b16 %v823
  %v900 = vunpack.c.l.b16 %v824
  %v901 = vunpack.c.h.b16 %v824
  %v902 = vunpack.c.l.b16 %v825
  %v903 = vunpack.c.h.b16 %v825
  %v904 = vunpack.c.l.b16 %v826
  %v905 = vunpack.c.h.b16 %v826
  %v906 = vunpack.c.l.b16 %v827
  %v907 = vunpack.c.h.b16 %v827
  %v908 = vunpack.c.l.b16 %v828
  %v909 = vunpack.c.h.b16 %v828
  %v910 = vunpack.c.l.b16 %v829
  %v911 = vunpack.c.h.b16 %v829
  %v912 = vunpack.c.l.b16 %v830
  %v913 = vunpack.c.h.b16 %v830
  %v914 = vunpack.c.l.b16 %v831
  %v915 = vunpack.c.h.b16 %v831
  %v916 = vunpack.c.l.b16 %v832
  %v917 = vunpack.c.h.b16 %v832
  %v918 = vunpack.c.l.b16 %v833
  %v919 = vunpack.c.h.b16 %v833
  %v920 = vunpack.c.l.b16 %v834
  %v921 = vunpack.c.h.b16 %v834
  %v922 = vunpack.c.l.b16 %v835
  %v923 = vunpack.c.h.b16 %v835
  %v924 = vunpack.c.l.b16 %v836
  %v925 = vunpack.c.h.b16 %v836
  %v926 = vunpack.c.l.b16 %v837
  %v927 = vunpack.c.h.b16 %v837
  %v928 = vunpack.c.l.b16 %v838
  %v929 = vunpack.c.h.b16 %v838
  %v930 = vunpack.c.l.b16 %v839
  %v931 = vunpack.c.h.b16 %v839
  %v932 = vunpack.c.l.b16 %v840
  %v933 = vunpack.c.h.b16 %v840
  %v934 = vunpack.c.l.b16 %v841
  %v935 = vunpack.c.h.b16 %v841
  %v936 = vunpack.c.l.b16 %v842
  %v937 = vunpack.c.h.b16 %v842
  %v938 = vunpack.c.l.b16 %v843
  %v939 = vunpack.c.h.b16 %v843
  %v940 = vpack.c.b16 %v876, %v876
  %v941 = vpack.c.b16 %v877, %v877
  %v942 = vpack.c.b16 %v878, %v878
  %v943 = vpack.c.b16 %v879, %v879
  %v944 = vpack.c.b16 %v880, %v880
  %v945 = vpack.c.b16 %v881, %v881
  %v946 = vpack.c.b16 %v882, %v882
  %v947 = vpack.c.b16 %v883, %v883
  %v948 = vpack.c.b16 %v884, %v884
  %v949 = vpack.c.b16 %v885, %v885
  %v950 = vpack.c.b16 %v886, %v886
  %v951 = vpack.c.b16 %v887, %v887
  %v952 = vpack.c.b16 %v888, %v888
  %v953 = vpack.c.b16 %v889, %v889
  %v954 = vpack.c.b16 %v890, %v890
  %v955 = vpack.c.b16 %v891, %v891
  %v956 = vpack.c.b16 %v892, %v892
  %v957 = vpack.c.b16 %v893, %v893
  %v958 = vpack.c.b16 %v894, %v894
  %v959 = vpack.c.b16 %v895, %v895
  %v960 = vpack.c.b16 %v896, %v896
  %v961 = vpack.c.b16 %v897, %v897
  %v962 = vpack.c.b16 %v898, %v898
  %v963 = vpack.c.b16 %v899, %v899
  %v964 = vpack.c.b16 %v900, %v900
  %v965 = vpack.c.b16 %v901, %v901
  %v966 = vpack.c.b16 %v902, %v902
  %v967 = vpack.c.b16 %v903, %v903
  %v968 = vpack.c.b16 %v904, %v904
  %v969 = vpack.c.b16 %v905, %v905
  %v970 = vpack.c.b16 %v906, %v906
  %v971 = vpack.c.b16 %v907, %v907
  %v972 = vpack.c.b16 %v908, %v908
  %v973 = vpack.c.b16 %v909, %v909
  %v974 = vpack.c.b16 %v910, %v910
  %v975 = vpack.c.b16 %v911, %v911
  %v976 = vpack.c.b16 %v912, %v912
  %v977 = vpack.c.b16 %v913, %v913
  %v978 = vpack.c.b16 %v914, %v914
  %v979 = vpack.c.b16 %v915, %v915
  %v980 = vpack.c.b16 %v916, %v916
  %v981 = vpack.c.b16 %v917, %v917
  %v982 = vpack.c.b16 %v918, %v918
  %v983 = vpack.c.b16 %v919, %v919
  %v984 = vpack.c.b16 %v920, %v920
  %v985 = vpack.c.b16 %v921, %v921
  %v986 = vpack.c.b16 %v922, %v922
  %v987 = vpack.c.b16 %v923, %v923
  %v988 = vpack.c.b16 %v924, %v924
  %v989 = vpack.c.b16 %v925, %v925
  %v990 = vpack.c.b16 %v926, %v926
  %v991 = vpack.c.b16 %v927, %v927
  %v992 = vpack.c.b16 %v928, %v928
  %v993 = vpack.c.b16 %v929, %v929
  %v994 = vpack.c.b16 %v930, %v930
  %v995 = vpack.c.b16 %v931, %v931
  %v996 = vpack.c.b16 %v932, %v932
  %v997 = vpack.c.b16 %v933, %v933
  %v998 = vpack.c.b16 %v934, %v934
  %v999 = vpack.c.b16 %v935, %v935
  %v1000 = vpack.c.b16 %v936, %v936
  %v1001 = vpack.c.b16 %v937, %v937
  %v1002 = vpack.c.b16 %v938, %v938
  %v1003 = vpack.c.b16 %v939, %v939
  %vm1068 = vcmask 519168
  %1069 = vst.msk [vmem:[%s3] sm:$0xf] %vm1068, %v940
  %1070 = vst.msk [vmem:[%s3 + $0x4] sm:$0xf] %vm1068, %v941
  %1071 = vst.msk [vmem:[%s3 + $0x8] sm:$0xf] %vm1068, %v942
  %1072 = vst.msk [vmem:[%s3 + $0xc] sm:$0xf] %vm1068, %v943
  %1073 = vst.msk [vmem:[%s3 + $0x10] sm:$0xf] %vm1068, %v944
  %1074 = vst.msk [vmem:[%s3 + $0x14] sm:$0xf] %vm1068, %v945
  %1075 = vst.msk [vmem:[%s3 + $0x18] sm:$0xf] %vm1068, %v946
  %1076 = vst.msk [vmem:[%s3 + $0x1c] sm:$0xf] %vm1068, %v947
  %1077 = vst.msk [vmem:[%s3 + $0x20] sm:$0xf] %vm1068, %v948
  %1078 = vst.msk [vmem:[%s3 + $0x24] sm:$0xf] %vm1068, %v949
  %1079 = vst.msk [vmem:[%s3 + $0x28] sm:$0xf] %vm1068, %v950
  %1080 = vst.msk [vmem:[%s3 + $0x2c] sm:$0xf] %vm1068, %v951
  %1081 = vst.msk [vmem:[%s3 + $0x30] sm:$0xf] %vm1068, %v952
  %1082 = vst.msk [vmem:[%s3 + $0x34] sm:$0xf] %vm1068, %v953
  %1083 = vst.msk [vmem:[%s3 + $0x38] sm:$0xf] %vm1068, %v954
  %1084 = vst.msk [vmem:[%s3 + $0x3c] sm:$0xf] %vm1068, %v955
  %1085 = vst.msk [vmem:[%s3 + $0x40] sm:$0xf] %vm1068, %v956
  %1086 = vst.msk [vmem:[%s3 + $0x44] sm:$0xf] %vm1068, %v957
  %1087 = vst.msk [vmem:[%s3 + $0x48] sm:$0xf] %vm1068, %v958
  %1088 = vst.msk [vmem:[%s3 + $0x4c] sm:$0xf] %vm1068, %v959
  %1089 = vst.msk [vmem:[%s3 + $0x50] sm:$0xf] %vm1068, %v960
  %1090 = vst.msk [vmem:[%s3 + $0x54] sm:$0xf] %vm1068, %v961
  %1091 = vst.msk [vmem:[%s3 + $0x58] sm:$0xf] %vm1068, %v962
  %1092 = vst.msk [vmem:[%s3 + $0x5c] sm:$0xf] %vm1068, %v963
  %1093 = vst.msk [vmem:[%s3 + $0x60] sm:$0xf] %vm1068, %v964
  %1094 = vst.msk [vmem:[%s3 + $0x64] sm:$0xf] %vm1068, %v965
  %1095 = vst.msk [vmem:[%s3 + $0x68] sm:$0xf] %vm1068, %v966
  %1096 = vst.msk [vmem:[%s3 + $0x6c] sm:$0xf] %vm1068, %v967
  %1097 = vst.msk [vmem:[%s3 + $0x70] sm:$0xf] %vm1068, %v968
  %1098 = vst.msk [vmem:[%s3 + $0x74] sm:$0xf] %vm1068, %v969
  %1099 = vst.msk [vmem:[%s3 + $0x78] sm:$0xf] %vm1068, %v970
  %1100 = vst.msk [vmem:[%s3 + $0x7c] sm:$0xf] %vm1068, %v971
  %1101 = vst.msk [vmem:[%s3 + $0x80] sm:$0xf] %vm1068, %v972
  %1102 = vst.msk [vmem:[%s3 + $0x84] sm:$0xf] %vm1068, %v973
  %1103 = vst.msk [vmem:[%s3 + $0x88] sm:$0xf] %vm1068, %v974
  %1104 = vst.msk [vmem:[%s3 + $0x8c] sm:$0xf] %vm1068, %v975
  %1105 = vst.msk [vmem:[%s3 + $0x90] sm:$0xf] %vm1068, %v976
  %1106 = vst.msk [vmem:[%s3 + $0x94] sm:$0xf] %vm1068, %v977
  %1107 = vst.msk [vmem:[%s3 + $0x98] sm:$0xf] %vm1068, %v978
  %1108 = vst.msk [vmem:[%s3 + $0x9c] sm:$0xf] %vm1068, %v979
  %1109 = vst.msk [vmem:[%s3 + $0xa0] sm:$0xf] %vm1068, %v980
  %1110 = vst.msk [vmem:[%s3 + $0xa4] sm:$0xf] %vm1068, %v981
  %1111 = vst.msk [vmem:[%s3 + $0xa8] sm:$0xf] %vm1068, %v982
  %1112 = vst.msk [vmem:[%s3 + $0xac] sm:$0xf] %vm1068, %v983
  %1113 = vst.msk [vmem:[%s3 + $0xb0] sm:$0xf] %vm1068, %v984
  %1114 = vst.msk [vmem:[%s3 + $0xb4] sm:$0xf] %vm1068, %v985
  %1115 = vst.msk [vmem:[%s3 + $0xb8] sm:$0xf] %vm1068, %v986
  %1116 = vst.msk [vmem:[%s3 + $0xbc] sm:$0xf] %vm1068, %v987
  %1117 = vst.msk [vmem:[%s3 + $0xc0] sm:$0xf] %vm1068, %v988
  %1118 = vst.msk [vmem:[%s3 + $0xc4] sm:$0xf] %vm1068, %v989
  %1119 = vst.msk [vmem:[%s3 + $0xc8] sm:$0xf] %vm1068, %v990
  %1120 = vst.msk [vmem:[%s3 + $0xcc] sm:$0xf] %vm1068, %v991
  %1121 = vst.msk [vmem:[%s3 + $0xd0] sm:$0xf] %vm1068, %v992
  %1122 = vst.msk [vmem:[%s3 + $0xd4] sm:$0xf] %vm1068, %v993
  %1123 = vst.msk [vmem:[%s3 + $0xd8] sm:$0xf] %vm1068, %v994
  %1124 = vst.msk [vmem:[%s3 + $0xdc] sm:$0xf] %vm1068, %v995
  %1125 = vst.msk [vmem:[%s3 + $0xe0] sm:$0xf] %vm1068, %v996
  %1126 = vst.msk [vmem:[%s3 + $0xe4] sm:$0xf] %vm1068, %v997
  %1127 = vst.msk [vmem:[%s3 + $0xe8] sm:$0xf] %vm1068, %v998
  %1128 = vst.msk [vmem:[%s3 + $0xec] sm:$0xf] %vm1068, %v999
  %1129 = vst.msk [vmem:[%s3 + $0xf0] sm:$0xf] %vm1068, %v1000
  %1130 = vst.msk [vmem:[%s3 + $0xf4] sm:$0xf] %vm1068, %v1001
  %1131 = vst.msk [vmem:[%s3 + $0xf8] sm:$0xf] %vm1068, %v1002
  %1132 = vst.msk [vmem:[%s3 + $0xfc] sm:$0xf] %vm1068, %v1003
  // Predicated region
  $region14: #{stem_forward.4} parent=0 // pred_check
    _
  $region15: #{stem_forward.4} parent=0 // pred_check_branch
    %1134 = sbr.rel (0) target = $region17
  $region16: #{stem_forward.4} parent=0 // pred_region
    _
  $region17: #{stem_forward.4} parent=0 // pred_fallthru
    _
  // Predicated region
  $region18: #{stem_forward.4} parent=0 // pred_check
    _
  $region19: #{stem_forward.4} parent=0 // pred_check_branch
    %1136 = sbr.rel (0) target = $region21
  $region20: #{stem_forward.4} parent=0 // pred_region
    _
  $region21: #{stem_forward.4} parent=0 // pred_fallthru
    _

// kernel: stem_forward.5
$region0: #{stem_forward.5}
  #allocation0 [shape = 'u32[]', space=smem, size = 0x4, offset = 0x4, fixed_abs, tag = 'smem constant byte address 0x4 - core index']
  #allocation1 [shape = 'u32[144,128]{1,0:T(1,128)}', space=vmem, size = 0x12000, scoped, tag = 'internal scratch']
  %s0 = inlined_call_operand.vmem [shape: bf16[2,332,64], index: 0, kind: input, shape index: {}]
  %s1 = inlined_call_operand.vmem [shape: bf16[2,288,64], index: 1, kind: output, shape index: {}]
  %s2 = sld [smem:[#allocation0]]
  $region37: #{stem_forward.5} parent=0
    _
  %s4 = ssub.s32 1, %s2
  %s5 = scalar_select 0, %s4, %s2
  loop: start=0, step=1, limit=4
  $region2: #{stem_forward.5} parent=0 // loop_pre_header
    _
  $region3: #{stem_forward.5} parent=0 // loop_header
    %s7 = sphi 0, %s11
    %p8 = scmp.ge.s32.totalorder %s7, 4
    %s17 = sphi 0, %s19
    %s20 = sphi 0, %s17
    %s21 = sphi 0, %s20
    %s37 = sphi 0, %s21
    %s43 = sphi 0, %s45
    %s46 = sphi 0, %s43
    %s47 = sphi 0, %s46
    %s63 = sphi 0, %s47
  $region4: #{stem_forward.5} parent=0 // loop_header_branch
    %10 = sbr.rel (%p8) target = $region8
  $region5: #{stem_forward.5} parent=0 // loop_body
    %s12 = ssub.s32 %s7, 1
    %s13 = ssub.s32 %s7, 2
    %s14 = sadd.s32 %s7, 1
    %s15 = ssub.s32 %s7, %s14
    %p16 = scmp.eq.s32.totalorder %s15, 0
    %s18 = sadd.s32 %s17, 1
    %s19 = scalar_select %p16, %s17, %s18
    %p22 = pneg %p16
    %p23 = scmp.eq.s32.totalorder %s7, 1
    %p24 = por %p22, %p23
    %p25 = scmp.ne.s32.totalorder %s17, %s20
    %p26 = scmp.eq.s32.totalorder %s7, 0
    %p27 = por %p25, %p26
    %p28 = scmp.ne.s32.totalorder %s17, %s20
    %p29 = scmp.eq.s32.totalorder %s12, 1
    %p30 = por %p28, %p29
    %p31 = scmp.ne.s32.totalorder %s20, %s21
    %p32 = scmp.eq.s32.totalorder %s12, 0
    %p33 = por %p31, %p32
    %p34 = scmp.ne.s32.totalorder %s20, %s21
    %p35 = scmp.eq.s32.totalorder %s13, 1
    %p36 = por %p34, %p35
    %p38 = scmp.ne.s32.totalorder %s21, %s37
    %p39 = scmp.eq.s32.totalorder %s13, 0
    %p40 = por %p38, %p39
    %s41 = ssub.s32 %s7, %s14
    %p42 = scmp.eq.s32.totalorder %s41, 0
    %s44 = sadd.s32 %s43, 1
    %s45 = scalar_select %p42, %s43, %s44
    %p48 = pneg %p42
    %p49 = scmp.eq.s32.totalorder %s7, 1
    %p50 = por %p48, %p49
    %p51 = scmp.ne.s32.totalorder %s43, %s46
    %p52 = scmp.eq.s32.totalorder %s7, 0
    %p53 = por %p51, %p52
    %p54 = scmp.ne.s32.totalorder %s43, %s46
    %p55 = scmp.eq.s32.totalorder %s12, 1
    %p56 = por %p54, %p55
    %p57 = scmp.ne.s32.totalorder %s46, %s47
    %p58 = scmp.eq.s32.totalorder %s12, 0
    %p59 = por %p57, %p58
    %p60 = scmp.ne.s32.totalorder %s46, %s47
    %p61 = scmp.eq.s32.totalorder %s13, 1
    %p62 = por %p60, %p61
    %p64 = scmp.ne.s32.totalorder %s47, %s63
    %p65 = scmp.eq.s32.totalorder %s13, 0
    %p66 = por %p64, %p65
    %p67 = scmp.le.s32.totalorder 1, %s7
    %p68 = scmp.lt.s32.totalorder %s7, 3
    %p69 = pnand %p67, %p68
    %p70 = pneg %p69
    // Predicated region
    $region9: #{stem_forward.5} parent=5 // pred_check
      _
    $region10: #{stem_forward.5} parent=5 // pred_check_branch
      %72 = sbr.rel (%p69) target = $region12
    $region11: #{stem_forward.5} parent=5 // pred_region
      %s73 = ssub.s32 %s7, 1
    $region12: #{stem_forward.5} parent=5 // pred_fallthru
      _
    %p74 = scmp.lt.s32.totalorder %s7, 2
    // Predicated region
    $region13: #{stem_forward.5} parent=5 // pred_check
      %p75 = pneg %p74
    $region14: #{stem_forward.5} parent=5 // pred_check_branch
      %77 = sbr.rel (%p75) target = $region16
    $region15: #{stem_forward.5} parent=5 // pred_region
      // Predicated region
      $region17: #{stem_forward.5} parent=15 // pred_check
        %p78 = pneg %p27
      $region18: #{stem_forward.5} parent=15 // pred_check_branch
        %80 = sbr.rel (%p78) target = $region20
      $region19: #{stem_forward.5} parent=15 // pred_region
        %p81 = scmp.lt.s32.totalorder %s7, 1
        %s82 = scalar_select %p81, %s7, 1
        %s83 = smul.addr %s82, 42
        %s84 = smul.addr %s83, 4
        %s85 = scalar_lea.vmem %s0, %s84
      $region20: #{stem_forward.5} parent=15 // pred_fallthru
        _
    $region16: #{stem_forward.5} parent=5 // pred_fallthru
      _
    %p86 = scmp.le.s32.totalorder 1, %s7
    %p87 = scmp.lt.s32.totalorder %s7, 3
    %p88 = pnand %p86, %p87
    %p89 = pneg %p88
    // Predicated region
    $region21: #{stem_forward.5} parent=5 // pred_check
      _
    $region22: #{stem_forward.5} parent=5 // pred_check_branch
      %91 = sbr.rel (%p88) target = $region24
    $region23: #{stem_forward.5} parent=5 // pred_region
      %s92 = ssub.s32 %s7, 1
      %p93 = scmp.lt.s32.totalorder %s12, 1
      %s94 = scalar_select %p93, %s12, 1
      %s95 = smul.addr %s94, 42
      %s96 = smul.addr %s95, 4
      %s97 = scalar_lea.vmem %s0, %s96
      %p98 = pneg %p33
      %p99 = pneg %p30
      %p100 = pneg %p59
      %p101 = pneg %p56
      %p102 = scmp.lt.s32.totalorder %s12, 1
      %s103 = scalar_select %p102, %s12, 1
      %s104 = smul.addr %s103, 36
      %s105 = smul.addr %s104, 4
      %s106 = scalar_lea.vmem %s1, %s105
      %p107 = scmp.lt.s32.totalorder %s12, 1
      %s108 = scalar_select %p107, %s12, 1
      %s109 = smul.addr %s108, 42
      %s110 = smul.addr %s109, 4
      %s111 = scalar_lea.vmem %s0, %s110
      %p112 = scmp.lt.s32.totalorder %s12, 1
      %s113 = scalar_select %p112, %s12, 1
      %s114 = smul.addr %s113, 36
      %s115 = smul.addr %s114, 4
      %s116 = scalar_lea.vmem %s1, %s115
      %v117 = vld [vmem:[%s111] sm:$0xf]
      %v118 = vld [vmem:[%s111 + $0x4] sm:$0xf]
      %v119 = vld [vmem:[%s111 + $0x8] sm:$0xf]
      %v120 = vld [vmem:[%s111 + $0xc] sm:$0xf]
      %v121 = vld [vmem:[%s111 + $0x10] sm:$0xf]
      %v122 = vld [vmem:[%s111 + $0x14] sm:$0xf]
      %v123 = vld [vmem:[%s111 + $0x18] sm:$0xf]
      %v124 = vld [vmem:[%s111 + $0x1c] sm:$0xf]
      %v125 = vld [vmem:[%s111 + $0x20] sm:$0xf]
      %v126 = vld [vmem:[%s111 + $0x24] sm:$0xf]
      %v127 = vld [vmem:[%s111 + $0x28] sm:$0xf]
      %v128 = vld [vmem:[%s111 + $0x2c] sm:$0xf]
      %v129 = vld [vmem:[%s111 + $0x30] sm:$0xf]
      %v130 = vld [vmem:[%s111 + $0x34] sm:$0xf]
      %v131 = vld [vmem:[%s111 + $0x38] sm:$0xf]
      %v132 = vld [vmem:[%s111 + $0x3c] sm:$0xf]
      %v133 = vld [vmem:[%s111 + $0x40] sm:$0xf]
      %v134 = vld [vmem:[%s111 + $0x44] sm:$0xf]
      %v135 = vld [vmem:[%s111 + $0x48] sm:$0xf]
      %v136 = vld [vmem:[%s111 + $0x4c] sm:$0xf]
      %v137 = vld [vmem:[%s111 + $0x50] sm:$0xf]
      %v138 = vld [vmem:[%s111 + $0x54] sm:$0xf]
      %v139 = vld [vmem:[%s111 + $0x58] sm:$0xf]
      %v140 = vld [vmem:[%s111 + $0x5c] sm:$0xf]
      %v141 = vld [vmem:[%s111 + $0x60] sm:$0xf]
      %v142 = vld [vmem:[%s111 + $0x64] sm:$0xf]
      %v143 = vld [vmem:[%s111 + $0x68] sm:$0xf]
      %v144 = vld [vmem:[%s111 + $0x6c] sm:$0xf]
      %v145 = vld [vmem:[%s111 + $0x70] sm:$0xf]
      %v146 = vld [vmem:[%s111 + $0x74] sm:$0xf]
      %v147 = vld [vmem:[%s111 + $0x78] sm:$0xf]
      %v148 = vld [vmem:[%s111 + $0x7c] sm:$0xf]
      %v149 = vld [vmem:[%s111 + $0x80] sm:$0xf]
      %v150 = vld [vmem:[%s111 + $0x84] sm:$0xf]
      %v151 = vld [vmem:[%s111 + $0x88] sm:$0xf]
      %v152 = vld [vmem:[%s111 + $0x8c] sm:$0xf]
      %v153 = vld [vmem:[%s111 + $0x90] sm:$0x1]
      %vm154 = vsmask.f32 3328
      %vm155 = vsmask.f32 7440
      %vm156 = vmor %vm154, %vm155
      %v158 = vshrl.u32 %v117, 16
      %v160 = vrot.slane %v158, 4
      %v161 = vshll.u32 %v117, 16
      %v163 = vrot.slane %v161, 5
      %v164 = vor.u32 %v160, %v163
      %v165 = vrot.slane %v164, 4
      %v167 = vshll.u32 %v118, 16
      %v169 = vrot.slane %v167, 5
      %v170 = vsel %vm156, %v165, %v169
      %v171 = vshrl.u32 %v118, 16
      %v173 = vrot.slane %v171, 4
      %v174 = vor.u32 %v173, %v169
      %v175 = vrot.slane %v174, 4
      %v177 = vshll.u32 %v119, 16
      %v179 = vrot.slane %v177, 5
      %v180 = vsel %vm156, %v175, %v179
      %v181 = vshrl.u32 %v119, 16
      %v183 = vrot.slane %v181, 4
      %v184 = vor.u32 %v183, %v179
      %v185 = vrot.slane %v184, 4
      %v187 = vshll.u32 %v120, 16
      %v189 = vrot.slane %v187, 5
      %v190 = vsel %vm156, %v185, %v189
      %v191 = vshrl.u32 %v120, 16
      %v193 = vrot.slane %v191, 4
      %v194 = vor.u32 %v193, %v189
      %v195 = vrot.slane %v194, 4
      %v197 = vshll.u32 %v121, 16
      %v199 = vrot.slane %v197, 5
      %v200 = vsel %vm156, %v195, %v199
      %v201 = vshrl.u32 %v121, 16
      %v203 = vrot.slane %v201, 4
      %v204 = vor.u32 %v203, %v199
      %v205 = vrot.slane %v204, 4
      %v207 = vshll.u32 %v122, 16
      %v209 = vrot.slane %v207, 5
      %v210 = vsel %vm156, %v205, %v209
      %v211 = vshrl.u32 %v122, 16
      %v213 = vrot.slane %v211, 4
      %v214 = vor.u32 %v213, %v209
      %v215 = vrot.slane %v214, 4
      %v217 = vshll.u32 %v123, 16
      %v219 = vrot.slane %v217, 5
      %v220 = vsel %vm156, %v215, %v219
      %v221 = vshrl.u32 %v123, 16
      %v223 = vrot.slane %v221, 4
      %v224 = vor.u32 %v223, %v219
      %v225 = vrot.slane %v224, 4
      %v227 = vshll.u32 %v124, 16
      %v229 = vrot.slane %v227, 5
      %v230 = vsel %vm156, %v225, %v229
      %v231 = vshrl.u32 %v124, 16
      %v233 = vrot.slane %v231, 4
      %v234 = vor.u32 %v233, %v229
      %v235 = vrot.slane %v234, 4
      %v237 = vshll.u32 %v125, 16
      %v239 = vrot.slane %v237, 5
      %v240 = vsel %vm156, %v235, %v239
      %v241 = vshrl.u32 %v125, 16
      %v243 = vrot.slane %v241, 4
      %v244 = vor.u32 %v243, %v239
      %v245 = vrot.slane %v244, 4
      %v247 = vshll.u32 %v126, 16
      %v249 = vrot.slane %v247, 5
      %v250 = vsel %vm156, %v245, %v249
      %v251 = vshrl.u32 %v126, 16
      %v253 = vrot.slane %v251, 4
      %v254 = vor.u32 %v253, %v249
      %v255 = vrot.slane %v254, 4
      %v257 = vshll.u32 %v127, 16
      %v259 = vrot.slane %v257, 5
      %v260 = vsel %vm156, %v255, %v259
      %v261 = vshrl.u32 %v127, 16
      %v263 = vrot.slane %v261, 4
      %v264 = vor.u32 %v263, %v259
      %v265 = vrot.slane %v264, 4
      %v267 = vshll.u32 %v128, 16
      %v269 = vrot.slane %v267, 5
      %v270 = vsel %vm156, %v265, %v269
      %v271 = vshrl.u32 %v128, 16
      %v273 = vrot.slane %v271, 4
      %v274 = vor.u32 %v273, %v269
      %v275 = vrot.slane %v274, 4
      %v277 = vshll.u32 %v129, 16
      %v279 = vrot.slane %v277, 5
      %v280 = vsel %vm156, %v275, %v279
      %v281 = vshrl.u32 %v129, 16
      %v283 = vrot.slane %v281, 4
      %v284 = vor.u32 %v283, %v279
      %v285 = vrot.slane %v284, 4
      %v287 = vshll.u32 %v130, 16
      %v289 = vrot.slane %v287, 5
      %v290 = vsel %vm156, %v285, %v289
      %v291 = vshrl.u32 %v130, 16
      %v293 = vrot.slane %v291, 4
      %v294 = vor.u32 %v293, %v289
      %v295 = vrot.slane %v294, 4
      %v297 = vshll.u32 %v131, 16
      %v299 = vrot.slane %v297, 5
      %v300 = vsel %vm156, %v295, %v299
      %v301 = vshrl.u32 %v131, 16
      %v303 = vrot.slane %v301, 4
      %v304 = vor.u32 %v303, %v299
      %v305 = vrot.slane %v304, 4
      %v307 = vshll.u32 %v132, 16
      %v309 = vrot.slane %v307, 5
      %v310 = vsel %vm156, %v305, %v309
      %v311 = vshrl.u32 %v132, 16
      %v313 = vrot.slane %v311, 4
      %v314 = vor.u32 %v313, %v309
      %v315 = vrot.slane %v314, 4
      %v317 = vshll.u32 %v133, 16
      %v319 = vrot.slane %v317, 5
      %v320 = vsel %vm156, %v315, %v319
      %v321 = vshrl.u32 %v133, 16
      %v323 = vrot.slane %v321, 4
      %v324 = vor.u32 %v323, %v319
      %v325 = vrot.slane %v324, 4
      %v327 = vshll.u32 %v134, 16
      %v329 = vrot.slane %v327, 5
      %v330 = vsel %vm156, %v325, %v329
      %v331 = vshrl.u32 %v134, 16
      %v333 = vrot.slane %v331, 4
      %v334 = vor.u32 %v333, %v329
      %v335 = vrot.slane %v334, 4
      %v337 = vshll.u32 %v135, 16
      %v339 = vrot.slane %v337, 5
      %v340 = vsel %vm156, %v335, %v339
      %v341 = vshrl.u32 %v135, 16
      %v343 = vrot.slane %v341, 4
      %v344 = vor.u32 %v343, %v339
      %v345 = vrot.slane %v344, 4
      %v347 = vshll.u32 %v136, 16
      %v349 = vrot.slane %v347, 5
      %v350 = vsel %vm156, %v345, %v349
      %v351 = vshrl.u32 %v136, 16
      %v353 = vrot.slane %v351, 4
      %v354 = vor.u32 %v353, %v349
      %v355 = vrot.slane %v354, 4
      %v357 = vshll.u32 %v137, 16
      %v359 = vrot.slane %v357, 5
      %v360 = vsel %vm156, %v355, %v359
      %v361 = vshrl.u32 %v137, 16
      %v363 = vrot.slane %v361, 4
      %v364 = vor.u32 %v363, %v359
      %v365 = vrot.slane %v364, 4
      %v367 = vshll.u32 %v138, 16
      %v369 = vrot.slane %v367, 5
      %v370 = vsel %vm156, %v365, %v369
      %v371 = vshrl.u32 %v138, 16
      %v373 = vrot.slane %v371, 4
      %v374 = vor.u32 %v373, %v369
      %v375 = vrot.slane %v374, 4
      %v377 = vshll.u32 %v139, 16
      %v379 = vrot.slane %v377, 5
      %v380 = vsel %vm156, %v375, %v379
      %v381 = vshrl.u32 %v139, 16
      %v383 = vrot.slane %v381, 4
      %v384 = vor.u32 %v383, %v379
      %v385 = vrot.slane %v384, 4
      %v387 = vshll.u32 %v140, 16
      %v389 = vrot.slane %v387, 5
      %v390 = vsel %vm156, %v385, %v389
      %v391 = vshrl.u32 %v140, 16
      %v393 = vrot.slane %v391, 4
      %v394 = vor.u32 %v393, %v389
      %v395 = vrot.slane %v394, 4
      %v397 = vshll.u32 %v141, 16
      %v399 = vrot.slane %v397, 5
      %v400 = vsel %vm156, %v395, %v399
      %v401 = vshrl.u32 %v141, 16
      %v403 = vrot.slane %v401, 4
      %v404 = vor.u32 %v403, %v399
      %v405 = vrot.slane %v404, 4
      %v407 = vshll.u32 %v142, 16
      %v409 = vrot.slane %v407, 5
      %v410 = vsel %vm156, %v405, %v409
      %v411 = vshrl.u32 %v142, 16
      %v413 = vrot.slane %v411, 4
      %v414 = vor.u32 %v413, %v409
      %v415 = vrot.slane %v414, 4
      %v417 = vshll.u32 %v143, 16
      %v419 = vrot.slane %v417, 5
      %v420 = vsel %vm156, %v415, %v419
      %v421 = vshrl.u32 %v143, 16
      %v423 = vrot.slane %v421, 4
      %v424 = vor.u32 %v423, %v419
      %v425 = vrot.slane %v424, 4
      %v427 = vshll.u32 %v144, 16
      %v429 = vrot.slane %v427, 5
      %v430 = vsel %vm156, %v425, %v429
      %v431 = vshrl.u32 %v144, 16
      %v433 = vrot.slane %v431, 4
      %v434 = vor.u32 %v433, %v429
      %v435 = vrot.slane %v434, 4
      %v437 = vshll.u32 %v145, 16
      %v439 = vrot.slane %v437, 5
      %v440 = vsel %vm156, %v435, %v439
      %v441 = vshrl.u32 %v145, 16
      %v443 = vrot.slane %v441, 4
      %v444 = vor.u32 %v443, %v439
      %v445 = vrot.slane %v444, 4
      %v447 = vshll.u32 %v146, 16
      %v449 = vrot.slane %v447, 5
      %v450 = vsel %vm156, %v445, %v449
      %v451 = vshrl.u32 %v146, 16
      %v453 = vrot.slane %v451, 4
      %v454 = vor.u32 %v453, %v449
      %v455 = vrot.slane %v454, 4
      %v457 = vshll.u32 %v147, 16
      %v459 = vrot.slane %v457, 5
      %v460 = vsel %vm156, %v455, %v459
      %v461 = vshrl.u32 %v147, 16
      %v463 = vrot.slane %v461, 4
      %v464 = vor.u32 %v463, %v459
      %v465 = vrot.slane %v464, 4
      %v467 = vshll.u32 %v148, 16
      %v469 = vrot.slane %v467, 5
      %v470 = vsel %vm156, %v465, %v469
      %v471 = vshrl.u32 %v148, 16
      %v473 = vrot.slane %v471, 4
      %v474 = vor.u32 %v473, %v469
      %v475 = vrot.slane %v474, 4
      %v477 = vshll.u32 %v149, 16
      %v479 = vrot.slane %v477, 5
      %v480 = vsel %vm156, %v475, %v479
      %v481 = vshrl.u32 %v149, 16
      %v483 = vrot.slane %v481, 4
      %v484 = vor.u32 %v483, %v479
      %v485 = vrot.slane %v484, 4
      %v487 = vshll.u32 %v150, 16
      %v489 = vrot.slane %v487, 5
      %v490 = vsel %vm156, %v485, %v489
      %v491 = vshrl.u32 %v150, 16
      %v493 = vrot.slane %v491, 4
      %v494 = vor.u32 %v493, %v489
      %v495 = vrot.slane %v494, 4
      %v497 = vshll.u32 %v151, 16
      %v499 = vrot.slane %v497, 5
      %v500 = vsel %vm156, %v495, %v499
      %v501 = vshrl.u32 %v151, 16
      %v503 = vrot.slane %v501, 4
      %v504 = vor.u32 %v503, %v499
      %v505 = vrot.slane %v504, 4
      %v507 = vshll.u32 %v152, 16
      %v509 = vrot.slane %v507, 5
      %v510 = vsel %vm156, %v505, %v509
      %v511 = vshrl.u32 %v152, 16
      %v513 = vrot.slane %v511, 4
      %v514 = vor.u32 %v513, %v509
      %v515 = vrot.slane %v514, 4
      %v517 = vshll.u32 %v153, 16
      %v519 = vrot.slane %v517, 5
      %v520 = vsel %vm156, %v515, %v519
      %v557 = vmax.bf16 %v117, %v170
      %v558 = vmax.bf16 %v118, %v180
      %v559 = vmax.bf16 %v119, %v190
      %v560 = vmax.bf16 %v120, %v200
      %v561 = vmax.bf16 %v121, %v210
      %v562 = vmax.bf16 %v122, %v220
      %v563 = vmax.bf16 %v123, %v230
      %v564 = vmax.bf16 %v124, %v240
      %v565 = vmax.bf16 %v125, %v250
      %v566 = vmax.bf16 %v126, %v260
      %v567 = vmax.bf16 %v127, %v270
      %v568 = vmax.bf16 %v128, %v280
      %v569 = vmax.bf16 %v129, %v290
      %v570 = vmax.bf16 %v130, %v300
      %v571 = vmax.bf16 %v131, %v310
      %v572 = vmax.bf16 %v132, %v320
      %v573 = vmax.bf16 %v133, %v330
      %v574 = vmax.bf16 %v134, %v340
      %v575 = vmax.bf16 %v135, %v350
      %v576 = vmax.bf16 %v136, %v360
      %v577 = vmax.bf16 %v137, %v370
      %v578 = vmax.bf16 %v138, %v380
      %v579 = vmax.bf16 %v139, %v390
      %v580 = vmax.bf16 %v140, %v400
      %v581 = vmax.bf16 %v141, %v410
      %v582 = vmax.bf16 %v142, %v420
      %v583 = vmax.bf16 %v143, %v430
      %v584 = vmax.bf16 %v144, %v440
      %v585 = vmax.bf16 %v145, %v450
      %v586 = vmax.bf16 %v146, %v460
      %v587 = vmax.bf16 %v147, %v470
      %v588 = vmax.bf16 %v148, %v480
      %v589 = vmax.bf16 %v149, %v490
      %v590 = vmax.bf16 %v150, %v500
      %v591 = vmax.bf16 %v151, %v510
      %v592 = vmax.bf16 %v152, %v520
      %v593 = vld [vmem:[%s111] sm:$0xe]
      %vm631 = vcmask 1042432
      %vm632 = vcmask 1046532
      %vm633 = vmor %vm631, %vm632
      %v634 = vrot.slane %v593, 5
      %v635 = vrot.slane %v634, 4
      %v636 = vrot.slane %v118, 5
      %v637 = vsel %vm633, %v635, %v636
      %v638 = vrot.slane %v636, 4
      %v639 = vrot.slane %v119, 5
      %v640 = vsel %vm633, %v638, %v639
      %v641 = vrot.slane %v639, 4
      %v642 = vrot.slane %v120, 5
      %v643 = vsel %vm633, %v641, %v642
      %v644 = vrot.slane %v642, 4
      %v645 = vrot.slane %v121, 5
      %v646 = vsel %vm633, %v644, %v645
      %v647 = vrot.slane %v645, 4
      %v648 = vrot.slane %v122, 5
      %v649 = vsel %vm633, %v647, %v648
      %v650 = vrot.slane %v648, 4
      %v651 = vrot.slane %v123, 5
      %v652 = vsel %vm633, %v650, %v651
      %v653 = vrot.slane %v651, 4
      %v654 = vrot.slane %v124, 5
      %v655 = vsel %vm633, %v653, %v654
      %v656 = vrot.slane %v654, 4
      %v657 = vrot.slane %v125, 5
      %v658 = vsel %vm633, %v656, %v657
      %v659 = vrot.slane %v657, 4
      %v660 = vrot.slane %v126, 5
      %v661 = vsel %vm633, %v659, %v660
      %v662 = vrot.slane %v660, 4
      %v663 = vrot.slane %v127, 5
      %v664 = vsel %vm633, %v662, %v663
      %v665 = vrot.slane %v663, 4
      %v666 = vrot.slane %v128, 5
      %v667 = vsel %vm633, %v665, %v666
      %v668 = vrot.slane %v666, 4
      %v669 = vrot.slane %v129, 5
      %v670 = vsel %vm633, %v668, %v669
      %v671 = vrot.slane %v669, 4
      %v672 = vrot.slane %v130, 5
      %v673 = vsel %vm633, %v671, %v672
      %v674 = vrot.slane %v672, 4
      %v675 = vrot.slane %v131, 5
      %v676 = vsel %vm633, %v674, %v675
      %v677 = vrot.slane %v675, 4
      %v678 = vrot.slane %v132, 5
      %v679 = vsel %vm633, %v677, %v678
      %v680 = vrot.slane %v678, 4
      %v681 = vrot.slane %v133, 5
      %v682 = vsel %vm633, %v680, %v681
      %v683 = vrot.slane %v681, 4
      %v684 = vrot.slane %v134, 5
      %v685 = vsel %vm633, %v683, %v684
      %v686 = vrot.slane %v684, 4
      %v687 = vrot.slane %v135, 5
      %v688 = vsel %vm633, %v686, %v687
      %v689 = vrot.slane %v687, 4
      %v690 = vrot.slane %v136, 5
      %v691 = vsel %vm633, %v689, %v690
      %v692 = vrot.slane %v690, 4
      %v693 = vrot.slane %v137, 5
      %v694 = vsel %vm633, %v692, %v693
      %v695 = vrot.slane %v693, 4
      %v696 = vrot.slane %v138, 5
      %v697 = vsel %vm633, %v695, %v696
      %v698 = vrot.slane %v696, 4
      %v699 = vrot.slane %v139, 5
      %v700 = vsel %vm633, %v698, %v699
      %v701 = vrot.slane %v699, 4
      %v702 = vrot.slane %v140, 5
      %v703 = vsel %vm633, %v701, %v702
      %v704 = vrot.slane %v702, 4
      %v705 = vrot.slane %v141, 5
      %v706 = vsel %vm633, %v704, %v705
      %v707 = vrot.slane %v705, 4
      %v708 = vrot.slane %v142, 5
      %v709 = vsel %vm633, %v707, %v708
      %v710 = vrot.slane %v708, 4
      %v711 = vrot.slane %v143, 5
      %v712 = vsel %vm633, %v710, %v711
      %v713 = vrot.slane %v711, 4
      %v714 = vrot.slane %v144, 5
      %v715 = vsel %vm633, %v713, %v714
      %v716 = vrot.slane %v714, 4
      %v717 = vrot.slane %v145, 5
      %v718 = vsel %vm633, %v716, %v717
      %v719 = vrot.slane %v717, 4
      %v720 = vrot.slane %v146, 5
      %v721 = vsel %vm633, %v719, %v720
      %v722 = vrot.slane %v720, 4
      %v723 = vrot.slane %v147, 5
      %v724 = vsel %vm633, %v722, %v723
      %v725 = vrot.slane %v723, 4
      %v726 = vrot.slane %v148, 5
      %v727 = vsel %vm633, %v725, %v726
      %v728 = vrot.slane %v726, 4
      %v729 = vrot.slane %v149, 5
      %v730 = vsel %vm633, %v728, %v729
      %v731 = vrot.slane %v729, 4
      %v732 = vrot.slane %v150, 5
      %v733 = vsel %vm633, %v731, %v732
      %v734 = vrot.slane %v732, 4
      %v735 = vrot.slane %v151, 5
      %v736 = vsel %vm633, %v734, %v735
      %v737 = vrot.slane %v735, 4
      %v738 = vrot.slane %v152, 5
      %v739 = vsel %vm633, %v737, %v738
      %v740 = vrot.slane %v738, 4
      %v741 = vrot.slane %v153, 5
      %v742 = vsel %vm633, %v740, %v741
      %v779 = vmax.bf16 %v557, %v637
      %v780 = vmax.bf16 %v558, %v640
      %v781 = vmax.bf16 %v559, %v643
      %v782 = vmax.bf16 %v560, %v646
      %v783 = vmax.bf16 %v561, %v649
      %v784 = vmax.bf16 %v562, %v652
      %v785 = vmax.bf16 %v563, %v655
      %v786 = vmax.bf16 %v564, %v658
      %v787 = vmax.bf16 %v565, %v661
      %v788 = vmax.bf16 %v566, %v664
      %v789 = vmax.bf16 %v567, %v667
      %v790 = vmax.bf16 %v568, %v670
      %v791 = vmax.bf16 %v569, %v673
      %v792 = vmax.bf16 %v570, %v676
      %v793 = vmax.bf16 %v571, %v679
      %v794 = vmax.bf16 %v572, %v682
      %v795 = vmax.bf16 %v573, %v685
      %v796 = vmax.bf16 %v574, %v688
      %v797 = vmax.bf16 %v575, %v691
      %v798 = vmax.bf16 %v576, %v694
      %v799 = vmax.bf16 %v577, %v697
      %v800 = vmax.bf16 %v578, %v700
      %v801 = vmax.bf16 %v579, %v703
      %v802 = vmax.bf16 %v580, %v706
      %v803 = vmax.bf16 %v581, %v709
      %v804 = vmax.bf16 %v582, %v712
      %v805 = vmax.bf16 %v583, %v715
      %v806 = vmax.bf16 %v584, %v718
      %v807 = vmax.bf16 %v585, %v721
      %v808 = vmax.bf16 %v586, %v724
      %v809 = vmax.bf16 %v587, %v727
      %v810 = vmax.bf16 %v588, %v730
      %v811 = vmax.bf16 %v589, %v733
      %v812 = vmax.bf16 %v590, %v736
      %v813 = vmax.bf16 %v591, %v739
      %v814 = vmax.bf16 %v592, %v742
      %v815 = vld [vmem:[%s111 + $0x8] sm:$0xe]
      %v816 = vld [vmem:[%s111 + $0x90] sm:$0xf]
      %v817 = vld [vmem:[%s111 + $0x94] sm:$0xf]
      %v818 = vld [vmem:[%s111 + $0x98] sm:$0x1]
      %v823 = vrot.slane %v815, 5
      %v824 = vrot.slane %v823, 4
      %v825 = vsel %vm633, %v824, %v642
      %v826 = vrot.slane %v816, 5
      %v827 = vsel %vm633, %v740, %v826
      %v828 = vrot.slane %v826, 4
      %v829 = vrot.slane %v817, 5
      %v830 = vsel %vm633, %v828, %v829
      %v831 = vrot.slane %v829, 4
      %v832 = vrot.slane %v818, 5
      %v833 = vsel %vm633, %v831, %v832
      %v838 = vmax.bf16 %v779, %v825
      %v839 = vmax.bf16 %v780, %v646
      %v840 = vmax.bf16 %v781, %v649
      %v841 = vmax.bf16 %v782, %v652
      %v842 = vmax.bf16 %v783, %v655
      %v843 = vmax.bf16 %v784, %v658
      %v844 = vmax.bf16 %v785, %v661
      %v845 = vmax.bf16 %v786, %v664
      %v846 = vmax.bf16 %v787, %v667
      %v847 = vmax.bf16 %v788, %v670
      %v848 = vmax.bf16 %v789, %v673
      %v849 = vmax.bf16 %v790, %v676
      %v850 = vmax.bf16 %v791, %v679
      %v851 = vmax.bf16 %v792, %v682
      %v852 = vmax.bf16 %v793, %v685
      %v853 = vmax.bf16 %v794, %v688
      %v854 = vmax.bf16 %v795, %v691
      %v855 = vmax.bf16 %v796, %v694
      %v856 = vmax.bf16 %v797, %v697
      %v857 = vmax.bf16 %v798, %v700
      %v858 = vmax.bf16 %v799, %v703
      %v859 = vmax.bf16 %v800, %v706
      %v860 = vmax.bf16 %v801, %v709
      %v861 = vmax.bf16 %v802, %v712
      %v862 = vmax.bf16 %v803, %v715
      %v863 = vmax.bf16 %v804, %v718
      %v864 = vmax.bf16 %v805, %v721
      %v865 = vmax.bf16 %v806, %v724
      %v866 = vmax.bf16 %v807, %v727
      %v867 = vmax.bf16 %v808, %v730
      %v868 = vmax.bf16 %v809, %v733
      %v869 = vmax.bf16 %v810, %v736
      %v870 = vmax.bf16 %v811, %v739
      %v871 = vmax.bf16 %v812, %v827
      %v872 = vmax.bf16 %v813, %v830
      %v873 = vmax.bf16 %v814, %v833
      %v874 = vld [vmem:[%s111 + $0x98] sm:$0x3]
      %vm875 = vsmask.f32 2304
      %vm876 = vsmask.f32 6416
      %vm877 = vmor %vm875, %vm876
      %v879 = vshrl.u32 %v815, 16
      %v881 = vrot.slane %v879, 5
      %v882 = vshll.u32 %v815, 16
      %v884 = vrot.slane %v882, 6
      %v885 = vor.u32 %v881, %v884
      %v886 = vrot.slane %v885, 4
      %v887 = vrot.slane %v191, 5
      %v888 = vrot.slane %v187, 6
      %v889 = vor.u32 %v887, %v888
      %v890 = vsel %vm877, %v886, %v889
      %v891 = vrot.slane %v889, 4
      %v892 = vrot.slane %v201, 5
      %v893 = vrot.slane %v197, 6
      %v894 = vor.u32 %v892, %v893
      %v895 = vsel %vm877, %v891, %v894
      %v896 = vrot.slane %v894, 4
      %v897 = vrot.slane %v211, 5
      %v898 = vrot.slane %v207, 6
      %v899 = vor.u32 %v897, %v898
      %v900 = vsel %vm877, %v896, %v899
      %v901 = vrot.slane %v899, 4
      %v902 = vrot.slane %v221, 5
      %v903 = vrot.slane %v217, 6
      %v904 = vor.u32 %v902, %v903
      %v905 = vsel %vm877, %v901, %v904
      %v906 = vrot.slane %v904, 4
      %v907 = vrot.slane %v231, 5
      %v908 = vrot.slane %v227, 6
      %v909 = vor.u32 %v907, %v908
      %v910 = vsel %vm877, %v906, %v909
      %v911 = vrot.slane %v909, 4
      %v912 = vrot.slane %v241, 5
      %v913 = vrot.slane %v237, 6
      %v914 = vor.u32 %v912, %v913
      %v915 = vsel %vm877, %v911, %v914
      %v916 = vrot.slane %v914, 4
      %v917 = vrot.slane %v251, 5
      %v918 = vrot.slane %v247, 6
      %v919 = vor.u32 %v917, %v918
      %v920 = vsel %vm877, %v916, %v919
      %v921 = vrot.slane %v919, 4
      %v922 = vrot.slane %v261, 5
      %v923 = vrot.slane %v257, 6
      %v924 = vor.u32 %v922, %v923
      %v925 = vsel %vm877, %v921, %v924
      %v926 = vrot.slane %v924, 4
      %v927 = vrot.slane %v271, 5
      %v928 = vrot.slane %v267, 6
      %v929 = vor.u32 %v927, %v928
      %v930 = vsel %vm877, %v926, %v929
      %v931 = vrot.slane %v929, 4
      %v932 = vrot.slane %v281, 5
      %v933 = vrot.slane %v277, 6
      %v934 = vor.u32 %v932, %v933
      %v935 = vsel %vm877, %v931, %v934
      %v936 = vrot.slane %v934, 4
      %v937 = vrot.slane %v291, 5
      %v938 = vrot.slane %v287, 6
      %v939 = vor.u32 %v937, %v938
      %v940 = vsel %vm877, %v936, %v939
      %v941 = vrot.slane %v939, 4
      %v942 = vrot.slane %v301, 5
      %v943 = vrot.slane %v297, 6
      %v944 = vor.u32 %v942, %v943
      %v945 = vsel %vm877, %v941, %v944
      %v946 = vrot.slane %v944, 4
      %v947 = vrot.slane %v311, 5
      %v948 = vrot.slane %v307, 6
      %v949 = vor.u32 %v947, %v948
      %v950 = vsel %vm877, %v946, %v949
      %v951 = vrot.slane %v949, 4
      %v952 = vrot.slane %v321, 5
      %v953 = vrot.slane %v317, 6
      %v954 = vor.u32 %v952, %v953
      %v955 = vsel %vm877, %v951, %v954
      %v956 = vrot.slane %v954, 4
      %v957 = vrot.slane %v331, 5
      %v958 = vrot.slane %v327, 6
      %v959 = vor.u32 %v957, %v958
      %v960 = vsel %vm877, %v956, %v959
      %v961 = vrot.slane %v959, 4
      %v962 = vrot.slane %v341, 5
      %v963 = vrot.slane %v337, 6
      %v964 = vor.u32 %v962, %v963
      %v965 = vsel %vm877, %v961, %v964
      %v966 = vrot.slane %v964, 4
      %v967 = vrot.slane %v351, 5
      %v968 = vrot.slane %v347, 6
      %v969 = vor.u32 %v967, %v968
      %v970 = vsel %vm877, %v966, %v969
      %v971 = vrot.slane %v969, 4
      %v972 = vrot.slane %v361, 5
      %v973 = vrot.slane %v357, 6
      %v974 = vor.u32 %v972, %v973
      %v975 = vsel %vm877, %v971, %v974
      %v976 = vrot.slane %v974, 4
      %v977 = vrot.slane %v371, 5
      %v978 = vrot.slane %v367, 6
      %v979 = vor.u32 %v977, %v978
      %v980 = vsel %vm877, %v976, %v979
      %v981 = vrot.slane %v979, 4
      %v982 = vrot.slane %v381, 5
      %v983 = vrot.slane %v377, 6
      %v984 = vor.u32 %v982, %v983
      %v985 = vsel %vm877, %v981, %v984
      %v986 = vrot.slane %v984, 4
      %v987 = vrot.slane %v391, 5
      %v988 = vrot.slane %v387, 6
      %v989 = vor.u32 %v987, %v988
      %v990 = vsel %vm877, %v986, %v989
      %v991 = vrot.slane %v989, 4
      %v992 = vrot.slane %v401, 5
      %v993 = vrot.slane %v397, 6
      %v994 = vor.u32 %v992, %v993
      %v995 = vsel %vm877, %v991, %v994
      %v996 = vrot.slane %v994, 4
      %v997 = vrot.slane %v411, 5
      %v998 = vrot.slane %v407, 6
      %v999 = vor.u32 %v997, %v998
      %v1000 = vsel %vm877, %v996, %v999
      %v1001 = vrot.slane %v999, 4
      %v1002 = vrot.slane %v421, 5
      %v1003 = vrot.slane %v417, 6
      %v1004 = vor.u32 %v1002, %v1003
      %v1005 = vsel %vm877, %v1001, %v1004
      %v1006 = vrot.slane %v1004, 4
      %v1007 = vrot.slane %v431, 5
      %v1008 = vrot.slane %v427, 6
      %v1009 = vor.u32 %v1007, %v1008
      %v1010 = vsel %vm877, %v1006, %v1009
      %v1011 = vrot.slane %v1009, 4
      %v1012 = vrot.slane %v441, 5
      %v1013 = vrot.slane %v437, 6
      %v1014 = vor.u32 %v1012, %v1013
      %v1015 = vsel %vm877, %v1011, %v1014
      %v1016 = vrot.slane %v1014, 4
      %v1017 = vrot.slane %v451, 5
      %v1018 = vrot.slane %v447, 6
      %v1019 = vor.u32 %v1017, %v1018
      %v1020 = vsel %vm877, %v1016, %v1019
      %v1021 = vrot.slane %v1019, 4
      %v1022 = vrot.slane %v461, 5
      %v1023 = vrot.slane %v457, 6
      %v1024 = vor.u32 %v1022, %v1023
      %v1025 = vsel %vm877, %v1021, %v1024
      %v1026 = vrot.slane %v1024, 4
      %v1027 = vrot.slane %v471, 5
      %v1028 = vrot.slane %v467, 6
      %v1029 = vor.u32 %v1027, %v1028
      %v1030 = vsel %vm877, %v1026, %v1029
      %v1031 = vrot.slane %v1029, 4
      %v1032 = vrot.slane %v481, 5
      %v1033 = vrot.slane %v477, 6
      %v1034 = vor.u32 %v1032, %v1033
      %v1035 = vsel %vm877, %v1031, %v1034
      %v1036 = vrot.slane %v1034, 4
      %v1037 = vrot.slane %v491, 5
      %v1038 = vrot.slane %v487, 6
      %v1039 = vor.u32 %v1037, %v1038
      %v1040 = vsel %vm877, %v1036, %v1039
      %v1041 = vrot.slane %v1039, 4
      %v1042 = vrot.slane %v501, 5
      %v1043 = vrot.slane %v497, 6
      %v1044 = vor.u32 %v1042, %v1043
      %v1045 = vsel %vm877, %v1041, %v1044
      %v1046 = vrot.slane %v1044, 4
      %v1047 = vrot.slane %v511, 5
      %v1048 = vrot.slane %v507, 6
      %v1049 = vor.u32 %v1047, %v1048
      %v1050 = vsel %vm877, %v1046, %v1049
      %v1051 = vrot.slane %v1049, 4
      %v1053 = vshrl.u32 %v816, 16
      %v1055 = vrot.slane %v1053, 5
      %v1056 = vshll.u32 %v816, 16
      %v1058 = vrot.slane %v1056, 6
      %v1059 = vor.u32 %v1055, %v1058
      %v1060 = vsel %vm877, %v1051, %v1059
      %v1061 = vrot.slane %v1059, 4
      %v1063 = vshrl.u32 %v817, 16
      %v1065 = vrot.slane %v1063, 5
      %v1066 = vshll.u32 %v817, 16
      %v1068 = vrot.slane %v1066, 6
      %v1069 = vor.u32 %v1065, %v1068
      %v1070 = vsel %vm877, %v1061, %v1069
      %v1071 = vrot.slane %v1069, 4
      %v1073 = vshrl.u32 %v874, 16
      %v1075 = vrot.slane %v1073, 5
      %v1076 = vshll.u32 %v874, 16
      %v1078 = vrot.slane %v1076, 6
      %v1079 = vor.u32 %v1075, %v1078
      %v1080 = vsel %vm877, %v1071, %v1079
      %v1117 = vmax.bf16 %v838, %v890
      %v1118 = vmax.bf16 %v839, %v895
      %v1119 = vmax.bf16 %v840, %v900
      %v1120 = vmax.bf16 %v841, %v905
      %v1121 = vmax.bf16 %v842, %v910
      %v1122 = vmax.bf16 %v843, %v915
      %v1123 = vmax.bf16 %v844, %v920
      %v1124 = vmax.bf16 %v845, %v925
      %v1125 = vmax.bf16 %v846, %v930
      %v1126 = vmax.bf16 %v847, %v935
      %v1127 = vmax.bf16 %v848, %v940
      %v1128 = vmax.bf16 %v849, %v945
      %v1129 = vmax.bf16 %v850, %v950
      %v1130 = vmax.bf16 %v851, %v955
      %v1131 = vmax.bf16 %v852, %v960
      %v1132 = vmax.bf16 %v853, %v965
      %v1133 = vmax.bf16 %v854, %v970
      %v1134 = vmax.bf16 %v855, %v975
      %v1135 = vmax.bf16 %v856, %v980
      %v1136 = vmax.bf16 %v857, %v985
      %v1137 = vmax.bf16 %v858, %v990
      %v1138 = vmax.bf16 %v859, %v995
      %v1139 = vmax.bf16 %v860, %v1000
      %v1140 = vmax.bf16 %v861, %v1005
      %v1141 = vmax.bf16 %v862, %v1010
      %v1142 = vmax.bf16 %v863, %v1015
      %v1143 = vmax.bf16 %v864, %v1020
      %v1144 = vmax.bf16 %v865, %v1025
      %v1145 = vmax.bf16 %v866, %v1030
      %v1146 = vmax.bf16 %v867, %v1035
      %v1147 = vmax.bf16 %v868, %v1040
      %v1148 = vmax.bf16 %v869, %v1045
      %v1149 = vmax.bf16 %v870, %v1050
      %v1150 = vmax.bf16 %v871, %v1060
      %v1151 = vmax.bf16 %v872, %v1070
      %v1152 = vmax.bf16 %v873, %v1080
      %v1153 = vld [vmem:[%s111 + $0x8] sm:$0xc]
      %vm1156 = vcmask 1041408
      %vm1157 = vcmask 1045508
      %vm1158 = vmor %vm1156, %vm1157
      %v1159 = vrot.slane %v1153, 6
      %v1160 = vrot.slane %v1159, 4
      %v1161 = vrot.slane %v120, 6
      %v1162 = vsel %vm1158, %v1160, %v1161
      %v1163 = vrot.slane %v1161, 4
      %v1164 = vrot.slane %v121, 6
      %v1165 = vsel %vm1158, %v1163, %v1164
      %v1166 = vrot.slane %v1164, 4
      %v1167 = vrot.slane %v122, 6
      %v1168 = vsel %vm1158, %v1166, %v1167
      %v1169 = vrot.slane %v1167, 4
      %v1170 = vrot.slane %v123, 6
      %v1171 = vsel %vm1158, %v1169, %v1170
      %v1172 = vrot.slane %v1170, 4
      %v1173 = vrot.slane %v124, 6
      %v1174 = vsel %vm1158, %v1172, %v1173
      %v1175 = vrot.slane %v1173, 4
      %v1176 = vrot.slane %v125, 6
      %v1177 = vsel %vm1158, %v1175, %v1176
      %v1178 = vrot.slane %v1176, 4
      %v1179 = vrot.slane %v126, 6
      %v1180 = vsel %vm1158, %v1178, %v1179
      %v1181 = vrot.slane %v1179, 4
      %v1182 = vrot.slane %v127, 6
      %v1183 = vsel %vm1158, %v1181, %v1182
      %v1184 = vrot.slane %v1182, 4
      %v1185 = vrot.slane %v128, 6
      %v1186 = vsel %vm1158, %v1184, %v1185
      %v1187 = vrot.slane %v1185, 4
      %v1188 = vrot.slane %v129, 6
      %v1189 = vsel %vm1158, %v1187, %v1188
      %v1190 = vrot.slane %v1188, 4
      %v1191 = vrot.slane %v130, 6
      %v1192 = vsel %vm1158, %v1190, %v1191
      %v1193 = vrot.slane %v1191, 4
      %v1194 = vrot.slane %v131, 6
      %v1195 = vsel %vm1158, %v1193, %v1194
      %v1196 = vrot.slane %v1194, 4
      %v1197 = vrot.slane %v132, 6
      %v1198 = vsel %vm1158, %v1196, %v1197
      %v1199 = vrot.slane %v1197, 4
      %v1200 = vrot.slane %v133, 6
      %v1201 = vsel %vm1158, %v1199, %v1200
      %v1202 = vrot.slane %v1200, 4
      %v1203 = vrot.slane %v134, 6
      %v1204 = vsel %vm1158, %v1202, %v1203
      %v1205 = vrot.slane %v1203, 4
      %v1206 = vrot.slane %v135, 6
      %v1207 = vsel %vm1158, %v1205, %v1206
      %v1208 = vrot.slane %v1206, 4
      %v1209 = vrot.slane %v136, 6
      %v1210 = vsel %vm1158, %v1208, %v1209
      %v1211 = vrot.slane %v1209, 4
      %v1212 = vrot.slane %v137, 6
      %v1213 = vsel %vm1158, %v1211, %v1212
      %v1214 = vrot.slane %v1212, 4
      %v1215 = vrot.slane %v138, 6
      %v1216 = vsel %vm1158, %v1214, %v1215
      %v1217 = vrot.slane %v1215, 4
      %v1218 = vrot.slane %v139, 6
      %v1219 = vsel %vm1158, %v1217, %v1218
      %v1220 = vrot.slane %v1218, 4
      %v1221 = vrot.slane %v140, 6
      %v1222 = vsel %vm1158, %v1220, %v1221
      %v1223 = vrot.slane %v1221, 4
      %v1224 = vrot.slane %v141, 6
      %v1225 = vsel %vm1158, %v1223, %v1224
      %v1226 = vrot.slane %v1224, 4
      %v1227 = vrot.slane %v142, 6
      %v1228 = vsel %vm1158, %v1226, %v1227
      %v1229 = vrot.slane %v1227, 4
      %v1230 = vrot.slane %v143, 6
      %v1231 = vsel %vm1158, %v1229, %v1230
      %v1232 = vrot.slane %v1230, 4
      %v1233 = vrot.slane %v144, 6
      %v1234 = vsel %vm1158, %v1232, %v1233
      %v1235 = vrot.slane %v1233, 4
      %v1236 = vrot.slane %v145, 6
      %v1237 = vsel %vm1158, %v1235, %v1236
      %v1238 = vrot.slane %v1236, 4
      %v1239 = vrot.slane %v146, 6
      %v1240 = vsel %vm1158, %v1238, %v1239
      %v1241 = vrot.slane %v1239, 4
      %v1242 = vrot.slane %v147, 6
      %v1243 = vsel %vm1158, %v1241, %v1242
      %v1244 = vrot.slane %v1242, 4
      %v1245 = vrot.slane %v148, 6
      %v1246 = vsel %vm1158, %v1244, %v1245
      %v1247 = vrot.slane %v1245, 4
      %v1248 = vrot.slane %v149, 6
      %v1249 = vsel %vm1158, %v1247, %v1248
      %v1250 = vrot.slane %v1248, 4
      %v1251 = vrot.slane %v150, 6
      %v1252 = vsel %vm1158, %v1250, %v1251
      %v1253 = vrot.slane %v1251, 4
      %v1254 = vrot.slane %v151, 6
      %v1255 = vsel %vm1158, %v1253, %v1254
      %v1256 = vrot.slane %v1254, 4
      %v1257 = vrot.slane %v152, 6
      %v1258 = vsel %vm1158, %v1256, %v1257
      %v1259 = vrot.slane %v1257, 4
      %v1260 = vrot.slane %v816, 6
      %v1261 = vsel %vm1158, %v1259, %v1260
      %v1262 = vrot.slane %v1260, 4
      %v1263 = vrot.slane %v817, 6
      %v1264 = vsel %vm1158, %v1262, %v1263
      %v1265 = vrot.slane %v1263, 4
      %v1266 = vrot.slane %v874, 6
      %v1267 = vsel %vm1158, %v1265, %v1266
      %v1304 = vmax.bf16 %v1117, %v1162
      %v1305 = vmax.bf16 %v1118, %v1165
      %v1306 = vmax.bf16 %v1119, %v1168
      %v1307 = vmax.bf16 %v1120, %v1171
      %v1308 = vmax.bf16 %v1121, %v1174
      %v1309 = vmax.bf16 %v1122, %v1177
      %v1310 = vmax.bf16 %v1123, %v1180
      %v1311 = vmax.bf16 %v1124, %v1183
      %v1312 = vmax.bf16 %v1125, %v1186
      %v1313 = vmax.bf16 %v1126, %v1189
      %v1314 = vmax.bf16 %v1127, %v1192
      %v1315 = vmax.bf16 %v1128, %v1195
      %v1316 = vmax.bf16 %v1129, %v1198
      %v1317 = vmax.bf16 %v1130, %v1201
      %v1318 = vmax.bf16 %v1131, %v1204
      %v1319 = vmax.bf16 %v1132, %v1207
      %v1320 = vmax.bf16 %v1133, %v1210
      %v1321 = vmax.bf16 %v1134, %v1213
      %v1322 = vmax.bf16 %v1135, %v1216
      %v1323 = vmax.bf16 %v1136, %v1219
      %v1324 = vmax.bf16 %v1137, %v1222
      %v1325 = vmax.bf16 %v1138, %v1225
      %v1326 = vmax.bf16 %v1139, %v1228
      %v1327 = vmax.bf16 %v1140, %v1231
      %v1328 = vmax.bf16 %v1141, %v1234
      %v1329 = vmax.bf16 %v1142, %v1237
      %v1330 = vmax.bf16 %v1143, %v1240
      %v1331 = vmax.bf16 %v1144, %v1243
      %v1332 = vmax.bf16 %v1145, %v1246
      %v1333 = vmax.bf16 %v1146, %v1249
      %v1334 = vmax.bf16 %v1147, %v1252
      %v1335 = vmax.bf16 %v1148, %v1255
      %v1336 = vmax.bf16 %v1149, %v1258
      %v1337 = vmax.bf16 %v1150, %v1261
      %v1338 = vmax.bf16 %v1151, %v1264
      %v1339 = vmax.bf16 %v1152, %v1267
      %v1340 = vld [vmem:[%s111 + $0x10] sm:$0xc]
      %v1341 = vld [vmem:[%s111 + $0x98] sm:$0xf]
      %v1342 = vld [vmem:[%s111 + $0x9c] sm:$0xf]
      %v1343 = vld [vmem:[%s111 + $0xa0] sm:$0x3]
      %v1348 = vrot.slane %v1340, 6
      %v1349 = vrot.slane %v1348, 4
      %v1350 = vsel %vm1158, %v1349, %v1167
      %v1351 = vrot.slane %v1341, 6
      %v1352 = vsel %vm1158, %v1265, %v1351
      %v1353 = vrot.slane %v1351, 4
      %v1354 = vrot.slane %v1342, 6
      %v1355 = vsel %vm1158, %v1353, %v1354
      %v1356 = vrot.slane %v1354, 4
      %v1357 = vrot.slane %v1343, 6
      %v1358 = vsel %vm1158, %v1356, %v1357
      %v1363 = vmax.bf16 %v1304, %v1350
      %v1364 = vmax.bf16 %v1305, %v1171
      %v1365 = vmax.bf16 %v1306, %v1174
      %v1366 = vmax.bf16 %v1307, %v1177
      %v1367 = vmax.bf16 %v1308, %v1180
      %v1368 = vmax.bf16 %v1309, %v1183
      %v1369 = vmax.bf16 %v1310, %v1186
      %v1370 = vmax.bf16 %v1311, %v1189
      %v1371 = vmax.bf16 %v1312, %v1192
      %v1372 = vmax.bf16 %v1313, %v1195
      %v1373 = vmax.bf16 %v1314, %v1198
      %v1374 = vmax.bf16 %v1315, %v1201
      %v1375 = vmax.bf16 %v1316, %v1204
      %v1376 = vmax.bf16 %v1317, %v1207
      %v1377 = vmax.bf16 %v1318, %v1210
      %v1378 = vmax.bf16 %v1319, %v1213
      %v1379 = vmax.bf16 %v1320, %v1216
      %v1380 = vmax.bf16 %v1321, %v1219
      %v1381 = vmax.bf16 %v1322, %v1222
      %v1382 = vmax.bf16 %v1323, %v1225
      %v1383 = vmax.bf16 %v1324, %v1228
      %v1384 = vmax.bf16 %v1325, %v1231
      %v1385 = vmax.bf16 %v1326, %v1234
      %v1386 = vmax.bf16 %v1327, %v1237
      %v1387 = vmax.bf16 %v1328, %v1240
      %v1388 = vmax.bf16 %v1329, %v1243
      %v1389 = vmax.bf16 %v1330, %v1246
      %v1390 = vmax.bf16 %v1331, %v1249
      %v1391 = vmax.bf16 %v1332, %v1252
      %v1392 = vmax.bf16 %v1333, %v1255
      %v1393 = vmax.bf16 %v1334, %v1258
      %v1394 = vmax.bf16 %v1335, %v1261
      %v1395 = vmax.bf16 %v1336, %v1264
      %v1396 = vmax.bf16 %v1337, %v1352
      %v1397 = vmax.bf16 %v1338, %v1355
      %v1398 = vmax.bf16 %v1339, %v1358
      %v1399 = vld [vmem:[%s111 + $0xa0] sm:$0x7]
      %vm1400 = vsmask.f32 1280
      %vm1401 = vsmask.f32 5392
      %vm1402 = vmor %vm1400, %vm1401
      %v1404 = vshrl.u32 %v1340, 16
      %v1406 = vrot.slane %v1404, 6
      %v1407 = vshll.u32 %v1340, 16
      %v1409 = vrot.slane %v1407, 7
      %v1410 = vor.u32 %v1406, %v1409
      %v1411 = vrot.slane %v1410, 4
      %v1412 = vrot.slane %v211, 6
      %v1413 = vrot.slane %v207, 7
      %v1414 = vor.u32 %v1412, %v1413
      %v1415 = vsel %vm1402, %v1411, %v1414
      %v1416 = vrot.slane %v1414, 4
      %v1417 = vrot.slane %v221, 6
      %v1418 = vrot.slane %v217, 7
      %v1419 = vor.u32 %v1417, %v1418
      %v1420 = vsel %vm1402, %v1416, %v1419
      %v1421 = vrot.slane %v1419, 4
      %v1422 = vrot.slane %v231, 6
      %v1423 = vrot.slane %v227, 7
      %v1424 = vor.u32 %v1422, %v1423
      %v1425 = vsel %vm1402, %v1421, %v1424
      %v1426 = vrot.slane %v1424, 4
      %v1427 = vrot.slane %v241, 6
      %v1428 = vrot.slane %v237, 7
      %v1429 = vor.u32 %v1427, %v1428
      %v1430 = vsel %vm1402, %v1426, %v1429
      %v1431 = vrot.slane %v1429, 4
      %v1432 = vrot.slane %v251, 6
      %v1433 = vrot.slane %v247, 7
      %v1434 = vor.u32 %v1432, %v1433
      %v1435 = vsel %vm1402, %v1431, %v1434
      %v1436 = vrot.slane %v1434, 4
      %v1437 = vrot.slane %v261, 6
      %v1438 = vrot.slane %v257, 7
      %v1439 = vor.u32 %v1437, %v1438
      %v1440 = vsel %vm1402, %v1436, %v1439
      %v1441 = vrot.slane %v1439, 4
      %v1442 = vrot.slane %v271, 6
      %v1443 = vrot.slane %v267, 7
      %v1444 = vor.u32 %v1442, %v1443
      %v1445 = vsel %vm1402, %v1441, %v1444
      %v1446 = vrot.slane %v1444, 4
      %v1447 = vrot.slane %v281, 6
      %v1448 = vrot.slane %v277, 7
      %v1449 = vor.u32 %v1447, %v1448
      %v1450 = vsel %vm1402, %v1446, %v1449
      %v1451 = vrot.slane %v1449, 4
      %v1452 = vrot.slane %v291, 6
      %v1453 = vrot.slane %v287, 7
      %v1454 = vor.u32 %v1452, %v1453
      %v1455 = vsel %vm1402, %v1451, %v1454
      %v1456 = vrot.slane %v1454, 4
      %v1457 = vrot.slane %v301, 6
      %v1458 = vrot.slane %v297, 7
      %v1459 = vor.u32 %v1457, %v1458
      %v1460 = vsel %vm1402, %v1456, %v1459
      %v1461 = vrot.slane %v1459, 4
      %v1462 = vrot.slane %v311, 6
      %v1463 = vrot.slane %v307, 7
      %v1464 = vor.u32 %v1462, %v1463
      %v1465 = vsel %vm1402, %v1461, %v1464
      %v1466 = vrot.slane %v1464, 4
      %v1467 = vrot.slane %v321, 6
      %v1468 = vrot.slane %v317, 7
      %v1469 = vor.u32 %v1467, %v1468
      %v1470 = vsel %vm1402, %v1466, %v1469
      %v1471 = vrot.slane %v1469, 4
      %v1472 = vrot.slane %v331, 6
      %v1473 = vrot.slane %v327, 7
      %v1474 = vor.u32 %v1472, %v1473
      %v1475 = vsel %vm1402, %v1471, %v1474
      %v1476 = vrot.slane %v1474, 4
      %v1477 = vrot.slane %v341, 6
      %v1478 = vrot.slane %v337, 7
      %v1479 = vor.u32 %v1477, %v1478
      %v1480 = vsel %vm1402, %v1476, %v1479
      %v1481 = vrot.slane %v1479, 4
      %v1482 = vrot.slane %v351, 6
      %v1483 = vrot.slane %v347, 7
      %v1484 = vor.u32 %v1482, %v1483
      %v1485 = vsel %vm1402, %v1481, %v1484
      %v1486 = vrot.slane %v1484, 4
      %v1487 = vrot.slane %v361, 6
      %v1488 = vrot.slane %v357, 7
      %v1489 = vor.u32 %v1487, %v1488
      %v1490 = vsel %vm1402, %v1486, %v1489
      %v1491 = vrot.slane %v1489, 4
      %v1492 = vrot.slane %v371, 6
      %v1493 = vrot.slane %v367, 7
      %v1494 = vor.u32 %v1492, %v1493
      %v1495 = vsel %vm1402, %v1491, %v1494
      %v1496 = vrot.slane %v1494, 4
      %v1497 = vrot.slane %v381, 6
      %v1498 = vrot.slane %v377, 7
      %v1499 = vor.u32 %v1497, %v1498
      %v1500 = vsel %vm1402, %v1496, %v1499
      %v1501 = vrot.slane %v1499, 4
      %v1502 = vrot.slane %v391, 6
      %v1503 = vrot.slane %v387, 7
      %v1504 = vor.u32 %v1502, %v1503
      %v1505 = vsel %vm1402, %v1501, %v1504
      %v1506 = vrot.slane %v1504, 4
      %v1507 = vrot.slane %v401, 6
      %v1508 = vrot.slane %v397, 7
      %v1509 = vor.u32 %v1507, %v1508
      %v1510 = vsel %vm1402, %v1506, %v1509
      %v1511 = vrot.slane %v1509, 4
      %v1512 = vrot.slane %v411, 6
      %v1513 = vrot.slane %v407, 7
      %v1514 = vor.u32 %v1512, %v1513
      %v1515 = vsel %vm1402, %v1511, %v1514
      %v1516 = vrot.slane %v1514, 4
      %v1517 = vrot.slane %v421, 6
      %v1518 = vrot.slane %v417, 7
      %v1519 = vor.u32 %v1517, %v1518
      %v1520 = vsel %vm1402, %v1516, %v1519
      %v1521 = vrot.slane %v1519, 4
      %v1522 = vrot.slane %v431, 6
      %v1523 = vrot.slane %v427, 7
      %v1524 = vor.u32 %v1522, %v1523
      %v1525 = vsel %vm1402, %v1521, %v1524
      %v1526 = vrot.slane %v1524, 4
      %v1527 = vrot.slane %v441, 6
      %v1528 = vrot.slane %v437, 7
      %v1529 = vor.u32 %v1527, %v1528
      %v1530 = vsel %vm1402, %v1526, %v1529
      %v1531 = vrot.slane %v1529, 4
      %v1532 = vrot.slane %v451, 6
      %v1533 = vrot.slane %v447, 7
      %v1534 = vor.u32 %v1532, %v1533
      %v1535 = vsel %vm1402, %v1531, %v1534
      %v1536 = vrot.slane %v1534, 4
      %v1537 = vrot.slane %v461, 6
      %v1538 = vrot.slane %v457, 7
      %v1539 = vor.u32 %v1537, %v1538
      %v1540 = vsel %vm1402, %v1536, %v1539
      %v1541 = vrot.slane %v1539, 4
      %v1542 = vrot.slane %v471, 6
      %v1543 = vrot.slane %v467, 7
      %v1544 = vor.u32 %v1542, %v1543
      %v1545 = vsel %vm1402, %v1541, %v1544
      %v1546 = vrot.slane %v1544, 4
      %v1547 = vrot.slane %v481, 6
      %v1548 = vrot.slane %v477, 7
      %v1549 = vor.u32 %v1547, %v1548
      %v1550 = vsel %vm1402, %v1546, %v1549
      %v1551 = vrot.slane %v1549, 4
      %v1552 = vrot.slane %v491, 6
      %v1553 = vrot.slane %v487, 7
      %v1554 = vor.u32 %v1552, %v1553
      %v1555 = vsel %vm1402, %v1551, %v1554
      %v1556 = vrot.slane %v1554, 4
      %v1557 = vrot.slane %v501, 6
      %v1558 = vrot.slane %v497, 7
      %v1559 = vor.u32 %v1557, %v1558
      %v1560 = vsel %vm1402, %v1556, %v1559
      %v1561 = vrot.slane %v1559, 4
      %v1562 = vrot.slane %v511, 6
      %v1563 = vrot.slane %v507, 7
      %v1564 = vor.u32 %v1562, %v1563
      %v1565 = vsel %vm1402, %v1561, %v1564
      %v1566 = vrot.slane %v1564, 4
      %v1567 = vrot.slane %v1053, 6
      %v1568 = vrot.slane %v1056, 7
      %v1569 = vor.u32 %v1567, %v1568
      %v1570 = vsel %vm1402, %v1566, %v1569
      %v1571 = vrot.slane %v1569, 4
      %v1572 = vrot.slane %v1063, 6
      %v1573 = vrot.slane %v1066, 7
      %v1574 = vor.u32 %v1572, %v1573
      %v1575 = vsel %vm1402, %v1571, %v1574
      %v1576 = vrot.slane %v1574, 4
      %v1578 = vshrl.u32 %v1341, 16
      %v1580 = vrot.slane %v1578, 6
      %v1581 = vshll.u32 %v1341, 16
      %v1583 = vrot.slane %v1581, 7
      %v1584 = vor.u32 %v1580, %v1583
      %v1585 = vsel %vm1402, %v1576, %v1584
      %v1586 = vrot.slane %v1584, 4
      %v1588 = vshrl.u32 %v1342, 16
      %v1590 = vrot.slane %v1588, 6
      %v1591 = vshll.u32 %v1342, 16
      %v1593 = vrot.slane %v1591, 7
      %v1594 = vor.u32 %v1590, %v1593
      %v1595 = vsel %vm1402, %v1586, %v1594
      %v1596 = vrot.slane %v1594, 4
      %v1598 = vshrl.u32 %v1399, 16
      %v1600 = vrot.slane %v1598, 6
      %v1601 = vshll.u32 %v1399, 16
      %v1603 = vrot.slane %v1601, 7
      %v1604 = vor.u32 %v1600, %v1603
      %v1605 = vsel %vm1402, %v1596, %v1604
      %v1642 = vmax.bf16 %v1363, %v1415
      %v1643 = vmax.bf16 %v1364, %v1420
      %v1644 = vmax.bf16 %v1365, %v1425
      %v1645 = vmax.bf16 %v1366, %v1430
      %v1646 = vmax.bf16 %v1367, %v1435
      %v1647 = vmax.bf16 %v1368, %v1440
      %v1648 = vmax.bf16 %v1369, %v1445
      %v1649 = vmax.bf16 %v1370, %v1450
      %v1650 = vmax.bf16 %v1371, %v1455
      %v1651 = vmax.bf16 %v1372, %v1460
      %v1652 = vmax.bf16 %v1373, %v1465
      %v1653 = vmax.bf16 %v1374, %v1470
      %v1654 = vmax.bf16 %v1375, %v1475
      %v1655 = vmax.bf16 %v1376, %v1480
      %v1656 = vmax.bf16 %v1377, %v1485
      %v1657 = vmax.bf16 %v1378, %v1490
      %v1658 = vmax.bf16 %v1379, %v1495
      %v1659 = vmax.bf16 %v1380, %v1500
      %v1660 = vmax.bf16 %v1381, %v1505
      %v1661 = vmax.bf16 %v1382, %v1510
      %v1662 = vmax.bf16 %v1383, %v1515
      %v1663 = vmax.bf16 %v1384, %v1520
      %v1664 = vmax.bf16 %v1385, %v1525
      %v1665 = vmax.bf16 %v1386, %v1530
      %v1666 = vmax.bf16 %v1387, %v1535
      %v1667 = vmax.bf16 %v1388, %v1540
      %v1668 = vmax.bf16 %v1389, %v1545
      %v1669 = vmax.bf16 %v1390, %v1550
      %v1670 = vmax.bf16 %v1391, %v1555
      %v1671 = vmax.bf16 %v1392, %v1560
      %v1672 = vmax.bf16 %v1393, %v1565
      %v1673 = vmax.bf16 %v1394, %v1570
      %v1674 = vmax.bf16 %v1395, %v1575
      %v1675 = vmax.bf16 %v1396, %v1585
      %v1676 = vmax.bf16 %v1397, %v1595
      %v1677 = vmax.bf16 %v1398, %v1605
      %v1678 = vld [vmem:[%s111 + $0x10] sm:$0x8]
      %vm1681 = vcmask 1040384
      %vm1682 = vcmask 1044484
      %vm1683 = vmor %vm1681, %vm1682
      %v1684 = vrot.slane %v1678, 7
      %v1685 = vrot.slane %v1684, 4
      %v1686 = vrot.slane %v122, 7
      %v1687 = vsel %vm1683, %v1685, %v1686
      %v1688 = vrot.slane %v1686, 4
      %v1689 = vrot.slane %v123, 7
      %v1690 = vsel %vm1683, %v1688, %v1689
      %v1691 = vrot.slane %v1689, 4
      %v1692 = vrot.slane %v124, 7
      %v1693 = vsel %vm1683, %v1691, %v1692
      %v1694 = vrot.slane %v1692, 4
      %v1695 = vrot.slane %v125, 7
      %v1696 = vsel %vm1683, %v1694, %v1695
      %v1697 = vrot.slane %v1695, 4
      %v1698 = vrot.slane %v126, 7
      %v1699 = vsel %vm1683, %v1697, %v1698
      %v1700 = vrot.slane %v1698, 4
      %v1701 = vrot.slane %v127, 7
      %v1702 = vsel %vm1683, %v1700, %v1701
      %v1703 = vrot.slane %v1701, 4
      %v1704 = vrot.slane %v128, 7
      %v1705 = vsel %vm1683, %v1703, %v1704
      %v1706 = vrot.slane %v1704, 4
      %v1707 = vrot.slane %v129, 7
      %v1708 = vsel %vm1683, %v1706, %v1707
      %v1709 = vrot.slane %v1707, 4
      %v1710 = vrot.slane %v130, 7
      %v1711 = vsel %vm1683, %v1709, %v1710
      %v1712 = vrot.slane %v1710, 4
      %v1713 = vrot.slane %v131, 7
      %v1714 = vsel %vm1683, %v1712, %v1713
      %v1715 = vrot.slane %v1713, 4
      %v1716 = vrot.slane %v132, 7
      %v1717 = vsel %vm1683, %v1715, %v1716
      %v1718 = vrot.slane %v1716, 4
      %v1719 = vrot.slane %v133, 7
      %v1720 = vsel %vm1683, %v1718, %v1719
      %v1721 = vrot.slane %v1719, 4
      %v1722 = vrot.slane %v134, 7
      %v1723 = vsel %vm1683, %v1721, %v1722
      %v1724 = vrot.slane %v1722, 4
      %v1725 = vrot.slane %v135, 7
      %v1726 = vsel %vm1683, %v1724, %v1725
      %v1727 = vrot.slane %v1725, 4
      %v1728 = vrot.slane %v136, 7
      %v1729 = vsel %vm1683, %v1727, %v1728
      %v1730 = vrot.slane %v1728, 4
      %v1731 = vrot.slane %v137, 7
      %v1732 = vsel %vm1683, %v1730, %v1731
      %v1733 = vrot.slane %v1731, 4
      %v1734 = vrot.slane %v138, 7
      %v1735 = vsel %vm1683, %v1733, %v1734
      %v1736 = vrot.slane %v1734, 4
      %v1737 = vrot.slane %v139, 7
      %v1738 = vsel %vm1683, %v1736, %v1737
      %v1739 = vrot.slane %v1737, 4
      %v1740 = vrot.slane %v140, 7
      %v1741 = vsel %vm1683, %v1739, %v1740
      %v1742 = vrot.slane %v1740, 4
      %v1743 = vrot.slane %v141, 7
      %v1744 = vsel %vm1683, %v1742, %v1743
      %v1745 = vrot.slane %v1743, 4
      %v1746 = vrot.slane %v142, 7
      %v1747 = vsel %vm1683, %v1745, %v1746
      %v1748 = vrot.slane %v1746, 4
      %v1749 = vrot.slane %v143, 7
      %v1750 = vsel %vm1683, %v1748, %v1749
      %v1751 = vrot.slane %v1749, 4
      %v1752 = vrot.slane %v144, 7
      %v1753 = vsel %vm1683, %v1751, %v1752
      %v1754 = vrot.slane %v1752, 4
      %v1755 = vrot.slane %v145, 7
      %v1756 = vsel %vm1683, %v1754, %v1755
      %v1757 = vrot.slane %v1755, 4
      %v1758 = vrot.slane %v146, 7
      %v1759 = vsel %vm1683, %v1757, %v1758
      %v1760 = vrot.slane %v1758, 4
      %v1761 = vrot.slane %v147, 7
      %v1762 = vsel %vm1683, %v1760, %v1761
      %v1763 = vrot.slane %v1761, 4
      %v1764 = vrot.slane %v148, 7
      %v1765 = vsel %vm1683, %v1763, %v1764
      %v1766 = vrot.slane %v1764, 4
      %v1767 = vrot.slane %v149, 7
      %v1768 = vsel %vm1683, %v1766, %v1767
      %v1769 = vrot.slane %v1767, 4
      %v1770 = vrot.slane %v150, 7
      %v1771 = vsel %vm1683, %v1769, %v1770
      %v1772 = vrot.slane %v1770, 4
      %v1773 = vrot.slane %v151, 7
      %v1774 = vsel %vm1683, %v1772, %v1773
      %v1775 = vrot.slane %v1773, 4
      %v1776 = vrot.slane %v152, 7
      %v1777 = vsel %vm1683, %v1775, %v1776
      %v1778 = vrot.slane %v1776, 4
      %v1779 = vrot.slane %v816, 7
      %v1780 = vsel %vm1683, %v1778, %v1779
      %v1781 = vrot.slane %v1779, 4
      %v1782 = vrot.slane %v817, 7
      %v1783 = vsel %vm1683, %v1781, %v1782
      %v1784 = vrot.slane %v1782, 4
      %v1785 = vrot.slane %v1341, 7
      %v1786 = vsel %vm1683, %v1784, %v1785
      %v1787 = vrot.slane %v1785, 4
      %v1788 = vrot.slane %v1342, 7
      %v1789 = vsel %vm1683, %v1787, %v1788
      %v1790 = vrot.slane %v1788, 4
      %v1791 = vrot.slane %v1399, 7
      %v1792 = vsel %vm1683, %v1790, %v1791
      %v1829 = vmax.bf16 %v1642, %v1687
      %v1830 = vmax.bf16 %v1643, %v1690
      %v1831 = vmax.bf16 %v1644, %v1693
      %v1832 = vmax.bf16 %v1645, %v1696
      %v1833 = vmax.bf16 %v1646, %v1699
      %v1834 = vmax.bf16 %v1647, %v1702
      %v1835 = vmax.bf16 %v1648, %v1705
      %v1836 = vmax.bf16 %v1649, %v1708
      %v1837 = vmax.bf16 %v1650, %v1711
      %v1838 = vmax.bf16 %v1651, %v1714
      %v1839 = vmax.bf16 %v1652, %v1717
      %v1840 = vmax.bf16 %v1653, %v1720
      %v1841 = vmax.bf16 %v1654, %v1723
      %v1842 = vmax.bf16 %v1655, %v1726
      %v1843 = vmax.bf16 %v1656, %v1729
      %v1844 = vmax.bf16 %v1657, %v1732
      %v1845 = vmax.bf16 %v1658, %v1735
      %v1846 = vmax.bf16 %v1659, %v1738
      %v1847 = vmax.bf16 %v1660, %v1741
      %v1848 = vmax.bf16 %v1661, %v1744
      %v1849 = vmax.bf16 %v1662, %v1747
      %v1850 = vmax.bf16 %v1663, %v1750
      %v1851 = vmax.bf16 %v1664, %v1753
      %v1852 = vmax.bf16 %v1665, %v1756
      %v1853 = vmax.bf16 %v1666, %v1759
      %v1854 = vmax.bf16 %v1667, %v1762
      %v1855 = vmax.bf16 %v1668, %v1765
      %v1856 = vmax.bf16 %v1669, %v1768
      %v1857 = vmax.bf16 %v1670, %v1771
      %v1858 = vmax.bf16 %v1671, %v1774
      %v1859 = vmax.bf16 %v1672, %v1777
      %v1860 = vmax.bf16 %v1673, %v1780
      %v1861 = vmax.bf16 %v1674, %v1783
      %v1862 = vmax.bf16 %v1675, %v1786
      %v1863 = vmax.bf16 %v1676, %v1789
      %v1864 = vmax.bf16 %v1677, %v1792
      %vm1865 = vcmask 519168
      %1866 = vst.msk [vmem:[%s116] sm:$0xf] %vm1865, %v1829
      %1867 = vst.msk [vmem:[%s116 + $0x4] sm:$0xf] %vm1865, %v1830
      %1868 = vst.msk [vmem:[%s116 + $0x8] sm:$0xf] %vm1865, %v1831
      %1869 = vst.msk [vmem:[%s116 + $0xc] sm:$0xf] %vm1865, %v1832
      %1870 = vst.msk [vmem:[%s116 + $0x10] sm:$0xf] %vm1865, %v1833
      %1871 = vst.msk [vmem:[%s116 + $0x14] sm:$0xf] %vm1865, %v1834
      %1872 = vst.msk [vmem:[%s116 + $0x18] sm:$0xf] %vm1865, %v1835
      %1873 = vst.msk [vmem:[%s116 + $0x1c] sm:$0xf] %vm1865, %v1836
      %1874 = vst.msk [vmem:[%s116 + $0x20] sm:$0xf] %vm1865, %v1837
      %1875 = vst.msk [vmem:[%s116 + $0x24] sm:$0xf] %vm1865, %v1838
      %1876 = vst.msk [vmem:[%s116 + $0x28] sm:$0xf] %vm1865, %v1839
      %1877 = vst.msk [vmem:[%s116 + $0x2c] sm:$0xf] %vm1865, %v1840
      %1878 = vst.msk [vmem:[%s116 + $0x30] sm:$0xf] %vm1865, %v1841
      %1879 = vst.msk [vmem:[%s116 + $0x34] sm:$0xf] %vm1865, %v1842
      %1880 = vst.msk [vmem:[%s116 + $0x38] sm:$0xf] %vm1865, %v1843
      %1881 = vst.msk [vmem:[%s116 + $0x3c] sm:$0xf] %vm1865, %v1844
      %1882 = vst.msk [vmem:[%s116 + $0x40] sm:$0xf] %vm1865, %v1845
      %1883 = vst.msk [vmem:[%s116 + $0x44] sm:$0xf] %vm1865, %v1846
      %1884 = vst.msk [vmem:[%s116 + $0x48] sm:$0xf] %vm1865, %v1847
      %1885 = vst.msk [vmem:[%s116 + $0x4c] sm:$0xf] %vm1865, %v1848
      %1886 = vst.msk [vmem:[%s116 + $0x50] sm:$0xf] %vm1865, %v1849
      %1887 = vst.msk [vmem:[%s116 + $0x54] sm:$0xf] %vm1865, %v1850
      %1888 = vst.msk [vmem:[%s116 + $0x58] sm:$0xf] %vm1865, %v1851
      %1889 = vst.msk [vmem:[%s116 + $0x5c] sm:$0xf] %vm1865, %v1852
      %1890 = vst.msk [vmem:[%s116 + $0x60] sm:$0xf] %vm1865, %v1853
      %1891 = vst.msk [vmem:[%s116 + $0x64] sm:$0xf] %vm1865, %v1854
      %1892 = vst.msk [vmem:[%s116 + $0x68] sm:$0xf] %vm1865, %v1855
      %1893 = vst.msk [vmem:[%s116 + $0x6c] sm:$0xf] %vm1865, %v1856
      %1894 = vst.msk [vmem:[%s116 + $0x70] sm:$0xf] %vm1865, %v1857
      %1895 = vst.msk [vmem:[%s116 + $0x74] sm:$0xf] %vm1865, %v1858
      %1896 = vst.msk [vmem:[%s116 + $0x78] sm:$0xf] %vm1865, %v1859
      %1897 = vst.msk [vmem:[%s116 + $0x7c] sm:$0xf] %vm1865, %v1860
      %1898 = vst.msk [vmem:[%s116 + $0x80] sm:$0xf] %vm1865, %v1861
      %1899 = vst.msk [vmem:[%s116 + $0x84] sm:$0xf] %vm1865, %v1862
      %1900 = vst.msk [vmem:[%s116 + $0x88] sm:$0xf] %vm1865, %v1863
      %1901 = vst.msk [vmem:[%s116 + $0x8c] sm:$0xf] %vm1865, %v1864
      %p1902 = scmp.lt.s32.totalorder %s12, 1
      %s1903 = scalar_select %p1902, %s12, 1
      %s1904 = smul.addr %s1903, 36
      %s1905 = smul.addr %s1904, 4
      %s1906 = scalar_lea.vmem %s1, %s1905
      // Predicated region
      $region25: #{stem_forward.5} parent=23 // pred_check
        %p1907 = pneg %p56
      $region26: #{stem_forward.5} parent=23 // pred_check_branch
        %1909 = sbr.rel (%p1907) target = $region28
      $region27: #{stem_forward.5} parent=23 // pred_region
        _
      $region28: #{stem_forward.5} parent=23 // pred_fallthru
        _
    $region24: #{stem_forward.5} parent=5 // pred_fallthru
      _
    %p1910 = scmp.le.s32.totalorder 2, %s7
    // Predicated region
    $region29: #{stem_forward.5} parent=5 // pred_check
      %p1911 = pneg %p1910
    $region30: #{stem_forward.5} parent=5 // pred_check_branch
      %1913 = sbr.rel (%p1911) target = $region32
    $region31: #{stem_forward.5} parent=5 // pred_region
      %s1914 = ssub.s32 %s7, 2
      // Predicated region
      $region33: #{stem_forward.5} parent=31 // pred_check
        %p1915 = pneg %p62
      $region34: #{stem_forward.5} parent=31 // pred_check_branch
        %1917 = sbr.rel (%p1915) target = $region36
      $region35: #{stem_forward.5} parent=31 // pred_region
        %p1918 = scmp.lt.s32.totalorder %s13, 1
        %s1919 = scalar_select %p1918, %s13, 1
        %s1920 = smul.addr %s1919, 36
        %s1921 = smul.addr %s1920, 4
        %s1922 = scalar_lea.vmem %s1, %s1921
      $region36: #{stem_forward.5} parent=31 // pred_fallthru
        _
    $region32: #{stem_forward.5} parent=5 // pred_fallthru
      _
  $region6: #{stem_forward.5} parent=0 // loop_footer
    %s11 = sadd.s32 1, %s7
  $region7: #{stem_forward.5} parent=0 // loop_footer_branch
    %6 = sbr.rel target = $region3
  $region8: #{stem_forward.5} parent=0 // loop_exit
    _

</llo_original>
